<compile_context>
chip_gen: v7x
topology: tpu7x:2x2x1
jax: 0.10.0
libtpu: 0.0.40
codegen_flags: <defaults>
</compile_context>

<pallas_src>
import jax
import jax.numpy as jnp
from jax import lax
from jax.experimental import pallas as pl
from jax.experimental.pallas import tpu as pltpu  # noqa: F401  (TPU backend)


# ----------------------------------------------------------------------------
# Fused Pallas kernel: both LSTM stacks + final Linear in one invocation.
# ----------------------------------------------------------------------------
def _make_fused_kernel(num_layers, hidden_size, seq_len):
    H = hidden_size
    T = seq_len

    def kernel(x_ref, wih0_ref, wihr_ref, whh_ref, bias_ref, fcw_ref, fcb_ref,
               out_ref):
        B2 = x_ref.shape[1]          # 2 * batch (emg rows then glove rows)
        B = B2 // 2

        # Block-diagonal mask (2B, 2H): 1 where row-half matches col-half.
        row = lax.broadcasted_iota(jnp.int32, (B2, 2 * H), 0)
        col = lax.broadcasted_iota(jnp.int32, (B2, 2 * H), 1)
        bd_mask = jnp.where((row < B) == (col < H), 1.0, 0.0).astype(jnp.float32)

        whh_all = whh_ref[...]        # (L, 2H, 4H)   [Whh_e^T ; Whh_g^T] per layer
        wihr_all = wihr_ref[...]      # (L-1, 2H, 4H) [Wih_e^T ; Wih_g^T] layers 1..
        bias_all = bias_ref[...]      # (L, 2B, 4H)   per-row folded bias, permuted

        # --- Layer-0 input projection, hoisted over all T steps & both stacks.
        x0 = x_ref[...].reshape(T * B2, -1)                       # (T*2B, Ie+Ig)
        ih = jnp.dot(x0, wih0_ref[...], preferred_element_type=jnp.float32)
        ih = ih.reshape(T, B2, 4 * H) + bias_all[0]               # (T, 2B, 4H)

        h_bd = jnp.zeros((B2, 2 * H), jnp.float32)
        for l in range(num_layers):
            whh = whh_all[l]                                      # (2H, 4H)
            h_bd = jnp.zeros((B2, 2 * H), jnp.float32)
            c = jnp.zeros((B2, H), jnp.float32)
            last = l == num_layers - 1
            ys = []
            for t in range(T):                                    # unrolled
                gates = ih[t] + jnp.dot(h_bd, whh,
                                        preferred_element_type=jnp.float32)
                sig = jax.nn.sigmoid(gates[:, :3 * H])            # i | f | o
                g_gate = jnp.tanh(gates[:, 3 * H:])               # g
                c = sig[:, H:2 * H] * c + sig[:, :H] * g_gate
                h = sig[:, 2 * H:3 * H] * jnp.tanh(c)             # (2B, H)
                # Re-blockdiagonalize for the next recurrent / fc matmul.
                h_bd = jnp.concatenate([h, h], axis=1) * bd_mask  # (2B, 2H)
                if not last:
                    ys.append(h_bd)
            if not last:
                # Hoisted input projection for layer l+1 over all T steps.
                # TODO(synk): inter-layer LSTM dropout is train-only; identity here.
                ys_flat = jnp.stack(ys, axis=0).reshape(T * B2, 2 * H)
                ih = jnp.dot(ys_flat, wihr_all[l],
                             preferred_element_type=jnp.float32)
                ih = ih.reshape(T, B2, 4 * H) + bias_all[l + 1]

        # fc: concat([e, g]) @ W^T + b  ==  h_bd_last @ [We; Wg], halves summed.
        # nn.Dropout on `combined` is identity in eval mode.
        res = jnp.dot(h_bd, fcw_ref[...], preferred_element_type=jnp.float32)
        out_ref[...] = res[:B] + res[B:] + fcb_ref[...]

    return kernel


# ----------------------------------------------------------------------------
# Wrapper
# ----------------------------------------------------------------------------
def _full_spec(a):
    if a.ndim == 3:
        return pl.BlockSpec(a.shape, lambda: (0, 0, 0))
    return pl.BlockSpec(a.shape, lambda: (0, 0))


@jax.jit
def emg_lstm_forward(emg, glove, kparams):
    B, T, Ie = emg.shape
    Ig = glove.shape[-1]
    L = kparams["whh"].shape[0]
    H = kparams["whh"].shape[1] // 2
    O = kparams["fc_b"].shape[-1]

    # --- Layout plumbing in plain XLA (outside the kernel, one-time per call).
    # Time-major and block-combined inputs: rows 0..B-1 = emg (features in cols
    # 0..Ie-1), rows B..2B-1 = glove (features in cols Ie..Ie+Ig-1).
    emg_tm = jnp.transpose(emg, (1, 0, 2)).astype(jnp.float32)    # (T, B, Ie)
    glv_tm = jnp.transpose(glove, (1, 0, 2)).astype(jnp.float32)  # (T, B, Ig)
    x_comb = jnp.concatenate([
        jnp.concatenate([emg_tm, jnp.zeros((T, B, Ig), jnp.float32)], axis=-1),
        jnp.concatenate([jnp.zeros((T, B, Ie), jnp.float32), glv_tm], axis=-1),
    ], axis=1)                                                    # (T, 2B, Ie+Ig)
    bias_block = jnp.repeat(kparams["bias"], B, axis=1)           # (L, 2B, 4H)

    inputs = [x_comb, kparams["wih0"], kparams["wih_rest"], kparams["whh"],
              bias_block, kparams["fc_w"], kparams["fc_b"]]

    return pl.pallas_call(
        _make_fused_kernel(L, H, T),
        out_shape=jax.ShapeDtypeStruct((B, O), jnp.float32),
        in_specs=[_full_spec(a) for a in inputs],
        out_specs=pl.BlockSpec((B, O), lambda: (0, 0)),
    )(*inputs)


def prepare_kernel_params(params, hidden_size):
    """One-time layout plumbing (outside the kernel): transpose weights, fold the
    two biases, permute gate columns from PyTorch (i, f, g, o) to (i, f, o, g),
    stack the two LSTM stacks' weights block-diagonally along K, and pack
    everything into a handful of contiguous arrays (few DMAs)."""
    H = hidden_size
    perm = jnp.concatenate([jnp.arange(0, 2 * H),       # i, f
                            jnp.arange(3 * H, 4 * H),   # o
                            jnp.arange(2 * H, 3 * H)])  # g

    def prep_layer(layer):
        w_ih, w_hh, b_ih, b_hh = layer
        return (w_ih[perm, :].T,              # (in, 4H)
                w_hh[perm, :].T,              # (H, 4H)
                (b_ih + b_hh)[perm])          # (4H,)

    emg_l = [prep_layer(l) for l in params["lstm_emg"]]
    glv_l = [prep_layer(l) for l in params["lstm_glove"]]
    L = len(emg_l)

    # Layer-0 input weights, stacked along K: (Ie + Ig, 4H).
    wih0 = jnp.concatenate([emg_l[0][0], glv_l[0][0]], axis=0)
    # Layers 1..L-1 input weights (input width = H for both stacks): (L-1, 2H, 4H).
    if L > 1:
        wih_rest = jnp.stack(
            [jnp.concatenate([emg_l[l][0], glv_l[l][0]], axis=0)
             for l in range(1, L)], axis=0)
    else:
        wih_rest = jnp.zeros((1, 2 * H, 4 * H), jnp.float32)   # unused dummy
    # Recurrent weights stacked along K per layer: (L, 2H, 4H).
    whh = jnp.stack([jnp.concatenate([emg_l[l][1], glv_l[l][1]], axis=0)
                     for l in range(L)], axis=0)
    # Folded, permuted biases per layer: (L, 2, 4H) (row 0 = emg, row 1 = glove).
    bias = jnp.stack([jnp.stack([emg_l[l][2], glv_l[l][2]], axis=0)
                      for l in range(L)], axis=0)

    fc_w = params["fc_w"]                                       # (O, 2H)
    return {
        "wih0": wih0,
        "wih_rest": wih_rest,
        "whh": whh,
        "bias": bias,
        "fc_w": fc_w.T,                                         # (2H, O) = [We; Wg]
        "fc_b": params["fc_b"].reshape(1, -1),                  # (1, O)
    }


# ----------------------------------------------------------------------------
# Deterministic parameter init (PyTorch-style U(-1/sqrt(H), 1/sqrt(H)))
# ----------------------------------------------------------------------------
def init_lstm_params(key, input_size, hidden_size, num_layers):
    k = 1.0 / jnp.sqrt(jnp.float32(hidden_size))
    layers = []
    for layer in range(num_layers):
        in_sz = input_size if layer == 0 else hidden_size
        key, k1, k2, k3, k4 = jax.random.split(key, 5)
        w_ih = jax.random.uniform(k1, (4 * hidden_size, in_sz), jnp.float32, -k, k)
        w_hh = jax.random.uniform(k2, (4 * hidden_size, hidden_size), jnp.float32, -k, k)
        b_ih = jax.random.uniform(k3, (4 * hidden_size,), jnp.float32, -k, k)
        b_hh = jax.random.uniform(k4, (4 * hidden_size,), jnp.float32, -k, k)
        layers.append((w_ih, w_hh, b_ih, b_hh))
    return layers, key


def init_params(key, input_size, glove_size, hidden_size, output_size, num_layers):
    lstm_emg, key = init_lstm_params(key, input_size, hidden_size, num_layers)
    lstm_glove, key = init_lstm_params(key, glove_size, hidden_size, num_layers)
    kf = 1.0 / jnp.sqrt(jnp.float32(2 * hidden_size))
    key, k1, k2 = jax.random.split(key, 3)
    fc_w = jax.random.uniform(k1, (output_size, 2 * hidden_size), jnp.float32, -kf, kf)
    fc_b = jax.random.uniform(k2, (output_size,), jnp.float32, -kf, kf)
    return {"lstm_emg": lstm_emg, "lstm_glove": lstm_glove, "fc_w": fc_w, "fc_b": fc_b}


# ----------------------------------------------------------------------------
# Pure-JAX reference (PyTorch semantics, unpermuted weights) for correctness.
# ----------------------------------------------------------------------------
def _lstm_ref(x, layers):
    B, T, _ = x.shape
    for (w_ih, w_hh, b_ih, b_hh) in layers:
        H = w_hh.shape[1]
        b = b_ih + b_hh
        h = jnp.zeros((B, H), jnp.float32)
        c = jnp.zeros((B, H), jnp.float32)
        ys = []
        for t in range(T):
            gates = x[:, t, :] @ w_ih.T + h @ w_hh.T + b
            i = jax.nn.sigmoid(gates[:, :H])
            f = jax.nn.sigmoid(gates[:, H:2 * H])
            g = jnp.tanh(gates[:, 2 * H:3 * H])
            o = jax.nn.sigmoid(gates[:, 3 * H:])
            c = f * c + i * g
            h = o * jnp.tanh(c)
            ys.append(h)
        x = jnp.stack(ys, axis=1)
    return x


def _ref_forward(emg, glove, params):
    e = _lstm_ref(emg, params["lstm_emg"])[:, -1, :]
    g = _lstm_ref(glove, params["lstm_glove"])[:, -1, :]
    comb = jnp.concatenate([e, g], axis=1)
    return comb @ params["fc_w"].T + params["fc_b"]


# ----------------------------------------------------------------------------
if __name__ == "__main__":
    # Small shapes consistent with the module's forward.
    B, T = 2, 8
    INPUT_SIZE, GLOVE_SIZE = 16, 22
    HIDDEN, OUTPUT, NUM_LAYERS = 32, 52, 3

    key = jax.random.PRNGKey(0)
    key, ke, kg, kp = jax.random.split(key, 4)
    emg = jax.random.normal(ke, (B, T, INPUT_SIZE), jnp.float32)
    glove = jax.random.normal(kg, (B, T, GLOVE_SIZE), jnp.float32)
    params = init_params(kp, INPUT_SIZE, GLOVE_SIZE, HIDDEN, OUTPUT, NUM_LAYERS)
    kparams = prepare_kernel_params(params, HIDDEN)

    out = emg_lstm_forward(emg, glove, kparams)
    out = jax.block_until_ready(out)
    assert out.shape == (B, OUTPUT), out.shape

    ref = _ref_forward(emg, glove, params)
    err = float(jnp.max(jnp.abs(out - ref)))
    assert jnp.allclose(out, ref, atol=1e-4, rtol=1e-4), err

    print("KERNEL_OK")
</pallas_src>

<mosaic_0001>
module attributes {stable_mosaic.version = 11 : i64} {
  func.func @kernel(%arg0: memref<8x4x38xf32, #tpu.memory_space<vmem>>, %arg1: memref<38x128xf32, #tpu.memory_space<vmem>>, %arg2: memref<2x64x128xf32, #tpu.memory_space<vmem>>, %arg3: memref<3x64x128xf32, #tpu.memory_space<vmem>>, %arg4: memref<3x4x128xf32, #tpu.memory_space<vmem>>, %arg5: memref<64x52xf32, #tpu.memory_space<vmem>>, %arg6: memref<1x52xf32, #tpu.memory_space<vmem>>, %arg7: memref<2x52xf32, #tpu.memory_space<vmem>>) attributes {dimension_semantics = [], scalar_prefetch = 0 : i64, scratch_operands = 0 : i64, tpu.core_type = #tpu.core_type<tc>} {
    %0 = tpu.iota {dimensions = array<i32: 0>} : vector<4x64xi32>
    %1 = tpu.iota {dimensions = array<i32: 1>} : vector<4x64xi32>
    %c2_i32 = arith.constant 2 : i32
    %2 = vector.broadcast %c2_i32 : i32 to vector<4x64xi32>
    %3 = arith.cmpi slt, %0, %2 : vector<4x64xi32>
    %c32_i32 = arith.constant 32 : i32
    %4 = vector.broadcast %c32_i32 : i32 to vector<4x64xi32>
    %5 = arith.cmpi slt, %1, %4 : vector<4x64xi32>
    %6 = arith.xori %3, %5 : vector<4x64xi1>
    %cst = arith.constant dense<true> : vector<4x64xi1>
    %7 = arith.xori %6, %cst : vector<4x64xi1>
    %cst_0 = arith.constant 1.000000e+00 : f32
    %cst_1 = arith.constant 0.000000e+00 : f32
    %8 = vector.broadcast %cst_0 : f32 to vector<4x64xf32>
    %9 = vector.broadcast %cst_1 : f32 to vector<4x64xf32>
    %10 = arith.select %7, %8, %9 : vector<4x64xi1>, vector<4x64xf32>
    %c0 = arith.constant 0 : index
    %c0_2 = arith.constant 0 : index
    %c0_3 = arith.constant 0 : index
    %11 = vector.load %arg3[%c0, %c0_2, %c0_3] : memref<3x64x128xf32, #tpu.memory_space<vmem>>, vector<3x64x128xf32>
    %c0_4 = arith.constant 0 : index
    %c0_5 = arith.constant 0 : index
    %c0_6 = arith.constant 0 : index
    %12 = vector.load %arg2[%c0_4, %c0_5, %c0_6] : memref<2x64x128xf32, #tpu.memory_space<vmem>>, vector<2x64x128xf32>
    %c0_7 = arith.constant 0 : index
    %c0_8 = arith.constant 0 : index
    %c0_9 = arith.constant 0 : index
    %13 = vector.load %arg4[%c0_7, %c0_8, %c0_9] : memref<3x4x128xf32, #tpu.memory_space<vmem>>, vector<3x4x128xf32>
    %c0_10 = arith.constant 0 : index
    %c0_11 = arith.constant 0 : index
    %c0_12 = arith.constant 0 : index
    %14 = vector.load %arg0[%c0_10, %c0_11, %c0_12] : memref<8x4x38xf32, #tpu.memory_space<vmem>>, vector<8x4x38xf32>
    %15 = vector.shape_cast %14 : vector<8x4x38xf32> to vector<32x38xf32>
    %c0_13 = arith.constant 0 : index
    %c0_14 = arith.constant 0 : index
    %16 = vector.load %arg1[%c0_13, %c0_14] : memref<38x128xf32, #tpu.memory_space<vmem>>, vector<38x128xf32>
    %cst_15 = arith.constant dense<0.000000e+00> : vector<32x128xf32>
    %17 = tpu.matmul %15, %16, %cst_15 {dimension_numbers = #tpu.dot_dimension_numbers<[1], [0], [0], [1], [0, 0, 1, 1], [], []>} : vector<32x38xf32>, vector<38x128xf32>, vector<32x128xf32> -> vector<32x128xf32>
    %18 = vector.shape_cast %17 : vector<32x128xf32> to vector<8x4x128xf32>
    %19 = vector.extract_strided_slice %13 {offsets = [0, 0, 0], sizes = [1, 4, 128], strides = [1, 1, 1]} : vector<3x4x128xf32> to vector<1x4x128xf32>
    %20 = vector.shape_cast %19 : vector<1x4x128xf32> to vector<4x128xf32>
    %21 = vector.shape_cast %20 : vector<4x128xf32> to vector<1x4x128xf32>
    %22 = vector.broadcast %21 : vector<1x4x128xf32> to vector<8x4x128xf32>
    %23 = arith.addf %18, %22 : vector<8x4x128xf32>
    %24 = vector.extract_strided_slice %11 {offsets = [0, 0, 0], sizes = [1, 64, 128], strides = [1, 1, 1]} : vector<3x64x128xf32> to vector<1x64x128xf32>
    %25 = vector.shape_cast %24 : vector<1x64x128xf32> to vector<64x128xf32>
    %cst_16 = arith.constant 0.000000e+00 : f32
    %26 = vector.broadcast %cst_16 : f32 to vector<4x64xf32>
    %cst_17 = arith.constant 0.000000e+00 : f32
    %27 = vector.broadcast %cst_17 : f32 to vector<4x32xf32>
    %28 = vector.extract_strided_slice %23 {offsets = [0, 0, 0], sizes = [1, 4, 128], strides = [1, 1, 1]} : vector<8x4x128xf32> to vector<1x4x128xf32>
    %29 = vector.shape_cast %28 : vector<1x4x128xf32> to vector<4x128xf32>
    %cst_18 = arith.constant dense<0.000000e+00> : vector<4x128xf32>
    %30 = tpu.matmul %26, %25, %cst_18 {dimension_numbers = #tpu.dot_dimension_numbers<[1], [0], [0], [1], [0, 0, 1, 1], [], []>} : vector<4x64xf32>, vector<64x128xf32>, vector<4x128xf32> -> vector<4x128xf32>
    %31 = arith.addf %29, %30 : vector<4x128xf32>
    %32 = vector.extract_strided_slice %31 {offsets = [0, 0], sizes = [4, 96], strides = [1, 1]} : vector<4x128xf32> to vector<4x96xf32>
    %33 = arith.negf %32 : vector<4x96xf32>
    %34 = math.exp %33 : vector<4x96xf32>
    %cst_19 = arith.constant 1.000000e+00 : f32
    %35 = vector.broadcast %cst_19 : f32 to vector<4x96xf32>
    %36 = arith.addf %35, %34 : vector<4x96xf32>
    %37 = arith.divf %35, %36 : vector<4x96xf32>
    %38 = vector.extract_strided_slice %31 {offsets = [0, 96], sizes = [4, 32], strides = [1, 1]} : vector<4x128xf32> to vector<4x32xf32>
    %39 = math.tanh %38 : vector<4x32xf32>
    %40 = vector.extract_strided_slice %37 {offsets = [0, 32], sizes = [4, 32], strides = [1, 1]} : vector<4x96xf32> to vector<4x32xf32>
    %41 = arith.mulf %40, %27 : vector<4x32xf32>
    %42 = vector.extract_strided_slice %37 {offsets = [0, 0], sizes = [4, 32], strides = [1, 1]} : vector<4x96xf32> to vector<4x32xf32>
    %43 = arith.mulf %42, %39 : vector<4x32xf32>
    %44 = arith.addf %41, %43 : vector<4x32xf32>
    %45 = vector.extract_strided_slice %37 {offsets = [0, 64], sizes = [4, 32], strides = [1, 1]} : vector<4x96xf32> to vector<4x32xf32>
    %46 = math.tanh %44 : vector<4x32xf32>
    %47 = arith.mulf %45, %46 : vector<4x32xf32>
    %48 = tpu.concatenate %47, %47 in 1 : vector<4x32xf32>, vector<4x32xf32> -> vector<4x64xf32>
    %49 = arith.mulf %48, %10 : vector<4x64xf32>
    %50 = vector.extract_strided_slice %23 {offsets = [1, 0, 0], sizes = [1, 4, 128], strides = [1, 1, 1]} : vector<8x4x128xf32> to vector<1x4x128xf32>
    %51 = vector.shape_cast %50 : vector<1x4x128xf32> to vector<4x128xf32>
    %cst_20 = arith.constant dense<0.000000e+00> : vector<4x128xf32>
    %52 = tpu.matmul %49, %25, %cst_20 {dimension_numbers = #tpu.dot_dimension_numbers<[1], [0], [0], [1], [0, 0, 1, 1], [], []>} : vector<4x64xf32>, vector<64x128xf32>, vector<4x128xf32> -> vector<4x128xf32>
    %53 = arith.addf %51, %52 : vector<4x128xf32>
    %54 = vector.extract_strided_slice %53 {offsets = [0, 0], sizes = [4, 96], strides = [1, 1]} : vector<4x128xf32> to vector<4x96xf32>
    %55 = arith.negf %54 : vector<4x96xf32>
    %56 = math.exp %55 : vector<4x96xf32>
    %cst_21 = arith.constant 1.000000e+00 : f32
    %57 = vector.broadcast %cst_21 : f32 to vector<4x96xf32>
    %58 = arith.addf %57, %56 : vector<4x96xf32>
    %59 = arith.divf %57, %58 : vector<4x96xf32>
    %60 = vector.extract_strided_slice %53 {offsets = [0, 96], sizes = [4, 32], strides = [1, 1]} : vector<4x128xf32> to vector<4x32xf32>
    %61 = math.tanh %60 : vector<4x32xf32>
    %62 = vector.extract_strided_slice %59 {offsets = [0, 32], sizes = [4, 32], strides = [1, 1]} : vector<4x96xf32> to vector<4x32xf32>
    %63 = arith.mulf %62, %44 : vector<4x32xf32>
    %64 = vector.extract_strided_slice %59 {offsets = [0, 0], sizes = [4, 32], strides = [1, 1]} : vector<4x96xf32> to vector<4x32xf32>
    %65 = arith.mulf %64, %61 : vector<4x32xf32>
    %66 = arith.addf %63, %65 : vector<4x32xf32>
    %67 = vector.extract_strided_slice %59 {offsets = [0, 64], sizes = [4, 32], strides = [1, 1]} : vector<4x96xf32> to vector<4x32xf32>
    %68 = math.tanh %66 : vector<4x32xf32>
    %69 = arith.mulf %67, %68 : vector<4x32xf32>
    %70 = tpu.concatenate %69, %69 in 1 : vector<4x32xf32>, vector<4x32xf32> -> vector<4x64xf32>
    %71 = arith.mulf %70, %10 : vector<4x64xf32>
    %72 = vector.extract_strided_slice %23 {offsets = [2, 0, 0], sizes = [1, 4, 128], strides = [1, 1, 1]} : vector<8x4x128xf32> to vector<1x4x128xf32>
    %73 = vector.shape_cast %72 : vector<1x4x128xf32> to vector<4x128xf32>
    %cst_22 = arith.constant dense<0.000000e+00> : vector<4x128xf32>
    %74 = tpu.matmul %71, %25, %cst_22 {dimension_numbers = #tpu.dot_dimension_numbers<[1], [0], [0], [1], [0, 0, 1, 1], [], []>} : vector<4x64xf32>, vector<64x128xf32>, vector<4x128xf32> -> vector<4x128xf32>
    %75 = arith.addf %73, %74 : vector<4x128xf32>
    %76 = vector.extract_strided_slice %75 {offsets = [0, 0], sizes = [4, 96], strides = [1, 1]} : vector<4x128xf32> to vector<4x96xf32>
    %77 = arith.negf %76 : vector<4x96xf32>
    %78 = math.exp %77 : vector<4x96xf32>
    %cst_23 = arith.constant 1.000000e+00 : f32
    %79 = vector.broadcast %cst_23 : f32 to vector<4x96xf32>
    %80 = arith.addf %79, %78 : vector<4x96xf32>
    %81 = arith.divf %79, %80 : vector<4x96xf32>
    %82 = vector.extract_strided_slice %75 {offsets = [0, 96], sizes = [4, 32], strides = [1, 1]} : vector<4x128xf32> to vector<4x32xf32>
    %83 = math.tanh %82 : vector<4x32xf32>
    %84 = vector.extract_strided_slice %81 {offsets = [0, 32], sizes = [4, 32], strides = [1, 1]} : vector<4x96xf32> to vector<4x32xf32>
    %85 = arith.mulf %84, %66 : vector<4x32xf32>
    %86 = vector.extract_strided_slice %81 {offsets = [0, 0], sizes = [4, 32], strides = [1, 1]} : vector<4x96xf32> to vector<4x32xf32>
    %87 = arith.mulf %86, %83 : vector<4x32xf32>
    %88 = arith.addf %85, %87 : vector<4x32xf32>
    %89 = vector.extract_strided_slice %81 {offsets = [0, 64], sizes = [4, 32], strides = [1, 1]} : vector<4x96xf32> to vector<4x32xf32>
    %90 = math.tanh %88 : vector<4x32xf32>
    %91 = arith.mulf %89, %90 : vector<4x32xf32>
    %92 = tpu.concatenate %91, %91 in 1 : vector<4x32xf32>, vector<4x32xf32> -> vector<4x64xf32>
    %93 = arith.mulf %92, %10 : vector<4x64xf32>
    %94 = vector.extract_strided_slice %23 {offsets = [3, 0, 0], sizes = [1, 4, 128], strides = [1, 1, 1]} : vector<8x4x128xf32> to vector<1x4x128xf32>
    %95 = vector.shape_cast %94 : vector<1x4x128xf32> to vector<4x128xf32>
    %cst_24 = arith.constant dense<0.000000e+00> : vector<4x128xf32>
    %96 = tpu.matmul %93, %25, %cst_24 {dimension_numbers = #tpu.dot_dimension_numbers<[1], [0], [0], [1], [0, 0, 1, 1], [], []>} : vector<4x64xf32>, vector<64x128xf32>, vector<4x128xf32> -> vector<4x128xf32>
    %97 = arith.addf %95, %96 : vector<4x128xf32>
    %98 = vector.extract_strided_slice %97 {offsets = [0, 0], sizes = [4, 96], strides = [1, 1]} : vector<4x128xf32> to vector<4x96xf32>
    %99 = arith.negf %98 : vector<4x96xf32>
    %100 = math.exp %99 : vector<4x96xf32>
    %cst_25 = arith.constant 1.000000e+00 : f32
    %101 = vector.broadcast %cst_25 : f32 to vector<4x96xf32>
    %102 = arith.addf %101, %100 : vector<4x96xf32>
    %103 = arith.divf %101, %102 : vector<4x96xf32>
    %104 = vector.extract_strided_slice %97 {offsets = [0, 96], sizes = [4, 32], strides = [1, 1]} : vector<4x128xf32> to vector<4x32xf32>
    %105 = math.tanh %104 : vector<4x32xf32>
    %106 = vector.extract_strided_slice %103 {offsets = [0, 32], sizes = [4, 32], strides = [1, 1]} : vector<4x96xf32> to vector<4x32xf32>
    %107 = arith.mulf %106, %88 : vector<4x32xf32>
    %108 = vector.extract_strided_slice %103 {offsets = [0, 0], sizes = [4, 32], strides = [1, 1]} : vector<4x96xf32> to vector<4x32xf32>
    %109 = arith.mulf %108, %105 : vector<4x32xf32>
    %110 = arith.addf %107, %109 : vector<4x32xf32>
    %111 = vector.extract_strided_slice %103 {offsets = [0, 64], sizes = [4, 32], strides = [1, 1]} : vector<4x96xf32> to vector<4x32xf32>
    %112 = math.tanh %110 : vector<4x32xf32>
    %113 = arith.mulf %111, %112 : vector<4x32xf32>
    %114 = tpu.concatenate %113, %113 in 1 : vector<4x32xf32>, vector<4x32xf32> -> vector<4x64xf32>
    %115 = arith.mulf %114, %10 : vector<4x64xf32>
    %116 = vector.extract_strided_slice %23 {offsets = [4, 0, 0], sizes = [1, 4, 128], strides = [1, 1, 1]} : vector<8x4x128xf32> to vector<1x4x128xf32>
    %117 = vector.shape_cast %116 : vector<1x4x128xf32> to vector<4x128xf32>
    %cst_26 = arith.constant dense<0.000000e+00> : vector<4x128xf32>
    %118 = tpu.matmul %115, %25, %cst_26 {dimension_numbers = #tpu.dot_dimension_numbers<[1], [0], [0], [1], [0, 0, 1, 1], [], []>} : vector<4x64xf32>, vector<64x128xf32>, vector<4x128xf32> -> vector<4x128xf32>
    %119 = arith.addf %117, %118 : vector<4x128xf32>
    %120 = vector.extract_strided_slice %119 {offsets = [0, 0], sizes = [4, 96], strides = [1, 1]} : vector<4x128xf32> to vector<4x96xf32>
    %121 = arith.negf %120 : vector<4x96xf32>
    %122 = math.exp %121 : vector<4x96xf32>
    %cst_27 = arith.constant 1.000000e+00 : f32
    %123 = vector.broadcast %cst_27 : f32 to vector<4x96xf32>
    %124 = arith.addf %123, %122 : vector<4x96xf32>
    %125 = arith.divf %123, %124 : vector<4x96xf32>
    %126 = vector.extract_strided_slice %119 {offsets = [0, 96], sizes = [4, 32], strides = [1, 1]} : vector<4x128xf32> to vector<4x32xf32>
    %127 = math.tanh %126 : vector<4x32xf32>
    %128 = vector.extract_strided_slice %125 {offsets = [0, 32], sizes = [4, 32], strides = [1, 1]} : vector<4x96xf32> to vector<4x32xf32>
    %129 = arith.mulf %128, %110 : vector<4x32xf32>
    %130 = vector.extract_strided_slice %125 {offsets = [0, 0], sizes = [4, 32], strides = [1, 1]} : vector<4x96xf32> to vector<4x32xf32>
    %131 = arith.mulf %130, %127 : vector<4x32xf32>
    %132 = arith.addf %129, %131 : vector<4x32xf32>
    %133 = vector.extract_strided_slice %125 {offsets = [0, 64], sizes = [4, 32], strides = [1, 1]} : vector<4x96xf32> to vector<4x32xf32>
    %134 = math.tanh %132 : vector<4x32xf32>
    %135 = arith.mulf %133, %134 : vector<4x32xf32>
    %136 = tpu.concatenate %135, %135 in 1 : vector<4x32xf32>, vector<4x32xf32> -> vector<4x64xf32>
    %137 = arith.mulf %136, %10 : vector<4x64xf32>
    %138 = vector.extract_strided_slice %23 {offsets = [5, 0, 0], sizes = [1, 4, 128], strides = [1, 1, 1]} : vector<8x4x128xf32> to vector<1x4x128xf32>
    %139 = vector.shape_cast %138 : vector<1x4x128xf32> to vector<4x128xf32>
    %cst_28 = arith.constant dense<0.000000e+00> : vector<4x128xf32>
    %140 = tpu.matmul %137, %25, %cst_28 {dimension_numbers = #tpu.dot_dimension_numbers<[1], [0], [0], [1], [0, 0, 1, 1], [], []>} : vector<4x64xf32>, vector<64x128xf32>, vector<4x128xf32> -> vector<4x128xf32>
    %141 = arith.addf %139, %140 : vector<4x128xf32>
    %142 = vector.extract_strided_slice %141 {offsets = [0, 0], sizes = [4, 96], strides = [1, 1]} : vector<4x128xf32> to vector<4x96xf32>
    %143 = arith.negf %142 : vector<4x96xf32>
    %144 = math.exp %143 : vector<4x96xf32>
    %cst_29 = arith.constant 1.000000e+00 : f32
    %145 = vector.broadcast %cst_29 : f32 to vector<4x96xf32>
    %146 = arith.addf %145, %144 : vector<4x96xf32>
    %147 = arith.divf %145, %146 : vector<4x96xf32>
    %148 = vector.extract_strided_slice %141 {offsets = [0, 96], sizes = [4, 32], strides = [1, 1]} : vector<4x128xf32> to vector<4x32xf32>
    %149 = math.tanh %148 : vector<4x32xf32>
    %150 = vector.extract_strided_slice %147 {offsets = [0, 32], sizes = [4, 32], strides = [1, 1]} : vector<4x96xf32> to vector<4x32xf32>
    %151 = arith.mulf %150, %132 : vector<4x32xf32>
    %152 = vector.extract_strided_slice %147 {offsets = [0, 0], sizes = [4, 32], strides = [1, 1]} : vector<4x96xf32> to vector<4x32xf32>
    %153 = arith.mulf %152, %149 : vector<4x32xf32>
    %154 = arith.addf %151, %153 : vector<4x32xf32>
    %155 = vector.extract_strided_slice %147 {offsets = [0, 64], sizes = [4, 32], strides = [1, 1]} : vector<4x96xf32> to vector<4x32xf32>
    %156 = math.tanh %154 : vector<4x32xf32>
    %157 = arith.mulf %155, %156 : vector<4x32xf32>
    %158 = tpu.concatenate %157, %157 in 1 : vector<4x32xf32>, vector<4x32xf32> -> vector<4x64xf32>
    %159 = arith.mulf %158, %10 : vector<4x64xf32>
    %160 = vector.extract_strided_slice %23 {offsets = [6, 0, 0], sizes = [1, 4, 128], strides = [1, 1, 1]} : vector<8x4x128xf32> to vector<1x4x128xf32>
    %161 = vector.shape_cast %160 : vector<1x4x128xf32> to vector<4x128xf32>
    %cst_30 = arith.constant dense<0.000000e+00> : vector<4x128xf32>
    %162 = tpu.matmul %159, %25, %cst_30 {dimension_numbers = #tpu.dot_dimension_numbers<[1], [0], [0], [1], [0, 0, 1, 1], [], []>} : vector<4x64xf32>, vector<64x128xf32>, vector<4x128xf32> -> vector<4x128xf32>
    %163 = arith.addf %161, %162 : vector<4x128xf32>
    %164 = vector.extract_strided_slice %163 {offsets = [0, 0], sizes = [4, 96], strides = [1, 1]} : vector<4x128xf32> to vector<4x96xf32>
    %165 = arith.negf %164 : vector<4x96xf32>
    %166 = math.exp %165 : vector<4x96xf32>
    %cst_31 = arith.constant 1.000000e+00 : f32
    %167 = vector.broadcast %cst_31 : f32 to vector<4x96xf32>
    %168 = arith.addf %167, %166 : vector<4x96xf32>
    %169 = arith.divf %167, %168 : vector<4x96xf32>
    %170 = vector.extract_strided_slice %163 {offsets = [0, 96], sizes = [4, 32], strides = [1, 1]} : vector<4x128xf32> to vector<4x32xf32>
    %171 = math.tanh %170 : vector<4x32xf32>
    %172 = vector.extract_strided_slice %169 {offsets = [0, 32], sizes = [4, 32], strides = [1, 1]} : vector<4x96xf32> to vector<4x32xf32>
    %173 = arith.mulf %172, %154 : vector<4x32xf32>
    %174 = vector.extract_strided_slice %169 {offsets = [0, 0], sizes = [4, 32], strides = [1, 1]} : vector<4x96xf32> to vector<4x32xf32>
    %175 = arith.mulf %174, %171 : vector<4x32xf32>
    %176 = arith.addf %173, %175 : vector<4x32xf32>
    %177 = vector.extract_strided_slice %169 {offsets = [0, 64], sizes = [4, 32], strides = [1, 1]} : vector<4x96xf32> to vector<4x32xf32>
    %178 = math.tanh %176 : vector<4x32xf32>
    %179 = arith.mulf %177, %178 : vector<4x32xf32>
    %180 = tpu.concatenate %179, %179 in 1 : vector<4x32xf32>, vector<4x32xf32> -> vector<4x64xf32>
    %181 = arith.mulf %180, %10 : vector<4x64xf32>
    %182 = vector.extract_strided_slice %23 {offsets = [7, 0, 0], sizes = [1, 4, 128], strides = [1, 1, 1]} : vector<8x4x128xf32> to vector<1x4x128xf32>
    %183 = vector.shape_cast %182 : vector<1x4x128xf32> to vector<4x128xf32>
    %cst_32 = arith.constant dense<0.000000e+00> : vector<4x128xf32>
    %184 = tpu.matmul %181, %25, %cst_32 {dimension_numbers = #tpu.dot_dimension_numbers<[1], [0], [0], [1], [0, 0, 1, 1], [], []>} : vector<4x64xf32>, vector<64x128xf32>, vector<4x128xf32> -> vector<4x128xf32>
    %185 = arith.addf %183, %184 : vector<4x128xf32>
    %186 = vector.extract_strided_slice %185 {offsets = [0, 0], sizes = [4, 96], strides = [1, 1]} : vector<4x128xf32> to vector<4x96xf32>
    %187 = arith.negf %186 : vector<4x96xf32>
    %188 = math.exp %187 : vector<4x96xf32>
    %cst_33 = arith.constant 1.000000e+00 : f32
    %189 = vector.broadcast %cst_33 : f32 to vector<4x96xf32>
    %190 = arith.addf %189, %188 : vector<4x96xf32>
    %191 = arith.divf %189, %190 : vector<4x96xf32>
    %192 = vector.extract_strided_slice %185 {offsets = [0, 96], sizes = [4, 32], strides = [1, 1]} : vector<4x128xf32> to vector<4x32xf32>
    %193 = math.tanh %192 : vector<4x32xf32>
    %194 = vector.extract_strided_slice %191 {offsets = [0, 32], sizes = [4, 32], strides = [1, 1]} : vector<4x96xf32> to vector<4x32xf32>
    %195 = arith.mulf %194, %176 : vector<4x32xf32>
    %196 = vector.extract_strided_slice %191 {offsets = [0, 0], sizes = [4, 32], strides = [1, 1]} : vector<4x96xf32> to vector<4x32xf32>
    %197 = arith.mulf %196, %193 : vector<4x32xf32>
    %198 = arith.addf %195, %197 : vector<4x32xf32>
    %199 = vector.extract_strided_slice %191 {offsets = [0, 64], sizes = [4, 32], strides = [1, 1]} : vector<4x96xf32> to vector<4x32xf32>
    %200 = math.tanh %198 : vector<4x32xf32>
    %201 = arith.mulf %199, %200 : vector<4x32xf32>
    %202 = tpu.concatenate %201, %201 in 1 : vector<4x32xf32>, vector<4x32xf32> -> vector<4x64xf32>
    %203 = arith.mulf %202, %10 : vector<4x64xf32>
    %204 = vector.shape_cast %49 : vector<4x64xf32> to vector<1x4x64xf32>
    %205 = vector.shape_cast %71 : vector<4x64xf32> to vector<1x4x64xf32>
    %206 = vector.shape_cast %93 : vector<4x64xf32> to vector<1x4x64xf32>
    %207 = vector.shape_cast %115 : vector<4x64xf32> to vector<1x4x64xf32>
    %208 = vector.shape_cast %137 : vector<4x64xf32> to vector<1x4x64xf32>
    %209 = vector.shape_cast %159 : vector<4x64xf32> to vector<1x4x64xf32>
    %210 = vector.shape_cast %181 : vector<4x64xf32> to vector<1x4x64xf32>
    %211 = vector.shape_cast %203 : vector<4x64xf32> to vector<1x4x64xf32>
    %212 = tpu.concatenate %204, %205, %206, %207, %208, %209, %210, %211 in 0 : vector<1x4x64xf32>, vector<1x4x64xf32>, vector<1x4x64xf32>, vector<1x4x64xf32>, vector<1x4x64xf32>, vector<1x4x64xf32>, vector<1x4x64xf32>, vector<1x4x64xf32> -> vector<8x4x64xf32>
    %213 = vector.shape_cast %212 : vector<8x4x64xf32> to vector<32x64xf32>
    %214 = vector.extract_strided_slice %12 {offsets = [0, 0, 0], sizes = [1, 64, 128], strides = [1, 1, 1]} : vector<2x64x128xf32> to vector<1x64x128xf32>
    %215 = vector.shape_cast %214 : vector<1x64x128xf32> to vector<64x128xf32>
    %cst_34 = arith.constant dense<0.000000e+00> : vector<32x128xf32>
    %216 = tpu.matmul %213, %215, %cst_34 {dimension_numbers = #tpu.dot_dimension_numbers<[1], [0], [0], [1], [0, 0, 1, 1], [], []>} : vector<32x64xf32>, vector<64x128xf32>, vector<32x128xf32> -> vector<32x128xf32>
    %217 = vector.shape_cast %216 : vector<32x128xf32> to vector<8x4x128xf32>
    %218 = vector.extract_strided_slice %13 {offsets = [1, 0, 0], sizes = [1, 4, 128], strides = [1, 1, 1]} : vector<3x4x128xf32> to vector<1x4x128xf32>
    %219 = vector.shape_cast %218 : vector<1x4x128xf32> to vector<4x128xf32>
    %220 = vector.shape_cast %219 : vector<4x128xf32> to vector<1x4x128xf32>
    %221 = vector.broadcast %220 : vector<1x4x128xf32> to vector<8x4x128xf32>
    %222 = arith.addf %217, %221 : vector<8x4x128xf32>
    %223 = vector.extract_strided_slice %11 {offsets = [1, 0, 0], sizes = [1, 64, 128], strides = [1, 1, 1]} : vector<3x64x128xf32> to vector<1x64x128xf32>
    %224 = vector.shape_cast %223 : vector<1x64x128xf32> to vector<64x128xf32>
    %cst_35 = arith.constant 0.000000e+00 : f32
    %225 = vector.broadcast %cst_35 : f32 to vector<4x64xf32>
    %cst_36 = arith.constant 0.000000e+00 : f32
    %226 = vector.broadcast %cst_36 : f32 to vector<4x32xf32>
    %227 = vector.extract_strided_slice %222 {offsets = [0, 0, 0], sizes = [1, 4, 128], strides = [1, 1, 1]} : vector<8x4x128xf32> to vector<1x4x128xf32>
    %228 = vector.shape_cast %227 : vector<1x4x128xf32> to vector<4x128xf32>
    %cst_37 = arith.constant dense<0.000000e+00> : vector<4x128xf32>
    %229 = tpu.matmul %225, %224, %cst_37 {dimension_numbers = #tpu.dot_dimension_numbers<[1], [0], [0], [1], [0, 0, 1, 1], [], []>} : vector<4x64xf32>, vector<64x128xf32>, vector<4x128xf32> -> vector<4x128xf32>
    %230 = arith.addf %228, %229 : vector<4x128xf32>
    %231 = vector.extract_strided_slice %230 {offsets = [0, 0], sizes = [4, 96], strides = [1, 1]} : vector<4x128xf32> to vector<4x96xf32>
    %232 = arith.negf %231 : vector<4x96xf32>
    %233 = math.exp %232 : vector<4x96xf32>
    %cst_38 = arith.constant 1.000000e+00 : f32
    %234 = vector.broadcast %cst_38 : f32 to vector<4x96xf32>
    %235 = arith.addf %234, %233 : vector<4x96xf32>
    %236 = arith.divf %234, %235 : vector<4x96xf32>
    %237 = vector.extract_strided_slice %230 {offsets = [0, 96], sizes = [4, 32], strides = [1, 1]} : vector<4x128xf32> to vector<4x32xf32>
    %238 = math.tanh %237 : vector<4x32xf32>
    %239 = vector.extract_strided_slice %236 {offsets = [0, 32], sizes = [4, 32], strides = [1, 1]} : vector<4x96xf32> to vector<4x32xf32>
    %240 = arith.mulf %239, %226 : vector<4x32xf32>
    %241 = vector.extract_strided_slice %236 {offsets = [0, 0], sizes = [4, 32], strides = [1, 1]} : vector<4x96xf32> to vector<4x32xf32>
    %242 = arith.mulf %241, %238 : vector<4x32xf32>
    %243 = arith.addf %240, %242 : vector<4x32xf32>
    %244 = vector.extract_strided_slice %236 {offsets = [0, 64], sizes = [4, 32], strides = [1, 1]} : vector<4x96xf32> to vector<4x32xf32>
    %245 = math.tanh %243 : vector<4x32xf32>
    %246 = arith.mulf %244, %245 : vector<4x32xf32>
    %247 = tpu.concatenate %246, %246 in 1 : vector<4x32xf32>, vector<4x32xf32> -> vector<4x64xf32>
    %248 = arith.mulf %247, %10 : vector<4x64xf32>
    %249 = vector.extract_strided_slice %222 {offsets = [1, 0, 0], sizes = [1, 4, 128], strides = [1, 1, 1]} : vector<8x4x128xf32> to vector<1x4x128xf32>
    %250 = vector.shape_cast %249 : vector<1x4x128xf32> to vector<4x128xf32>
    %cst_39 = arith.constant dense<0.000000e+00> : vector<4x128xf32>
    %251 = tpu.matmul %248, %224, %cst_39 {dimension_numbers = #tpu.dot_dimension_numbers<[1], [0], [0], [1], [0, 0, 1, 1], [], []>} : vector<4x64xf32>, vector<64x128xf32>, vector<4x128xf32> -> vector<4x128xf32>
    %252 = arith.addf %250, %251 : vector<4x128xf32>
    %253 = vector.extract_strided_slice %252 {offsets = [0, 0], sizes = [4, 96], strides = [1, 1]} : vector<4x128xf32> to vector<4x96xf32>
    %254 = arith.negf %253 : vector<4x96xf32>
    %255 = math.exp %254 : vector<4x96xf32>
    %cst_40 = arith.constant 1.000000e+00 : f32
    %256 = vector.broadcast %cst_40 : f32 to vector<4x96xf32>
    %257 = arith.addf %256, %255 : vector<4x96xf32>
    %258 = arith.divf %256, %257 : vector<4x96xf32>
    %259 = vector.extract_strided_slice %252 {offsets = [0, 96], sizes = [4, 32], strides = [1, 1]} : vector<4x128xf32> to vector<4x32xf32>
    %260 = math.tanh %259 : vector<4x32xf32>
    %261 = vector.extract_strided_slice %258 {offsets = [0, 32], sizes = [4, 32], strides = [1, 1]} : vector<4x96xf32> to vector<4x32xf32>
    %262 = arith.mulf %261, %243 : vector<4x32xf32>
    %263 = vector.extract_strided_slice %258 {offsets = [0, 0], sizes = [4, 32], strides = [1, 1]} : vector<4x96xf32> to vector<4x32xf32>
    %264 = arith.mulf %263, %260 : vector<4x32xf32>
    %265 = arith.addf %262, %264 : vector<4x32xf32>
    %266 = vector.extract_strided_slice %258 {offsets = [0, 64], sizes = [4, 32], strides = [1, 1]} : vector<4x96xf32> to vector<4x32xf32>
    %267 = math.tanh %265 : vector<4x32xf32>
    %268 = arith.mulf %266, %267 : vector<4x32xf32>
    %269 = tpu.concatenate %268, %268 in 1 : vector<4x32xf32>, vector<4x32xf32> -> vector<4x64xf32>
    %270 = arith.mulf %269, %10 : vector<4x64xf32>
    %271 = vector.extract_strided_slice %222 {offsets = [2, 0, 0], sizes = [1, 4, 128], strides = [1, 1, 1]} : vector<8x4x128xf32> to vector<1x4x128xf32>
    %272 = vector.shape_cast %271 : vector<1x4x128xf32> to vector<4x128xf32>
    %cst_41 = arith.constant dense<0.000000e+00> : vector<4x128xf32>
    %273 = tpu.matmul %270, %224, %cst_41 {dimension_numbers = #tpu.dot_dimension_numbers<[1], [0], [0], [1], [0, 0, 1, 1], [], []>} : vector<4x64xf32>, vector<64x128xf32>, vector<4x128xf32> -> vector<4x128xf32>
    %274 = arith.addf %272, %273 : vector<4x128xf32>
    %275 = vector.extract_strided_slice %274 {offsets = [0, 0], sizes = [4, 96], strides = [1, 1]} : vector<4x128xf32> to vector<4x96xf32>
    %276 = arith.negf %275 : vector<4x96xf32>
    %277 = math.exp %276 : vector<4x96xf32>
    %cst_42 = arith.constant 1.000000e+00 : f32
    %278 = vector.broadcast %cst_42 : f32 to vector<4x96xf32>
    %279 = arith.addf %278, %277 : vector<4x96xf32>
    %280 = arith.divf %278, %279 : vector<4x96xf32>
    %281 = vector.extract_strided_slice %274 {offsets = [0, 96], sizes = [4, 32], strides = [1, 1]} : vector<4x128xf32> to vector<4x32xf32>
    %282 = math.tanh %281 : vector<4x32xf32>
    %283 = vector.extract_strided_slice %280 {offsets = [0, 32], sizes = [4, 32], strides = [1, 1]} : vector<4x96xf32> to vector<4x32xf32>
    %284 = arith.mulf %283, %265 : vector<4x32xf32>
    %285 = vector.extract_strided_slice %280 {offsets = [0, 0], sizes = [4, 32], strides = [1, 1]} : vector<4x96xf32> to vector<4x32xf32>
    %286 = arith.mulf %285, %282 : vector<4x32xf32>
    %287 = arith.addf %284, %286 : vector<4x32xf32>
    %288 = vector.extract_strided_slice %280 {offsets = [0, 64], sizes = [4, 32], strides = [1, 1]} : vector<4x96xf32> to vector<4x32xf32>
    %289 = math.tanh %287 : vector<4x32xf32>
    %290 = arith.mulf %288, %289 : vector<4x32xf32>
    %291 = tpu.concatenate %290, %290 in 1 : vector<4x32xf32>, vector<4x32xf32> -> vector<4x64xf32>
    %292 = arith.mulf %291, %10 : vector<4x64xf32>
    %293 = vector.extract_strided_slice %222 {offsets = [3, 0, 0], sizes = [1, 4, 128], strides = [1, 1, 1]} : vector<8x4x128xf32> to vector<1x4x128xf32>
    %294 = vector.shape_cast %293 : vector<1x4x128xf32> to vector<4x128xf32>
    %cst_43 = arith.constant dense<0.000000e+00> : vector<4x128xf32>
    %295 = tpu.matmul %292, %224, %cst_43 {dimension_numbers = #tpu.dot_dimension_numbers<[1], [0], [0], [1], [0, 0, 1, 1], [], []>} : vector<4x64xf32>, vector<64x128xf32>, vector<4x128xf32> -> vector<4x128xf32>
    %296 = arith.addf %294, %295 : vector<4x128xf32>
    %297 = vector.extract_strided_slice %296 {offsets = [0, 0], sizes = [4, 96], strides = [1, 1]} : vector<4x128xf32> to vector<4x96xf32>
    %298 = arith.negf %297 : vector<4x96xf32>
    %299 = math.exp %298 : vector<4x96xf32>
    %cst_44 = arith.constant 1.000000e+00 : f32
    %300 = vector.broadcast %cst_44 : f32 to vector<4x96xf32>
    %301 = arith.addf %300, %299 : vector<4x96xf32>
    %302 = arith.divf %300, %301 : vector<4x96xf32>
    %303 = vector.extract_strided_slice %296 {offsets = [0, 96], sizes = [4, 32], strides = [1, 1]} : vector<4x128xf32> to vector<4x32xf32>
    %304 = math.tanh %303 : vector<4x32xf32>
    %305 = vector.extract_strided_slice %302 {offsets = [0, 32], sizes = [4, 32], strides = [1, 1]} : vector<4x96xf32> to vector<4x32xf32>
    %306 = arith.mulf %305, %287 : vector<4x32xf32>
    %307 = vector.extract_strided_slice %302 {offsets = [0, 0], sizes = [4, 32], strides = [1, 1]} : vector<4x96xf32> to vector<4x32xf32>
    %308 = arith.mulf %307, %304 : vector<4x32xf32>
    %309 = arith.addf %306, %308 : vector<4x32xf32>
    %310 = vector.extract_strided_slice %302 {offsets = [0, 64], sizes = [4, 32], strides = [1, 1]} : vector<4x96xf32> to vector<4x32xf32>
    %311 = math.tanh %309 : vector<4x32xf32>
    %312 = arith.mulf %310, %311 : vector<4x32xf32>
    %313 = tpu.concatenate %312, %312 in 1 : vector<4x32xf32>, vector<4x32xf32> -> vector<4x64xf32>
    %314 = arith.mulf %313, %10 : vector<4x64xf32>
    %315 = vector.extract_strided_slice %222 {offsets = [4, 0, 0], sizes = [1, 4, 128], strides = [1, 1, 1]} : vector<8x4x128xf32> to vector<1x4x128xf32>
    %316 = vector.shape_cast %315 : vector<1x4x128xf32> to vector<4x128xf32>
    %cst_45 = arith.constant dense<0.000000e+00> : vector<4x128xf32>
    %317 = tpu.matmul %314, %224, %cst_45 {dimension_numbers = #tpu.dot_dimension_numbers<[1], [0], [0], [1], [0, 0, 1, 1], [], []>} : vector<4x64xf32>, vector<64x128xf32>, vector<4x128xf32> -> vector<4x128xf32>
    %318 = arith.addf %316, %317 : vector<4x128xf32>
    %319 = vector.extract_strided_slice %318 {offsets = [0, 0], sizes = [4, 96], strides = [1, 1]} : vector<4x128xf32> to vector<4x96xf32>
    %320 = arith.negf %319 : vector<4x96xf32>
    %321 = math.exp %320 : vector<4x96xf32>
    %cst_46 = arith.constant 1.000000e+00 : f32
    %322 = vector.broadcast %cst_46 : f32 to vector<4x96xf32>
    %323 = arith.addf %322, %321 : vector<4x96xf32>
    %324 = arith.divf %322, %323 : vector<4x96xf32>
    %325 = vector.extract_strided_slice %318 {offsets = [0, 96], sizes = [4, 32], strides = [1, 1]} : vector<4x128xf32> to vector<4x32xf32>
    %326 = math.tanh %325 : vector<4x32xf32>
    %327 = vector.extract_strided_slice %324 {offsets = [0, 32], sizes = [4, 32], strides = [1, 1]} : vector<4x96xf32> to vector<4x32xf32>
    %328 = arith.mulf %327, %309 : vector<4x32xf32>
    %329 = vector.extract_strided_slice %324 {offsets = [0, 0], sizes = [4, 32], strides = [1, 1]} : vector<4x96xf32> to vector<4x32xf32>
    %330 = arith.mulf %329, %326 : vector<4x32xf32>
    %331 = arith.addf %328, %330 : vector<4x32xf32>
    %332 = vector.extract_strided_slice %324 {offsets = [0, 64], sizes = [4, 32], strides = [1, 1]} : vector<4x96xf32> to vector<4x32xf32>
    %333 = math.tanh %331 : vector<4x32xf32>
    %334 = arith.mulf %332, %333 : vector<4x32xf32>
    %335 = tpu.concatenate %334, %334 in 1 : vector<4x32xf32>, vector<4x32xf32> -> vector<4x64xf32>
    %336 = arith.mulf %335, %10 : vector<4x64xf32>
    %337 = vector.extract_strided_slice %222 {offsets = [5, 0, 0], sizes = [1, 4, 128], strides = [1, 1, 1]} : vector<8x4x128xf32> to vector<1x4x128xf32>
    %338 = vector.shape_cast %337 : vector<1x4x128xf32> to vector<4x128xf32>
    %cst_47 = arith.constant dense<0.000000e+00> : vector<4x128xf32>
    %339 = tpu.matmul %336, %224, %cst_47 {dimension_numbers = #tpu.dot_dimension_numbers<[1], [0], [0], [1], [0, 0, 1, 1], [], []>} : vector<4x64xf32>, vector<64x128xf32>, vector<4x128xf32> -> vector<4x128xf32>
    %340 = arith.addf %338, %339 : vector<4x128xf32>
    %341 = vector.extract_strided_slice %340 {offsets = [0, 0], sizes = [4, 96], strides = [1, 1]} : vector<4x128xf32> to vector<4x96xf32>
    %342 = arith.negf %341 : vector<4x96xf32>
    %343 = math.exp %342 : vector<4x96xf32>
    %cst_48 = arith.constant 1.000000e+00 : f32
    %344 = vector.broadcast %cst_48 : f32 to vector<4x96xf32>
    %345 = arith.addf %344, %343 : vector<4x96xf32>
    %346 = arith.divf %344, %345 : vector<4x96xf32>
    %347 = vector.extract_strided_slice %340 {offsets = [0, 96], sizes = [4, 32], strides = [1, 1]} : vector<4x128xf32> to vector<4x32xf32>
    %348 = math.tanh %347 : vector<4x32xf32>
    %349 = vector.extract_strided_slice %346 {offsets = [0, 32], sizes = [4, 32], strides = [1, 1]} : vector<4x96xf32> to vector<4x32xf32>
    %350 = arith.mulf %349, %331 : vector<4x32xf32>
    %351 = vector.extract_strided_slice %346 {offsets = [0, 0], sizes = [4, 32], strides = [1, 1]} : vector<4x96xf32> to vector<4x32xf32>
    %352 = arith.mulf %351, %348 : vector<4x32xf32>
    %353 = arith.addf %350, %352 : vector<4x32xf32>
    %354 = vector.extract_strided_slice %346 {offsets = [0, 64], sizes = [4, 32], strides = [1, 1]} : vector<4x96xf32> to vector<4x32xf32>
    %355 = math.tanh %353 : vector<4x32xf32>
    %356 = arith.mulf %354, %355 : vector<4x32xf32>
    %357 = tpu.concatenate %356, %356 in 1 : vector<4x32xf32>, vector<4x32xf32> -> vector<4x64xf32>
    %358 = arith.mulf %357, %10 : vector<4x64xf32>
    %359 = vector.extract_strided_slice %222 {offsets = [6, 0, 0], sizes = [1, 4, 128], strides = [1, 1, 1]} : vector<8x4x128xf32> to vector<1x4x128xf32>
    %360 = vector.shape_cast %359 : vector<1x4x128xf32> to vector<4x128xf32>
    %cst_49 = arith.constant dense<0.000000e+00> : vector<4x128xf32>
    %361 = tpu.matmul %358, %224, %cst_49 {dimension_numbers = #tpu.dot_dimension_numbers<[1], [0], [0], [1], [0, 0, 1, 1], [], []>} : vector<4x64xf32>, vector<64x128xf32>, vector<4x128xf32> -> vector<4x128xf32>
    %362 = arith.addf %360, %361 : vector<4x128xf32>
    %363 = vector.extract_strided_slice %362 {offsets = [0, 0], sizes = [4, 96], strides = [1, 1]} : vector<4x128xf32> to vector<4x96xf32>
    %364 = arith.negf %363 : vector<4x96xf32>
    %365 = math.exp %364 : vector<4x96xf32>
    %cst_50 = arith.constant 1.000000e+00 : f32
    %366 = vector.broadcast %cst_50 : f32 to vector<4x96xf32>
    %367 = arith.addf %366, %365 : vector<4x96xf32>
    %368 = arith.divf %366, %367 : vector<4x96xf32>
    %369 = vector.extract_strided_slice %362 {offsets = [0, 96], sizes = [4, 32], strides = [1, 1]} : vector<4x128xf32> to vector<4x32xf32>
    %370 = math.tanh %369 : vector<4x32xf32>
    %371 = vector.extract_strided_slice %368 {offsets = [0, 32], sizes = [4, 32], strides = [1, 1]} : vector<4x96xf32> to vector<4x32xf32>
    %372 = arith.mulf %371, %353 : vector<4x32xf32>
    %373 = vector.extract_strided_slice %368 {offsets = [0, 0], sizes = [4, 32], strides = [1, 1]} : vector<4x96xf32> to vector<4x32xf32>
    %374 = arith.mulf %373, %370 : vector<4x32xf32>
    %375 = arith.addf %372, %374 : vector<4x32xf32>
    %376 = vector.extract_strided_slice %368 {offsets = [0, 64], sizes = [4, 32], strides = [1, 1]} : vector<4x96xf32> to vector<4x32xf32>
    %377 = math.tanh %375 : vector<4x32xf32>
    %378 = arith.mulf %376, %377 : vector<4x32xf32>
    %379 = tpu.concatenate %378, %378 in 1 : vector<4x32xf32>, vector<4x32xf32> -> vector<4x64xf32>
    %380 = arith.mulf %379, %10 : vector<4x64xf32>
    %381 = vector.extract_strided_slice %222 {offsets = [7, 0, 0], sizes = [1, 4, 128], strides = [1, 1, 1]} : vector<8x4x128xf32> to vector<1x4x128xf32>
    %382 = vector.shape_cast %381 : vector<1x4x128xf32> to vector<4x128xf32>
    %cst_51 = arith.constant dense<0.000000e+00> : vector<4x128xf32>
    %383 = tpu.matmul %380, %224, %cst_51 {dimension_numbers = #tpu.dot_dimension_numbers<[1], [0], [0], [1], [0, 0, 1, 1], [], []>} : vector<4x64xf32>, vector<64x128xf32>, vector<4x128xf32> -> vector<4x128xf32>
    %384 = arith.addf %382, %383 : vector<4x128xf32>
    %385 = vector.extract_strided_slice %384 {offsets = [0, 0], sizes = [4, 96], strides = [1, 1]} : vector<4x128xf32> to vector<4x96xf32>
    %386 = arith.negf %385 : vector<4x96xf32>
    %387 = math.exp %386 : vector<4x96xf32>
    %cst_52 = arith.constant 1.000000e+00 : f32
    %388 = vector.broadcast %cst_52 : f32 to vector<4x96xf32>
    %389 = arith.addf %388, %387 : vector<4x96xf32>
    %390 = arith.divf %388, %389 : vector<4x96xf32>
    %391 = vector.extract_strided_slice %384 {offsets = [0, 96], sizes = [4, 32], strides = [1, 1]} : vector<4x128xf32> to vector<4x32xf32>
    %392 = math.tanh %391 : vector<4x32xf32>
    %393 = vector.extract_strided_slice %390 {offsets = [0, 32], sizes = [4, 32], strides = [1, 1]} : vector<4x96xf32> to vector<4x32xf32>
    %394 = arith.mulf %393, %375 : vector<4x32xf32>
    %395 = vector.extract_strided_slice %390 {offsets = [0, 0], sizes = [4, 32], strides = [1, 1]} : vector<4x96xf32> to vector<4x32xf32>
    %396 = arith.mulf %395, %392 : vector<4x32xf32>
    %397 = arith.addf %394, %396 : vector<4x32xf32>
    %398 = vector.extract_strided_slice %390 {offsets = [0, 64], sizes = [4, 32], strides = [1, 1]} : vector<4x96xf32> to vector<4x32xf32>
    %399 = math.tanh %397 : vector<4x32xf32>
    %400 = arith.mulf %398, %399 : vector<4x32xf32>
    %401 = tpu.concatenate %400, %400 in 1 : vector<4x32xf32>, vector<4x32xf32> -> vector<4x64xf32>
    %402 = arith.mulf %401, %10 : vector<4x64xf32>
    %403 = vector.shape_cast %248 : vector<4x64xf32> to vector<1x4x64xf32>
    %404 = vector.shape_cast %270 : vector<4x64xf32> to vector<1x4x64xf32>
    %405 = vector.shape_cast %292 : vector<4x64xf32> to vector<1x4x64xf32>
    %406 = vector.shape_cast %314 : vector<4x64xf32> to vector<1x4x64xf32>
    %407 = vector.shape_cast %336 : vector<4x64xf32> to vector<1x4x64xf32>
    %408 = vector.shape_cast %358 : vector<4x64xf32> to vector<1x4x64xf32>
    %409 = vector.shape_cast %380 : vector<4x64xf32> to vector<1x4x64xf32>
    %410 = vector.shape_cast %402 : vector<4x64xf32> to vector<1x4x64xf32>
    %411 = tpu.concatenate %403, %404, %405, %406, %407, %408, %409, %410 in 0 : vector<1x4x64xf32>, vector<1x4x64xf32>, vector<1x4x64xf32>, vector<1x4x64xf32>, vector<1x4x64xf32>, vector<1x4x64xf32>, vector<1x4x64xf32>, vector<1x4x64xf32> -> vector<8x4x64xf32>
    %412 = vector.shape_cast %411 : vector<8x4x64xf32> to vector<32x64xf32>
    %413 = vector.extract_strided_slice %12 {offsets = [1, 0, 0], sizes = [1, 64, 128], strides = [1, 1, 1]} : vector<2x64x128xf32> to vector<1x64x128xf32>
    %414 = vector.shape_cast %413 : vector<1x64x128xf32> to vector<64x128xf32>
    %cst_53 = arith.constant dense<0.000000e+00> : vector<32x128xf32>
    %415 = tpu.matmul %412, %414, %cst_53 {dimension_numbers = #tpu.dot_dimension_numbers<[1], [0], [0], [1], [0, 0, 1, 1], [], []>} : vector<32x64xf32>, vector<64x128xf32>, vector<32x128xf32> -> vector<32x128xf32>
    %416 = vector.shape_cast %415 : vector<32x128xf32> to vector<8x4x128xf32>
    %417 = vector.extract_strided_slice %13 {offsets = [2, 0, 0], sizes = [1, 4, 128], strides = [1, 1, 1]} : vector<3x4x128xf32> to vector<1x4x128xf32>
    %418 = vector.shape_cast %417 : vector<1x4x128xf32> to vector<4x128xf32>
    %419 = vector.shape_cast %418 : vector<4x128xf32> to vector<1x4x128xf32>
    %420 = vector.broadcast %419 : vector<1x4x128xf32> to vector<8x4x128xf32>
    %421 = arith.addf %416, %420 : vector<8x4x128xf32>
    %422 = vector.extract_strided_slice %11 {offsets = [2, 0, 0], sizes = [1, 64, 128], strides = [1, 1, 1]} : vector<3x64x128xf32> to vector<1x64x128xf32>
    %423 = vector.shape_cast %422 : vector<1x64x128xf32> to vector<64x128xf32>
    %cst_54 = arith.constant 0.000000e+00 : f32
    %424 = vector.broadcast %cst_54 : f32 to vector<4x64xf32>
    %cst_55 = arith.constant 0.000000e+00 : f32
    %425 = vector.broadcast %cst_55 : f32 to vector<4x32xf32>
    %426 = vector.extract_strided_slice %421 {offsets = [0, 0, 0], sizes = [1, 4, 128], strides = [1, 1, 1]} : vector<8x4x128xf32> to vector<1x4x128xf32>
    %427 = vector.shape_cast %426 : vector<1x4x128xf32> to vector<4x128xf32>
    %cst_56 = arith.constant dense<0.000000e+00> : vector<4x128xf32>
    %428 = tpu.matmul %424, %423, %cst_56 {dimension_numbers = #tpu.dot_dimension_numbers<[1], [0], [0], [1], [0, 0, 1, 1], [], []>} : vector<4x64xf32>, vector<64x128xf32>, vector<4x128xf32> -> vector<4x128xf32>
    %429 = arith.addf %427, %428 : vector<4x128xf32>
    %430 = vector.extract_strided_slice %429 {offsets = [0, 0], sizes = [4, 96], strides = [1, 1]} : vector<4x128xf32> to vector<4x96xf32>
    %431 = arith.negf %430 : vector<4x96xf32>
    %432 = math.exp %431 : vector<4x96xf32>
    %cst_57 = arith.constant 1.000000e+00 : f32
    %433 = vector.broadcast %cst_57 : f32 to vector<4x96xf32>
    %434 = arith.addf %433, %432 : vector<4x96xf32>
    %435 = arith.divf %433, %434 : vector<4x96xf32>
    %436 = vector.extract_strided_slice %429 {offsets = [0, 96], sizes = [4, 32], strides = [1, 1]} : vector<4x128xf32> to vector<4x32xf32>
    %437 = math.tanh %436 : vector<4x32xf32>
    %438 = vector.extract_strided_slice %435 {offsets = [0, 32], sizes = [4, 32], strides = [1, 1]} : vector<4x96xf32> to vector<4x32xf32>
    %439 = arith.mulf %438, %425 : vector<4x32xf32>
    %440 = vector.extract_strided_slice %435 {offsets = [0, 0], sizes = [4, 32], strides = [1, 1]} : vector<4x96xf32> to vector<4x32xf32>
    %441 = arith.mulf %440, %437 : vector<4x32xf32>
    %442 = arith.addf %439, %441 : vector<4x32xf32>
    %443 = vector.extract_strided_slice %435 {offsets = [0, 64], sizes = [4, 32], strides = [1, 1]} : vector<4x96xf32> to vector<4x32xf32>
    %444 = math.tanh %442 : vector<4x32xf32>
    %445 = arith.mulf %443, %444 : vector<4x32xf32>
    %446 = tpu.concatenate %445, %445 in 1 : vector<4x32xf32>, vector<4x32xf32> -> vector<4x64xf32>
    %447 = arith.mulf %446, %10 : vector<4x64xf32>
    %448 = vector.extract_strided_slice %421 {offsets = [1, 0, 0], sizes = [1, 4, 128], strides = [1, 1, 1]} : vector<8x4x128xf32> to vector<1x4x128xf32>
    %449 = vector.shape_cast %448 : vector<1x4x128xf32> to vector<4x128xf32>
    %cst_58 = arith.constant dense<0.000000e+00> : vector<4x128xf32>
    %450 = tpu.matmul %447, %423, %cst_58 {dimension_numbers = #tpu.dot_dimension_numbers<[1], [0], [0], [1], [0, 0, 1, 1], [], []>} : vector<4x64xf32>, vector<64x128xf32>, vector<4x128xf32> -> vector<4x128xf32>
    %451 = arith.addf %449, %450 : vector<4x128xf32>
    %452 = vector.extract_strided_slice %451 {offsets = [0, 0], sizes = [4, 96], strides = [1, 1]} : vector<4x128xf32> to vector<4x96xf32>
    %453 = arith.negf %452 : vector<4x96xf32>
    %454 = math.exp %453 : vector<4x96xf32>
    %cst_59 = arith.constant 1.000000e+00 : f32
    %455 = vector.broadcast %cst_59 : f32 to vector<4x96xf32>
    %456 = arith.addf %455, %454 : vector<4x96xf32>
    %457 = arith.divf %455, %456 : vector<4x96xf32>
    %458 = vector.extract_strided_slice %451 {offsets = [0, 96], sizes = [4, 32], strides = [1, 1]} : vector<4x128xf32> to vector<4x32xf32>
    %459 = math.tanh %458 : vector<4x32xf32>
    %460 = vector.extract_strided_slice %457 {offsets = [0, 32], sizes = [4, 32], strides = [1, 1]} : vector<4x96xf32> to vector<4x32xf32>
    %461 = arith.mulf %460, %442 : vector<4x32xf32>
    %462 = vector.extract_strided_slice %457 {offsets = [0, 0], sizes = [4, 32], strides = [1, 1]} : vector<4x96xf32> to vector<4x32xf32>
    %463 = arith.mulf %462, %459 : vector<4x32xf32>
    %464 = arith.addf %461, %463 : vector<4x32xf32>
    %465 = vector.extract_strided_slice %457 {offsets = [0, 64], sizes = [4, 32], strides = [1, 1]} : vector<4x96xf32> to vector<4x32xf32>
    %466 = math.tanh %464 : vector<4x32xf32>
    %467 = arith.mulf %465, %466 : vector<4x32xf32>
    %468 = tpu.concatenate %467, %467 in 1 : vector<4x32xf32>, vector<4x32xf32> -> vector<4x64xf32>
    %469 = arith.mulf %468, %10 : vector<4x64xf32>
    %470 = vector.extract_strided_slice %421 {offsets = [2, 0, 0], sizes = [1, 4, 128], strides = [1, 1, 1]} : vector<8x4x128xf32> to vector<1x4x128xf32>
    %471 = vector.shape_cast %470 : vector<1x4x128xf32> to vector<4x128xf32>
    %cst_60 = arith.constant dense<0.000000e+00> : vector<4x128xf32>
    %472 = tpu.matmul %469, %423, %cst_60 {dimension_numbers = #tpu.dot_dimension_numbers<[1], [0], [0], [1], [0, 0, 1, 1], [], []>} : vector<4x64xf32>, vector<64x128xf32>, vector<4x128xf32> -> vector<4x128xf32>
    %473 = arith.addf %471, %472 : vector<4x128xf32>
    %474 = vector.extract_strided_slice %473 {offsets = [0, 0], sizes = [4, 96], strides = [1, 1]} : vector<4x128xf32> to vector<4x96xf32>
    %475 = arith.negf %474 : vector<4x96xf32>
    %476 = math.exp %475 : vector<4x96xf32>
    %cst_61 = arith.constant 1.000000e+00 : f32
    %477 = vector.broadcast %cst_61 : f32 to vector<4x96xf32>
    %478 = arith.addf %477, %476 : vector<4x96xf32>
    %479 = arith.divf %477, %478 : vector<4x96xf32>
    %480 = vector.extract_strided_slice %473 {offsets = [0, 96], sizes = [4, 32], strides = [1, 1]} : vector<4x128xf32> to vector<4x32xf32>
    %481 = math.tanh %480 : vector<4x32xf32>
    %482 = vector.extract_strided_slice %479 {offsets = [0, 32], sizes = [4, 32], strides = [1, 1]} : vector<4x96xf32> to vector<4x32xf32>
    %483 = arith.mulf %482, %464 : vector<4x32xf32>
    %484 = vector.extract_strided_slice %479 {offsets = [0, 0], sizes = [4, 32], strides = [1, 1]} : vector<4x96xf32> to vector<4x32xf32>
    %485 = arith.mulf %484, %481 : vector<4x32xf32>
    %486 = arith.addf %483, %485 : vector<4x32xf32>
    %487 = vector.extract_strided_slice %479 {offsets = [0, 64], sizes = [4, 32], strides = [1, 1]} : vector<4x96xf32> to vector<4x32xf32>
    %488 = math.tanh %486 : vector<4x32xf32>
    %489 = arith.mulf %487, %488 : vector<4x32xf32>
    %490 = tpu.concatenate %489, %489 in 1 : vector<4x32xf32>, vector<4x32xf32> -> vector<4x64xf32>
    %491 = arith.mulf %490, %10 : vector<4x64xf32>
    %492 = vector.extract_strided_slice %421 {offsets = [3, 0, 0], sizes = [1, 4, 128], strides = [1, 1, 1]} : vector<8x4x128xf32> to vector<1x4x128xf32>
    %493 = vector.shape_cast %492 : vector<1x4x128xf32> to vector<4x128xf32>
    %cst_62 = arith.constant dense<0.000000e+00> : vector<4x128xf32>
    %494 = tpu.matmul %491, %423, %cst_62 {dimension_numbers = #tpu.dot_dimension_numbers<[1], [0], [0], [1], [0, 0, 1, 1], [], []>} : vector<4x64xf32>, vector<64x128xf32>, vector<4x128xf32> -> vector<4x128xf32>
    %495 = arith.addf %493, %494 : vector<4x128xf32>
    %496 = vector.extract_strided_slice %495 {offsets = [0, 0], sizes = [4, 96], strides = [1, 1]} : vector<4x128xf32> to vector<4x96xf32>
    %497 = arith.negf %496 : vector<4x96xf32>
    %498 = math.exp %497 : vector<4x96xf32>
    %cst_63 = arith.constant 1.000000e+00 : f32
    %499 = vector.broadcast %cst_63 : f32 to vector<4x96xf32>
    %500 = arith.addf %499, %498 : vector<4x96xf32>
    %501 = arith.divf %499, %500 : vector<4x96xf32>
    %502 = vector.extract_strided_slice %495 {offsets = [0, 96], sizes = [4, 32], strides = [1, 1]} : vector<4x128xf32> to vector<4x32xf32>
    %503 = math.tanh %502 : vector<4x32xf32>
    %504 = vector.extract_strided_slice %501 {offsets = [0, 32], sizes = [4, 32], strides = [1, 1]} : vector<4x96xf32> to vector<4x32xf32>
    %505 = arith.mulf %504, %486 : vector<4x32xf32>
    %506 = vector.extract_strided_slice %501 {offsets = [0, 0], sizes = [4, 32], strides = [1, 1]} : vector<4x96xf32> to vector<4x32xf32>
    %507 = arith.mulf %506, %503 : vector<4x32xf32>
    %508 = arith.addf %505, %507 : vector<4x32xf32>
    %509 = vector.extract_strided_slice %501 {offsets = [0, 64], sizes = [4, 32], strides = [1, 1]} : vector<4x96xf32> to vector<4x32xf32>
    %510 = math.tanh %508 : vector<4x32xf32>
    %511 = arith.mulf %509, %510 : vector<4x32xf32>
    %512 = tpu.concatenate %511, %511 in 1 : vector<4x32xf32>, vector<4x32xf32> -> vector<4x64xf32>
    %513 = arith.mulf %512, %10 : vector<4x64xf32>
    %514 = vector.extract_strided_slice %421 {offsets = [4, 0, 0], sizes = [1, 4, 128], strides = [1, 1, 1]} : vector<8x4x128xf32> to vector<1x4x128xf32>
    %515 = vector.shape_cast %514 : vector<1x4x128xf32> to vector<4x128xf32>
    %cst_64 = arith.constant dense<0.000000e+00> : vector<4x128xf32>
    %516 = tpu.matmul %513, %423, %cst_64 {dimension_numbers = #tpu.dot_dimension_numbers<[1], [0], [0], [1], [0, 0, 1, 1], [], []>} : vector<4x64xf32>, vector<64x128xf32>, vector<4x128xf32> -> vector<4x128xf32>
    %517 = arith.addf %515, %516 : vector<4x128xf32>
    %518 = vector.extract_strided_slice %517 {offsets = [0, 0], sizes = [4, 96], strides = [1, 1]} : vector<4x128xf32> to vector<4x96xf32>
    %519 = arith.negf %518 : vector<4x96xf32>
    %520 = math.exp %519 : vector<4x96xf32>
    %cst_65 = arith.constant 1.000000e+00 : f32
    %521 = vector.broadcast %cst_65 : f32 to vector<4x96xf32>
    %522 = arith.addf %521, %520 : vector<4x96xf32>
    %523 = arith.divf %521, %522 : vector<4x96xf32>
    %524 = vector.extract_strided_slice %517 {offsets = [0, 96], sizes = [4, 32], strides = [1, 1]} : vector<4x128xf32> to vector<4x32xf32>
    %525 = math.tanh %524 : vector<4x32xf32>
    %526 = vector.extract_strided_slice %523 {offsets = [0, 32], sizes = [4, 32], strides = [1, 1]} : vector<4x96xf32> to vector<4x32xf32>
    %527 = arith.mulf %526, %508 : vector<4x32xf32>
    %528 = vector.extract_strided_slice %523 {offsets = [0, 0], sizes = [4, 32], strides = [1, 1]} : vector<4x96xf32> to vector<4x32xf32>
    %529 = arith.mulf %528, %525 : vector<4x32xf32>
    %530 = arith.addf %527, %529 : vector<4x32xf32>
    %531 = vector.extract_strided_slice %523 {offsets = [0, 64], sizes = [4, 32], strides = [1, 1]} : vector<4x96xf32> to vector<4x32xf32>
    %532 = math.tanh %530 : vector<4x32xf32>
    %533 = arith.mulf %531, %532 : vector<4x32xf32>
    %534 = tpu.concatenate %533, %533 in 1 : vector<4x32xf32>, vector<4x32xf32> -> vector<4x64xf32>
    %535 = arith.mulf %534, %10 : vector<4x64xf32>
    %536 = vector.extract_strided_slice %421 {offsets = [5, 0, 0], sizes = [1, 4, 128], strides = [1, 1, 1]} : vector<8x4x128xf32> to vector<1x4x128xf32>
    %537 = vector.shape_cast %536 : vector<1x4x128xf32> to vector<4x128xf32>
    %cst_66 = arith.constant dense<0.000000e+00> : vector<4x128xf32>
    %538 = tpu.matmul %535, %423, %cst_66 {dimension_numbers = #tpu.dot_dimension_numbers<[1], [0], [0], [1], [0, 0, 1, 1], [], []>} : vector<4x64xf32>, vector<64x128xf32>, vector<4x128xf32> -> vector<4x128xf32>
    %539 = arith.addf %537, %538 : vector<4x128xf32>
    %540 = vector.extract_strided_slice %539 {offsets = [0, 0], sizes = [4, 96], strides = [1, 1]} : vector<4x128xf32> to vector<4x96xf32>
    %541 = arith.negf %540 : vector<4x96xf32>
    %542 = math.exp %541 : vector<4x96xf32>
    %cst_67 = arith.constant 1.000000e+00 : f32
    %543 = vector.broadcast %cst_67 : f32 to vector<4x96xf32>
    %544 = arith.addf %543, %542 : vector<4x96xf32>
    %545 = arith.divf %543, %544 : vector<4x96xf32>
    %546 = vector.extract_strided_slice %539 {offsets = [0, 96], sizes = [4, 32], strides = [1, 1]} : vector<4x128xf32> to vector<4x32xf32>
    %547 = math.tanh %546 : vector<4x32xf32>
    %548 = vector.extract_strided_slice %545 {offsets = [0, 32], sizes = [4, 32], strides = [1, 1]} : vector<4x96xf32> to vector<4x32xf32>
    %549 = arith.mulf %548, %530 : vector<4x32xf32>
    %550 = vector.extract_strided_slice %545 {offsets = [0, 0], sizes = [4, 32], strides = [1, 1]} : vector<4x96xf32> to vector<4x32xf32>
    %551 = arith.mulf %550, %547 : vector<4x32xf32>
    %552 = arith.addf %549, %551 : vector<4x32xf32>
    %553 = vector.extract_strided_slice %545 {offsets = [0, 64], sizes = [4, 32], strides = [1, 1]} : vector<4x96xf32> to vector<4x32xf32>
    %554 = math.tanh %552 : vector<4x32xf32>
    %555 = arith.mulf %553, %554 : vector<4x32xf32>
    %556 = tpu.concatenate %555, %555 in 1 : vector<4x32xf32>, vector<4x32xf32> -> vector<4x64xf32>
    %557 = arith.mulf %556, %10 : vector<4x64xf32>
    %558 = vector.extract_strided_slice %421 {offsets = [6, 0, 0], sizes = [1, 4, 128], strides = [1, 1, 1]} : vector<8x4x128xf32> to vector<1x4x128xf32>
    %559 = vector.shape_cast %558 : vector<1x4x128xf32> to vector<4x128xf32>
    %cst_68 = arith.constant dense<0.000000e+00> : vector<4x128xf32>
    %560 = tpu.matmul %557, %423, %cst_68 {dimension_numbers = #tpu.dot_dimension_numbers<[1], [0], [0], [1], [0, 0, 1, 1], [], []>} : vector<4x64xf32>, vector<64x128xf32>, vector<4x128xf32> -> vector<4x128xf32>
    %561 = arith.addf %559, %560 : vector<4x128xf32>
    %562 = vector.extract_strided_slice %561 {offsets = [0, 0], sizes = [4, 96], strides = [1, 1]} : vector<4x128xf32> to vector<4x96xf32>
    %563 = arith.negf %562 : vector<4x96xf32>
    %564 = math.exp %563 : vector<4x96xf32>
    %cst_69 = arith.constant 1.000000e+00 : f32
    %565 = vector.broadcast %cst_69 : f32 to vector<4x96xf32>
    %566 = arith.addf %565, %564 : vector<4x96xf32>
    %567 = arith.divf %565, %566 : vector<4x96xf32>
    %568 = vector.extract_strided_slice %561 {offsets = [0, 96], sizes = [4, 32], strides = [1, 1]} : vector<4x128xf32> to vector<4x32xf32>
    %569 = math.tanh %568 : vector<4x32xf32>
    %570 = vector.extract_strided_slice %567 {offsets = [0, 32], sizes = [4, 32], strides = [1, 1]} : vector<4x96xf32> to vector<4x32xf32>
    %571 = arith.mulf %570, %552 : vector<4x32xf32>
    %572 = vector.extract_strided_slice %567 {offsets = [0, 0], sizes = [4, 32], strides = [1, 1]} : vector<4x96xf32> to vector<4x32xf32>
    %573 = arith.mulf %572, %569 : vector<4x32xf32>
    %574 = arith.addf %571, %573 : vector<4x32xf32>
    %575 = vector.extract_strided_slice %567 {offsets = [0, 64], sizes = [4, 32], strides = [1, 1]} : vector<4x96xf32> to vector<4x32xf32>
    %576 = math.tanh %574 : vector<4x32xf32>
    %577 = arith.mulf %575, %576 : vector<4x32xf32>
    %578 = tpu.concatenate %577, %577 in 1 : vector<4x32xf32>, vector<4x32xf32> -> vector<4x64xf32>
    %579 = arith.mulf %578, %10 : vector<4x64xf32>
    %580 = vector.extract_strided_slice %421 {offsets = [7, 0, 0], sizes = [1, 4, 128], strides = [1, 1, 1]} : vector<8x4x128xf32> to vector<1x4x128xf32>
    %581 = vector.shape_cast %580 : vector<1x4x128xf32> to vector<4x128xf32>
    %cst_70 = arith.constant dense<0.000000e+00> : vector<4x128xf32>
    %582 = tpu.matmul %579, %423, %cst_70 {dimension_numbers = #tpu.dot_dimension_numbers<[1], [0], [0], [1], [0, 0, 1, 1], [], []>} : vector<4x64xf32>, vector<64x128xf32>, vector<4x128xf32> -> vector<4x128xf32>
    %583 = arith.addf %581, %582 : vector<4x128xf32>
    %584 = vector.extract_strided_slice %583 {offsets = [0, 0], sizes = [4, 96], strides = [1, 1]} : vector<4x128xf32> to vector<4x96xf32>
    %585 = arith.negf %584 : vector<4x96xf32>
    %586 = math.exp %585 : vector<4x96xf32>
    %cst_71 = arith.constant 1.000000e+00 : f32
    %587 = vector.broadcast %cst_71 : f32 to vector<4x96xf32>
    %588 = arith.addf %587, %586 : vector<4x96xf32>
    %589 = arith.divf %587, %588 : vector<4x96xf32>
    %590 = vector.extract_strided_slice %583 {offsets = [0, 96], sizes = [4, 32], strides = [1, 1]} : vector<4x128xf32> to vector<4x32xf32>
    %591 = math.tanh %590 : vector<4x32xf32>
    %592 = vector.extract_strided_slice %589 {offsets = [0, 32], sizes = [4, 32], strides = [1, 1]} : vector<4x96xf32> to vector<4x32xf32>
    %593 = arith.mulf %592, %574 : vector<4x32xf32>
    %594 = vector.extract_strided_slice %589 {offsets = [0, 0], sizes = [4, 32], strides = [1, 1]} : vector<4x96xf32> to vector<4x32xf32>
    %595 = arith.mulf %594, %591 : vector<4x32xf32>
    %596 = arith.addf %593, %595 : vector<4x32xf32>
    %597 = vector.extract_strided_slice %589 {offsets = [0, 64], sizes = [4, 32], strides = [1, 1]} : vector<4x96xf32> to vector<4x32xf32>
    %598 = math.tanh %596 : vector<4x32xf32>
    %599 = arith.mulf %597, %598 : vector<4x32xf32>
    %600 = tpu.concatenate %599, %599 in 1 : vector<4x32xf32>, vector<4x32xf32> -> vector<4x64xf32>
    %601 = arith.mulf %600, %10 : vector<4x64xf32>
    %c0_72 = arith.constant 0 : index
    %c0_73 = arith.constant 0 : index
    %602 = vector.load %arg5[%c0_72, %c0_73] : memref<64x52xf32, #tpu.memory_space<vmem>>, vector<64x52xf32>
    %cst_74 = arith.constant dense<0.000000e+00> : vector<4x52xf32>
    %603 = tpu.matmul %601, %602, %cst_74 {dimension_numbers = #tpu.dot_dimension_numbers<[1], [0], [0], [1], [0, 0, 1, 1], [], []>} : vector<4x64xf32>, vector<64x52xf32>, vector<4x52xf32> -> vector<4x52xf32>
    %604 = vector.extract_strided_slice %603 {offsets = [0, 0], sizes = [2, 52], strides = [1, 1]} : vector<4x52xf32> to vector<2x52xf32>
    %605 = vector.extract_strided_slice %603 {offsets = [2, 0], sizes = [2, 52], strides = [1, 1]} : vector<4x52xf32> to vector<2x52xf32>
    %606 = arith.addf %604, %605 : vector<2x52xf32>
    %c0_75 = arith.constant 0 : index
    %c0_76 = arith.constant 0 : index
    %607 = vector.load %arg6[%c0_75, %c0_76] : memref<1x52xf32, #tpu.memory_space<vmem>>, vector<1x52xf32>
    %608 = vector.broadcast %607 : vector<1x52xf32> to vector<2x52xf32>
    %609 = arith.addf %606, %608 : vector<2x52xf32>
    %c0_77 = arith.constant 0 : index
    %c0_78 = arith.constant 0 : index
    %610 = vector.load %arg7[%c0_77, %c0_78] : memref<2x52xf32, #tpu.memory_space<vmem>>, vector<2x52xf32>
    tpu.vector_store %arg7[%c0_77, %c0_78], %609 {strides = array<i32>} : memref<2x52xf32, #tpu.memory_space<vmem>>, vector<2x52xf32>,
    return
  }
}

</mosaic_0001>

<llo_original>
// kernel: emg_lstm_forward.1
$region0: #{emg_lstm_forward.1}
  #allocation0 [shape = 'u32[]', space=smem, size = 0x4, offset = 0x4, fixed_abs, tag = 'smem constant byte address 0x4 - core index']
  #allocation1 [shape = 'u32[144,128]{1,0:T(1,128)}', space=vmem, size = 0x12000, scoped, tag = 'internal scratch']
  %s0 = inlined_call_operand.vmem [shape: f32[8,4,38], index: 0, kind: input, shape index: {}]
  %s1 = inlined_call_operand.vmem [shape: f32[38,128], index: 1, kind: input, shape index: {}]
  %s2 = inlined_call_operand.hbm [shape: f32[2,64,128], index: 2, kind: input, shape index: {}]
  %s3 = inlined_call_operand.vmem [shape: f32[3,64,128], index: 3, kind: input, shape index: {}]
  %s4 = inlined_call_operand.vmem [shape: f32[3,4,128], index: 4, kind: input, shape index: {}]
  %s5 = inlined_call_operand.vmem [shape: f32[64,52], index: 5, kind: input, shape index: {}]
  %s6 = inlined_call_operand.vmem [shape: f32[1,52], index: 6, kind: input, shape index: {}]
  %s7 = inlined_call_operand.hbm [shape: f32[2,52], index: 7, kind: output, shape index: {}]
  %s8 = sld [smem:[#allocation0]]
  $region42: #{emg_lstm_forward.1} parent=0
    _
  %s10 = ssub.s32 1, %s8
  %s11 = scalar_select 0, %s10, %s8
  $region1: #{emg_lstm_forward.1} parent=0
    #allocation2 [shape = 'u8[65536]{0}', space=vmem, size = 0x10000, scoped, tag = 'input window, operand 2, single buffered']
    #allocation3 [shape = 's32[1]{0}', space=sflag, size = 0x4, scoped, tag = 'scoped memory for emg_lstm_forward.1']
    #allocation4 [shape = 's32[1]{0}', space=sflag, size = 0x4, scoped, tag = 'scoped memory for emg_lstm_forward.1']
    #allocation5 [shape = 'u8[1024]{0}', space=vmem, size = 0x400, scoped, tag = 'output window, operand 0, single buffered']
    %12 = vsyncpa [#allocation3], 0
    %13 = vsyncpa [#allocation4], 0
    // Predicated region
    $region2: #{emg_lstm_forward.1} parent=1 // pred_check
      _
    $region3: #{emg_lstm_forward.1} parent=1 // pred_check_branch
      %15 = sbr.rel (0) target = $region5
    $region4: #{emg_lstm_forward.1} parent=1 // pred_region
      _
    $region5: #{emg_lstm_forward.1} parent=1 // pred_fallthru
      _
    // Predicated region
    $region6: #{emg_lstm_forward.1} parent=1 // pred_check
      _
    $region7: #{emg_lstm_forward.1} parent=1 // pred_check_branch
      %17 = sbr.rel (0) target = $region9
    $region8: #{emg_lstm_forward.1} parent=1 // pred_region
      _
    $region9: #{emg_lstm_forward.1} parent=1 // pred_fallthru
      _
    // Predicated region
    $region10: #{emg_lstm_forward.1} parent=1 // pred_check
      _
    $region11: #{emg_lstm_forward.1} parent=1 // pred_check_branch
      %19 = sbr.rel (0) target = $region13
    $region12: #{emg_lstm_forward.1} parent=1 // pred_region
      %s21 = ssub.s32 2048, 2048
      %22 = vsyncadd [#allocation3], %s21
      %s23 = sshll.u32 [#allocation2], 4
      %s24 = int_to_ptr.vmem [resolvable:$true] %s23
      %29 = dma.hbm_to_vmem [thread:$0]  %s2, 2048, %s24, [#allocation3], 128, 128, 8
    $region13: #{emg_lstm_forward.1} parent=1 // pred_fallthru
      _
    // Predicated region
    $region14: #{emg_lstm_forward.1} parent=1 // pred_check
      _
    $region15: #{emg_lstm_forward.1} parent=1 // pred_check_branch
      %31 = sbr.rel (0) target = $region17
    $region16: #{emg_lstm_forward.1} parent=1 // pred_region
      _
    $region17: #{emg_lstm_forward.1} parent=1 // pred_fallthru
      _
    // Predicated region
    $region18: #{emg_lstm_forward.1} parent=1 // pred_check
      _
    $region19: #{emg_lstm_forward.1} parent=1 // pred_check_branch
      %33 = sbr.rel (0) target = $region21
    $region20: #{emg_lstm_forward.1} parent=1 // pred_region
      _
    $region21: #{emg_lstm_forward.1} parent=1 // pred_fallthru
      _
    // Predicated region
    $region22: #{emg_lstm_forward.1} parent=1 // pred_check
      _
    $region23: #{emg_lstm_forward.1} parent=1 // pred_check_branch
      %35 = sbr.rel (0) target = $region25
    $region24: #{emg_lstm_forward.1} parent=1 // pred_region
      _
    $region25: #{emg_lstm_forward.1} parent=1 // pred_fallthru
      _
    // Predicated region
    $region26: #{emg_lstm_forward.1} parent=1 // pred_check
      _
    $region27: #{emg_lstm_forward.1} parent=1 // pred_check_branch
      %37 = sbr.rel (0) target = $region29
    $region28: #{emg_lstm_forward.1} parent=1 // pred_region
      _
    $region29: #{emg_lstm_forward.1} parent=1 // pred_fallthru
      _
    // Predicated region
    $region30: #{emg_lstm_forward.1} parent=1 // pred_check
      _
    $region31: #{emg_lstm_forward.1} parent=1 // pred_check_branch
      %39 = sbr.rel (0) target = $region33
    $region32: #{emg_lstm_forward.1} parent=1 // pred_region
      %40 = dma.done [#allocation3], 2048
    $region33: #{emg_lstm_forward.1} parent=1 // pred_fallthru
      _
    %v41 = vlaneseq
    %v42 = vshrl.u32 %v41, 7
    %v43 = vlaneseq
    %v44 = vand.u32 %v43, 127
    %vm45 = vcmp.lt.s32.totalorder %v42, 2
    %vm46 = vcmp.lt.s32.totalorder %v44, 32
    %vm47 = vmxor %vm45, %vm46
    %vm48 = vmxor %vm47, 1
    %v49 = vsel %vm48, 1.0, 0.0
    %v50 = vld [vmem:[%s3] sm:$0xff]
    %v51 = vld [vmem:[%s3 + $0x8] sm:$0xff]
    %v52 = vld [vmem:[%s3 + $0x10] sm:$0xff]
    %v53 = vld [vmem:[%s3 + $0x18] sm:$0xff]
    %v54 = vld [vmem:[%s3 + $0x20] sm:$0xff]
    %v55 = vld [vmem:[%s3 + $0x28] sm:$0xff]
    %v56 = vld [vmem:[%s3 + $0x30] sm:$0xff]
    %v57 = vld [vmem:[%s3 + $0x38] sm:$0xff]
    %v58 = vld [vmem:[%s3 + $0x40] sm:$0xff]
    %v59 = vld [vmem:[%s3 + $0x48] sm:$0xff]
    %v60 = vld [vmem:[%s3 + $0x50] sm:$0xff]
    %v61 = vld [vmem:[%s3 + $0x58] sm:$0xff]
    %v62 = vld [vmem:[%s3 + $0x60] sm:$0xff]
    %v63 = vld [vmem:[%s3 + $0x68] sm:$0xff]
    %v64 = vld [vmem:[%s3 + $0x70] sm:$0xff]
    %v65 = vld [vmem:[%s3 + $0x78] sm:$0xff]
    %v66 = vld [vmem:[%s3 + $0x80] sm:$0xff]
    %v67 = vld [vmem:[%s3 + $0x88] sm:$0xff]
    %v68 = vld [vmem:[%s3 + $0x90] sm:$0xff]
    %v69 = vld [vmem:[%s3 + $0x98] sm:$0xff]
    %v70 = vld [vmem:[%s3 + $0xa0] sm:$0xff]
    %v71 = vld [vmem:[%s3 + $0xa8] sm:$0xff]
    %v72 = vld [vmem:[%s3 + $0xb0] sm:$0xff]
    %v73 = vld [vmem:[%s3 + $0xb8] sm:$0xff]
    %v74 = vld [vmem:[#allocation2] sm:$0xff]
    %v75 = vld [vmem:[#allocation2 + $0x8] sm:$0xff]
    %v76 = vld [vmem:[#allocation2 + $0x10] sm:$0xff]
    %v77 = vld [vmem:[#allocation2 + $0x18] sm:$0xff]
    %v78 = vld [vmem:[#allocation2 + $0x20] sm:$0xff]
    %v79 = vld [vmem:[#allocation2 + $0x28] sm:$0xff]
    %v80 = vld [vmem:[#allocation2 + $0x30] sm:$0xff]
    %v81 = vld [vmem:[#allocation2 + $0x38] sm:$0xff]
    %v82 = vld [vmem:[#allocation2 + $0x40] sm:$0xff]
    %v83 = vld [vmem:[#allocation2 + $0x48] sm:$0xff]
    %v84 = vld [vmem:[#allocation2 + $0x50] sm:$0xff]
    %v85 = vld [vmem:[#allocation2 + $0x58] sm:$0xff]
    %v86 = vld [vmem:[#allocation2 + $0x60] sm:$0xff]
    %v87 = vld [vmem:[#allocation2 + $0x68] sm:$0xff]
    %v88 = vld [vmem:[#allocation2 + $0x70] sm:$0xff]
    %v89 = vld [vmem:[#allocation2 + $0x78] sm:$0xff]
    %v90 = vld [vmem:[%s4] sm:$0xf]
    %v91 = vld [vmem:[%s4 + $0x4] sm:$0xf]
    %v92 = vld [vmem:[%s4 + $0x8] sm:$0xf]
    %v93 = vld [vmem:[%s0] sm:$0xf]
    %v94 = vld [vmem:[%s0 + $0x4] sm:$0xf]
    %v95 = vld [vmem:[%s0 + $0x8] sm:$0xf]
    %v96 = vld [vmem:[%s0 + $0xc] sm:$0xf]
    %v97 = vld [vmem:[%s0 + $0x10] sm:$0xf]
    %v98 = vld [vmem:[%s0 + $0x14] sm:$0xf]
    %v99 = vld [vmem:[%s0 + $0x18] sm:$0xf]
    %v100 = vld [vmem:[%s0 + $0x1c] sm:$0xf]
    %v101 = vld [vmem:[%s1] sm:$0xff]
    %v102 = vld [vmem:[%s1 + $0x8] sm:$0xff]
    %v103 = vld [vmem:[%s1 + $0x10] sm:$0xff]
    %v104 = vld [vmem:[%s1 + $0x18] sm:$0xff]
    %v105 = vld [vmem:[%s1 + $0x20] sm:$0x3f]
    %v114 = vcombine.low %v93, %v94
    %v115 = vcombine.low %v95, %v96
    %v116 = vcombine.low %v97, %v98
    %v117 = vcombine.low %v99, %v100
    %vm118 = vcmask 310272
    %v119 = vsel %vm118, %v114, 0
    %v121 = vsel %vm118, %v115, 0
    %v123 = vsel %vm118, %v116, 0
    %v125 = vsel %vm118, %v117, 0
    %vm127 = vcmask 1045504
    %v129 = vsel %vm127, %v105, 0
    %131 = vmatprep.subr.mxu0 0.0
    %132 = vmatpush1.msra.mxu0 %v101
    %133 = vmatprep.subr.mxu0 0.0
    %134 = vmatpush1.msra.mxu0 %v102
    %135 = vmatprep.subr.mxu0 0.0
    %136 = vmatpush1.msra.mxu0 %v103
    %137 = vmatprep.subr.mxu0 0.0
    %138 = vmatpush1.msra.mxu0 %v104
    %139 = vmatprep.subr.mxu0 0.0
    %140 = vmatpush1.msra.mxu0 %v129
    %141 = vmatprep.subr.mxu0 0.0
    %142 = vmatpush1.msra.mxu0 0.0
    %143 = vmatprep.subr.mxu0 0.0
    %144 = vmatpush1.msra.mxu0 0.0
    %145 = vmatprep.subr.mxu0 0.0
    %146 = vmatpush1.msra.mxu0 0.0
    %147 = vmatprep.subr.mxu0 0.0
    %148 = vmatpush1.msra.mxu0 0.0
    %149 = vmatprep.subr.mxu0 0.0
    %150 = vmatpush1.msra.mxu0 0.0
    %151 = vmatprep.subr.mxu0 0.0
    %152 = vmatpush1.msra.mxu0 0.0
    %153 = vmatprep.subr.mxu0 0.0
    %154 = vmatpush1.msra.mxu0 0.0
    %155 = vmatprep.subr.mxu0 0.0
    %156 = vmatpush1.msra.mxu0 0.0
    %157 = vmatprep.subr.mxu0 0.0
    %158 = vmatpush1.msra.mxu0 0.0
    %159 = vmatprep.subr.mxu0 0.0
    %160 = vmatpush1.msra.mxu0 0.0
    %161 = vmatprep.subr.mxu0 0.0
    %162 = vmatpush1.msra.mxu0 0.0
    %163 = vmatprep.subr.mxu0 0.0
    %164 = vmatpush1.msra.mxu0 0.0
    %165 = vmatprep.subr.mxu0 0.0
    %166 = vmatpush1.msra.mxu0 0.0
    %167 = vmatprep.subr.mxu0 0.0
    %168 = vmatpush1.msra.mxu0 0.0
    %169 = vmatprep.subr.mxu0 0.0
    %170 = vmatpush1.msra.mxu0 0.0
    %171 = vmatprep.subr.mxu0 0.0
    %172 = vmatpush1.msra.mxu0 0.0
    %173 = vmatprep.subr.mxu0 0.0
    %174 = vmatpush1.msra.mxu0 0.0
    %175 = vmatprep.subr.mxu0 0.0
    %176 = vmatpush1.msra.mxu0 0.0
    %177 = vmatprep.subr.mxu0 0.0
    %178 = vmatpush1.msra.mxu0 0.0
    %179 = vmatprep.subr.mxu0 0.0
    %180 = vmatpush1.msra.mxu0 0.0
    %181 = vmatprep.subr.mxu0 0.0
    %182 = vmatpush1.msra.mxu0 0.0
    %183 = vmatprep.subr.mxu0 0.0
    %184 = vmatpush1.msra.mxu0 0.0
    %185 = vmatprep.subr.mxu0 0.0
    %186 = vmatpush1.msra.mxu0 0.0
    %187 = vmatprep.subr.mxu0 0.0
    %188 = vmatpush1.msra.mxu0 0.0
    %189 = vmatprep.subr.mxu0 0.0
    %190 = vmatpush1.msra.mxu0 0.0
    %191 = vmatprep.subr.mxu0 0.0
    %192 = vmatpush1.msra.mxu0 0.0
    %193 = vmatprep.subr.mxu0 0.0
    %194 = vmatpush1.msra.mxu0 0.0
    %195 = vmatprep.mubr.f32.mxu0 0.0
    %196 = vmatmul.mubr.f32.gmra.mrb[0].mxu0 %v119
    %v197 = vpop.f32.mrb[0].mxu0
    %v198 = vadd.f32 0.0, %v197
    %v199 = vpop.f32.mrb[0].mxu0
    %200 = vmatprep.mubr.f32.mxu0 0.0
    %201 = vmatmul.mubr.f32.gmra.mrb[0].mxu0 %v121
    %v202 = vpop.f32.mrb[0].mxu0
    %v203 = vadd.f32 0.0, %v202
    %v204 = vpop.f32.mrb[0].mxu0
    %205 = vmatprep.mubr.f32.mxu0 0.0
    %206 = vmatmul.mubr.f32.gmra.mrb[0].mxu0 %v123
    %v207 = vpop.f32.mrb[0].mxu0
    %v208 = vadd.f32 0.0, %v207
    %v209 = vpop.f32.mrb[0].mxu0
    %210 = vmatprep.mubr.f32.mxu0 0.0
    %211 = vmatmul.mubr.f32.gmra.mrb[0].mxu0 %v125
    %v212 = vpop.f32.mrb[0].mxu0
    %v213 = vadd.f32 0.0, %v212
    %v214 = vpop.f32.mrb[0].mxu0
    %215 = vdwg.mxu0
    %v220 = vcombine.high %v198, %v198
    %v221 = vcombine.high %v203, %v203
    %v222 = vcombine.high %v208, %v208
    %v223 = vcombine.high %v213, %v213
    %v228 = vadd.f32 %v198, %v90
    %v229 = vadd.f32 %v220, %v90
    %v230 = vadd.f32 %v203, %v90
    %v231 = vadd.f32 %v221, %v90
    %v232 = vadd.f32 %v208, %v90
    %v233 = vadd.f32 %v222, %v90
    %v234 = vadd.f32 %v213, %v90
    %v235 = vadd.f32 %v223, %v90
    %vm236 = vcmask 523264
    %v238 = vsel %vm236, 0.0, 0
    %240 = vmatprep.subr.mxu0 0.0
    %241 = vmatpush1.msra.mxu0 %v50
    %242 = vmatprep.subr.mxu0 0.0
    %243 = vmatpush1.msra.mxu0 %v51
    %244 = vmatprep.subr.mxu0 0.0
    %245 = vmatpush1.msra.mxu0 %v52
    %246 = vmatprep.subr.mxu0 0.0
    %247 = vmatpush1.msra.mxu0 %v53
    %248 = vmatprep.subr.mxu0 0.0
    %249 = vmatpush1.msra.mxu0 %v54
    %250 = vmatprep.subr.mxu0 0.0
    %251 = vmatpush1.msra.mxu0 %v55
    %252 = vmatprep.subr.mxu0 0.0
    %253 = vmatpush1.msra.mxu0 %v56
    %254 = vmatprep.subr.mxu0 0.0
    %255 = vmatpush1.msra.mxu0 %v57
    %256 = vmatprep.subr.mxu0 0.0
    %257 = vmatpush1.msra.mxu0 0.0
    %258 = vmatprep.subr.mxu0 0.0
    %259 = vmatpush1.msra.mxu0 0.0
    %260 = vmatprep.subr.mxu0 0.0
    %261 = vmatpush1.msra.mxu0 0.0
    %262 = vmatprep.subr.mxu0 0.0
    %263 = vmatpush1.msra.mxu0 0.0
    %264 = vmatprep.subr.mxu0 0.0
    %265 = vmatpush1.msra.mxu0 0.0
    %266 = vmatprep.subr.mxu0 0.0
    %267 = vmatpush1.msra.mxu0 0.0
    %268 = vmatprep.subr.mxu0 0.0
    %269 = vmatpush1.msra.mxu0 0.0
    %270 = vmatprep.subr.mxu0 0.0
    %271 = vmatpush1.msra.mxu0 0.0
    %272 = vmatprep.subr.mxu0 0.0
    %273 = vmatpush1.msra.mxu0 0.0
    %274 = vmatprep.subr.mxu0 0.0
    %275 = vmatpush1.msra.mxu0 0.0
    %276 = vmatprep.subr.mxu0 0.0
    %277 = vmatpush1.msra.mxu0 0.0
    %278 = vmatprep.subr.mxu0 0.0
    %279 = vmatpush1.msra.mxu0 0.0
    %280 = vmatprep.subr.mxu0 0.0
    %281 = vmatpush1.msra.mxu0 0.0
    %282 = vmatprep.subr.mxu0 0.0
    %283 = vmatpush1.msra.mxu0 0.0
    %284 = vmatprep.subr.mxu0 0.0
    %285 = vmatpush1.msra.mxu0 0.0
    %286 = vmatprep.subr.mxu0 0.0
    %287 = vmatpush1.msra.mxu0 0.0
    %288 = vmatprep.subr.mxu0 0.0
    %289 = vmatpush1.msra.mxu0 0.0
    %290 = vmatprep.subr.mxu0 0.0
    %291 = vmatpush1.msra.mxu0 0.0
    %292 = vmatprep.subr.mxu0 0.0
    %293 = vmatpush1.msra.mxu0 0.0
    %294 = vmatprep.subr.mxu0 0.0
    %295 = vmatpush1.msra.mxu0 0.0
    %296 = vmatprep.subr.mxu0 0.0
    %297 = vmatpush1.msra.mxu0 0.0
    %298 = vmatprep.subr.mxu0 0.0
    %299 = vmatpush1.msra.mxu0 0.0
    %300 = vmatprep.subr.mxu0 0.0
    %301 = vmatpush1.msra.mxu0 0.0
    %302 = vmatprep.subr.mxu0 0.0
    %303 = vmatpush1.msra.mxu0 0.0
    %304 = vmatprep.mubr.f32.mxu0 0.0
    %305 = vmatmul.mubr.f32.gmra.mrb[0].mxu0 %v238
    %v306 = vpop.f32.mrb[0].mxu0
    %v307 = vadd.f32 0.0, %v306
    %v308 = vpop.f32.mrb[0].mxu0
    %309 = vdwg.mxu0
    %v310 = vadd.f32 %v228, %v307
    %v311 = vxor.u32 %v310, 2147483648
    %v312 = vmul.f32 %v311, 1.442695
    %v313 = vpow.pop %v312
    %v314 = vadd.f32 %v313, 1.0
    %v315 = vrcp.pop %v314
    %v316 = vmul.f32 1.0, %v315
    %v317 = vtanh.pop %v310
    %v318 = vmul.f32 %v316, 0.0
    %320 = vrot.lane.b32.xlu0 %v317, 32
    %v321 = vpop.permute.xlu0 %320
    %v323 = vmul.f32 %v316, %v321
    %325 = vrot.lane.b32.xlu0 %v323, 32
    %v326 = vpop.permute.xlu0 %325
    %v328 = vadd.f32 %v318, %v326
    %v329 = vtanh.pop %v328
    %331 = vrot.lane.b32.xlu0 %v329, 32
    %v332 = vpop.permute.xlu0 %331
    %v334 = vmul.f32 %v316, %v332
    %336 = vrot.lane.b32.xlu0 %v334, 64
    %v337 = vpop.permute.xlu0 %336
    %339 = vrot.lane.b32.xlu0 %v334, 96
    %v340 = vpop.permute.xlu0 %339
    %vm342 = vcmask 261120
    %v343 = vsel %vm342, %v337, %v340
    %v344 = vmul.f32 %v343, %v49
    %v346 = vsel %vm236, %v344, 0
    %348 = vmatprep.subr.mxu0 0.0
    %349 = vmatpush1.msra.mxu0 %v50
    %350 = vmatprep.subr.mxu0 0.0
    %351 = vmatpush1.msra.mxu0 %v51
    %352 = vmatprep.subr.mxu0 0.0
    %353 = vmatpush1.msra.mxu0 %v52
    %354 = vmatprep.subr.mxu0 0.0
    %355 = vmatpush1.msra.mxu0 %v53
    %356 = vmatprep.subr.mxu0 0.0
    %357 = vmatpush1.msra.mxu0 %v54
    %358 = vmatprep.subr.mxu0 0.0
    %359 = vmatpush1.msra.mxu0 %v55
    %360 = vmatprep.subr.mxu0 0.0
    %361 = vmatpush1.msra.mxu0 %v56
    %362 = vmatprep.subr.mxu0 0.0
    %363 = vmatpush1.msra.mxu0 %v57
    %364 = vmatprep.subr.mxu0 0.0
    %365 = vmatpush1.msra.mxu0 0.0
    %366 = vmatprep.subr.mxu0 0.0
    %367 = vmatpush1.msra.mxu0 0.0
    %368 = vmatprep.subr.mxu0 0.0
    %369 = vmatpush1.msra.mxu0 0.0
    %370 = vmatprep.subr.mxu0 0.0
    %371 = vmatpush1.msra.mxu0 0.0
    %372 = vmatprep.subr.mxu0 0.0
    %373 = vmatpush1.msra.mxu0 0.0
    %374 = vmatprep.subr.mxu0 0.0
    %375 = vmatpush1.msra.mxu0 0.0
    %376 = vmatprep.subr.mxu0 0.0
    %377 = vmatpush1.msra.mxu0 0.0
    %378 = vmatprep.subr.mxu0 0.0
    %379 = vmatpush1.msra.mxu0 0.0
    %380 = vmatprep.subr.mxu0 0.0
    %381 = vmatpush1.msra.mxu0 0.0
    %382 = vmatprep.subr.mxu0 0.0
    %383 = vmatpush1.msra.mxu0 0.0
    %384 = vmatprep.subr.mxu0 0.0
    %385 = vmatpush1.msra.mxu0 0.0
    %386 = vmatprep.subr.mxu0 0.0
    %387 = vmatpush1.msra.mxu0 0.0
    %388 = vmatprep.subr.mxu0 0.0
    %389 = vmatpush1.msra.mxu0 0.0
    %390 = vmatprep.subr.mxu0 0.0
    %391 = vmatpush1.msra.mxu0 0.0
    %392 = vmatprep.subr.mxu0 0.0
    %393 = vmatpush1.msra.mxu0 0.0
    %394 = vmatprep.subr.mxu0 0.0
    %395 = vmatpush1.msra.mxu0 0.0
    %396 = vmatprep.subr.mxu0 0.0
    %397 = vmatpush1.msra.mxu0 0.0
    %398 = vmatprep.subr.mxu0 0.0
    %399 = vmatpush1.msra.mxu0 0.0
    %400 = vmatprep.subr.mxu0 0.0
    %401 = vmatpush1.msra.mxu0 0.0
    %402 = vmatprep.subr.mxu0 0.0
    %403 = vmatpush1.msra.mxu0 0.0
    %404 = vmatprep.subr.mxu0 0.0
    %405 = vmatpush1.msra.mxu0 0.0
    %406 = vmatprep.subr.mxu0 0.0
    %407 = vmatpush1.msra.mxu0 0.0
    %408 = vmatprep.subr.mxu0 0.0
    %409 = vmatpush1.msra.mxu0 0.0
    %410 = vmatprep.subr.mxu0 0.0
    %411 = vmatpush1.msra.mxu0 0.0
    %412 = vmatprep.mubr.f32.mxu0 0.0
    %413 = vmatmul.mubr.f32.gmra.mrb[0].mxu0 %v346
    %v414 = vpop.f32.mrb[0].mxu0
    %v415 = vadd.f32 0.0, %v414
    %v416 = vpop.f32.mrb[0].mxu0
    %417 = vdwg.mxu0
    %v418 = vadd.f32 %v229, %v415
    %v419 = vxor.u32 %v418, 2147483648
    %v420 = vmul.f32 %v419, 1.442695
    %v421 = vpow.pop %v420
    %v422 = vadd.f32 %v421, 1.0
    %v423 = vrcp.pop %v422
    %v424 = vmul.f32 1.0, %v423
    %v425 = vtanh.pop %v418
    %v426 = vmul.f32 %v424, %v328
    %428 = vrot.lane.b32.xlu0 %v425, 32
    %v429 = vpop.permute.xlu0 %428
    %v431 = vmul.f32 %v424, %v429
    %433 = vrot.lane.b32.xlu0 %v431, 32
    %v434 = vpop.permute.xlu0 %433
    %v436 = vadd.f32 %v426, %v434
    %v437 = vtanh.pop %v436
    %439 = vrot.lane.b32.xlu0 %v437, 32
    %v440 = vpop.permute.xlu0 %439
    %v442 = vmul.f32 %v424, %v440
    %444 = vrot.lane.b32.xlu0 %v442, 64
    %v445 = vpop.permute.xlu0 %444
    %447 = vrot.lane.b32.xlu0 %v442, 96
    %v448 = vpop.permute.xlu0 %447
    %v450 = vsel %vm342, %v445, %v448
    %v451 = vmul.f32 %v450, %v49
    %v453 = vsel %vm236, %v451, 0
    %455 = vmatprep.subr.mxu0 0.0
    %456 = vmatpush1.msra.mxu0 %v50
    %457 = vmatprep.subr.mxu0 0.0
    %458 = vmatpush1.msra.mxu0 %v51
    %459 = vmatprep.subr.mxu0 0.0
    %460 = vmatpush1.msra.mxu0 %v52
    %461 = vmatprep.subr.mxu0 0.0
    %462 = vmatpush1.msra.mxu0 %v53
    %463 = vmatprep.subr.mxu0 0.0
    %464 = vmatpush1.msra.mxu0 %v54
    %465 = vmatprep.subr.mxu0 0.0
    %466 = vmatpush1.msra.mxu0 %v55
    %467 = vmatprep.subr.mxu0 0.0
    %468 = vmatpush1.msra.mxu0 %v56
    %469 = vmatprep.subr.mxu0 0.0
    %470 = vmatpush1.msra.mxu0 %v57
    %471 = vmatprep.subr.mxu0 0.0
    %472 = vmatpush1.msra.mxu0 0.0
    %473 = vmatprep.subr.mxu0 0.0
    %474 = vmatpush1.msra.mxu0 0.0
    %475 = vmatprep.subr.mxu0 0.0
    %476 = vmatpush1.msra.mxu0 0.0
    %477 = vmatprep.subr.mxu0 0.0
    %478 = vmatpush1.msra.mxu0 0.0
    %479 = vmatprep.subr.mxu0 0.0
    %480 = vmatpush1.msra.mxu0 0.0
    %481 = vmatprep.subr.mxu0 0.0
    %482 = vmatpush1.msra.mxu0 0.0
    %483 = vmatprep.subr.mxu0 0.0
    %484 = vmatpush1.msra.mxu0 0.0
    %485 = vmatprep.subr.mxu0 0.0
    %486 = vmatpush1.msra.mxu0 0.0
    %487 = vmatprep.subr.mxu0 0.0
    %488 = vmatpush1.msra.mxu0 0.0
    %489 = vmatprep.subr.mxu0 0.0
    %490 = vmatpush1.msra.mxu0 0.0
    %491 = vmatprep.subr.mxu0 0.0
    %492 = vmatpush1.msra.mxu0 0.0
    %493 = vmatprep.subr.mxu0 0.0
    %494 = vmatpush1.msra.mxu0 0.0
    %495 = vmatprep.subr.mxu0 0.0
    %496 = vmatpush1.msra.mxu0 0.0
    %497 = vmatprep.subr.mxu0 0.0
    %498 = vmatpush1.msra.mxu0 0.0
    %499 = vmatprep.subr.mxu0 0.0
    %500 = vmatpush1.msra.mxu0 0.0
    %501 = vmatprep.subr.mxu0 0.0
    %502 = vmatpush1.msra.mxu0 0.0
    %503 = vmatprep.subr.mxu0 0.0
    %504 = vmatpush1.msra.mxu0 0.0
    %505 = vmatprep.subr.mxu0 0.0
    %506 = vmatpush1.msra.mxu0 0.0
    %507 = vmatprep.subr.mxu0 0.0
    %508 = vmatpush1.msra.mxu0 0.0
    %509 = vmatprep.subr.mxu0 0.0
    %510 = vmatpush1.msra.mxu0 0.0
    %511 = vmatprep.subr.mxu0 0.0
    %512 = vmatpush1.msra.mxu0 0.0
    %513 = vmatprep.subr.mxu0 0.0
    %514 = vmatpush1.msra.mxu0 0.0
    %515 = vmatprep.subr.mxu0 0.0
    %516 = vmatpush1.msra.mxu0 0.0
    %517 = vmatprep.subr.mxu0 0.0
    %518 = vmatpush1.msra.mxu0 0.0
    %519 = vmatprep.mubr.f32.mxu0 0.0
    %520 = vmatmul.mubr.f32.gmra.mrb[0].mxu0 %v453
    %v521 = vpop.f32.mrb[0].mxu0
    %v522 = vadd.f32 0.0, %v521
    %v523 = vpop.f32.mrb[0].mxu0
    %524 = vdwg.mxu0
    %v525 = vadd.f32 %v230, %v522
    %v526 = vxor.u32 %v525, 2147483648
    %v527 = vmul.f32 %v526, 1.442695
    %v528 = vpow.pop %v527
    %v529 = vadd.f32 %v528, 1.0
    %v530 = vrcp.pop %v529
    %v531 = vmul.f32 1.0, %v530
    %v532 = vtanh.pop %v525
    %v533 = vmul.f32 %v531, %v436
    %535 = vrot.lane.b32.xlu0 %v532, 32
    %v536 = vpop.permute.xlu0 %535
    %v538 = vmul.f32 %v531, %v536
    %540 = vrot.lane.b32.xlu0 %v538, 32
    %v541 = vpop.permute.xlu0 %540
    %v543 = vadd.f32 %v533, %v541
    %v544 = vtanh.pop %v543
    %546 = vrot.lane.b32.xlu0 %v544, 32
    %v547 = vpop.permute.xlu0 %546
    %v549 = vmul.f32 %v531, %v547
    %551 = vrot.lane.b32.xlu0 %v549, 64
    %v552 = vpop.permute.xlu0 %551
    %554 = vrot.lane.b32.xlu0 %v549, 96
    %v555 = vpop.permute.xlu0 %554
    %v557 = vsel %vm342, %v552, %v555
    %v558 = vmul.f32 %v557, %v49
    %v560 = vsel %vm236, %v558, 0
    %562 = vmatprep.subr.mxu0 0.0
    %563 = vmatpush1.msra.mxu0 %v50
    %564 = vmatprep.subr.mxu0 0.0
    %565 = vmatpush1.msra.mxu0 %v51
    %566 = vmatprep.subr.mxu0 0.0
    %567 = vmatpush1.msra.mxu0 %v52
    %568 = vmatprep.subr.mxu0 0.0
    %569 = vmatpush1.msra.mxu0 %v53
    %570 = vmatprep.subr.mxu0 0.0
    %571 = vmatpush1.msra.mxu0 %v54
    %572 = vmatprep.subr.mxu0 0.0
    %573 = vmatpush1.msra.mxu0 %v55
    %574 = vmatprep.subr.mxu0 0.0
    %575 = vmatpush1.msra.mxu0 %v56
    %576 = vmatprep.subr.mxu0 0.0
    %577 = vmatpush1.msra.mxu0 %v57
    %578 = vmatprep.subr.mxu0 0.0
    %579 = vmatpush1.msra.mxu0 0.0
    %580 = vmatprep.subr.mxu0 0.0
    %581 = vmatpush1.msra.mxu0 0.0
    %582 = vmatprep.subr.mxu0 0.0
    %583 = vmatpush1.msra.mxu0 0.0
    %584 = vmatprep.subr.mxu0 0.0
    %585 = vmatpush1.msra.mxu0 0.0
    %586 = vmatprep.subr.mxu0 0.0
    %587 = vmatpush1.msra.mxu0 0.0
    %588 = vmatprep.subr.mxu0 0.0
    %589 = vmatpush1.msra.mxu0 0.0
    %590 = vmatprep.subr.mxu0 0.0
    %591 = vmatpush1.msra.mxu0 0.0
    %592 = vmatprep.subr.mxu0 0.0
    %593 = vmatpush1.msra.mxu0 0.0
    %594 = vmatprep.subr.mxu0 0.0
    %595 = vmatpush1.msra.mxu0 0.0
    %596 = vmatprep.subr.mxu0 0.0
    %597 = vmatpush1.msra.mxu0 0.0
    %598 = vmatprep.subr.mxu0 0.0
    %599 = vmatpush1.msra.mxu0 0.0
    %600 = vmatprep.subr.mxu0 0.0
    %601 = vmatpush1.msra.mxu0 0.0
    %602 = vmatprep.subr.mxu0 0.0
    %603 = vmatpush1.msra.mxu0 0.0
    %604 = vmatprep.subr.mxu0 0.0
    %605 = vmatpush1.msra.mxu0 0.0
    %606 = vmatprep.subr.mxu0 0.0
    %607 = vmatpush1.msra.mxu0 0.0
    %608 = vmatprep.subr.mxu0 0.0
    %609 = vmatpush1.msra.mxu0 0.0
    %610 = vmatprep.subr.mxu0 0.0
    %611 = vmatpush1.msra.mxu0 0.0
    %612 = vmatprep.subr.mxu0 0.0
    %613 = vmatpush1.msra.mxu0 0.0
    %614 = vmatprep.subr.mxu0 0.0
    %615 = vmatpush1.msra.mxu0 0.0
    %616 = vmatprep.subr.mxu0 0.0
    %617 = vmatpush1.msra.mxu0 0.0
    %618 = vmatprep.subr.mxu0 0.0
    %619 = vmatpush1.msra.mxu0 0.0
    %620 = vmatprep.subr.mxu0 0.0
    %621 = vmatpush1.msra.mxu0 0.0
    %622 = vmatprep.subr.mxu0 0.0
    %623 = vmatpush1.msra.mxu0 0.0
    %624 = vmatprep.subr.mxu0 0.0
    %625 = vmatpush1.msra.mxu0 0.0
    %626 = vmatprep.mubr.f32.mxu0 0.0
    %627 = vmatmul.mubr.f32.gmra.mrb[0].mxu0 %v560
    %v628 = vpop.f32.mrb[0].mxu0
    %v629 = vadd.f32 0.0, %v628
    %v630 = vpop.f32.mrb[0].mxu0
    %631 = vdwg.mxu0
    %v632 = vadd.f32 %v231, %v629
    %v633 = vxor.u32 %v632, 2147483648
    %v634 = vmul.f32 %v633, 1.442695
    %v635 = vpow.pop %v634
    %v636 = vadd.f32 %v635, 1.0
    %v637 = vrcp.pop %v636
    %v638 = vmul.f32 1.0, %v637
    %v639 = vtanh.pop %v632
    %v640 = vmul.f32 %v638, %v543
    %642 = vrot.lane.b32.xlu0 %v639, 32
    %v643 = vpop.permute.xlu0 %642
    %v645 = vmul.f32 %v638, %v643
    %647 = vrot.lane.b32.xlu0 %v645, 32
    %v648 = vpop.permute.xlu0 %647
    %v650 = vadd.f32 %v640, %v648
    %v651 = vtanh.pop %v650
    %653 = vrot.lane.b32.xlu0 %v651, 32
    %v654 = vpop.permute.xlu0 %653
    %v656 = vmul.f32 %v638, %v654
    %658 = vrot.lane.b32.xlu0 %v656, 64
    %v659 = vpop.permute.xlu0 %658
    %661 = vrot.lane.b32.xlu0 %v656, 96
    %v662 = vpop.permute.xlu0 %661
    %v664 = vsel %vm342, %v659, %v662
    %v665 = vmul.f32 %v664, %v49
    %v667 = vsel %vm236, %v665, 0
    %669 = vmatprep.subr.mxu0 0.0
    %670 = vmatpush1.msra.mxu0 %v50
    %671 = vmatprep.subr.mxu0 0.0
    %672 = vmatpush1.msra.mxu0 %v51
    %673 = vmatprep.subr.mxu0 0.0
    %674 = vmatpush1.msra.mxu0 %v52
    %675 = vmatprep.subr.mxu0 0.0
    %676 = vmatpush1.msra.mxu0 %v53
    %677 = vmatprep.subr.mxu0 0.0
    %678 = vmatpush1.msra.mxu0 %v54
    %679 = vmatprep.subr.mxu0 0.0
    %680 = vmatpush1.msra.mxu0 %v55
    %681 = vmatprep.subr.mxu0 0.0
    %682 = vmatpush1.msra.mxu0 %v56
    %683 = vmatprep.subr.mxu0 0.0
    %684 = vmatpush1.msra.mxu0 %v57
    %685 = vmatprep.subr.mxu0 0.0
    %686 = vmatpush1.msra.mxu0 0.0
    %687 = vmatprep.subr.mxu0 0.0
    %688 = vmatpush1.msra.mxu0 0.0
    %689 = vmatprep.subr.mxu0 0.0
    %690 = vmatpush1.msra.mxu0 0.0
    %691 = vmatprep.subr.mxu0 0.0
    %692 = vmatpush1.msra.mxu0 0.0
    %693 = vmatprep.subr.mxu0 0.0
    %694 = vmatpush1.msra.mxu0 0.0
    %695 = vmatprep.subr.mxu0 0.0
    %696 = vmatpush1.msra.mxu0 0.0
    %697 = vmatprep.subr.mxu0 0.0
    %698 = vmatpush1.msra.mxu0 0.0
    %699 = vmatprep.subr.mxu0 0.0
    %700 = vmatpush1.msra.mxu0 0.0
    %701 = vmatprep.subr.mxu0 0.0
    %702 = vmatpush1.msra.mxu0 0.0
    %703 = vmatprep.subr.mxu0 0.0
    %704 = vmatpush1.msra.mxu0 0.0
    %705 = vmatprep.subr.mxu0 0.0
    %706 = vmatpush1.msra.mxu0 0.0
    %707 = vmatprep.subr.mxu0 0.0
    %708 = vmatpush1.msra.mxu0 0.0
    %709 = vmatprep.subr.mxu0 0.0
    %710 = vmatpush1.msra.mxu0 0.0
    %711 = vmatprep.subr.mxu0 0.0
    %712 = vmatpush1.msra.mxu0 0.0
    %713 = vmatprep.subr.mxu0 0.0
    %714 = vmatpush1.msra.mxu0 0.0
    %715 = vmatprep.subr.mxu0 0.0
    %716 = vmatpush1.msra.mxu0 0.0
    %717 = vmatprep.subr.mxu0 0.0
    %718 = vmatpush1.msra.mxu0 0.0
    %719 = vmatprep.subr.mxu0 0.0
    %720 = vmatpush1.msra.mxu0 0.0
    %721 = vmatprep.subr.mxu0 0.0
    %722 = vmatpush1.msra.mxu0 0.0
    %723 = vmatprep.subr.mxu0 0.0
    %724 = vmatpush1.msra.mxu0 0.0
    %725 = vmatprep.subr.mxu0 0.0
    %726 = vmatpush1.msra.mxu0 0.0
    %727 = vmatprep.subr.mxu0 0.0
    %728 = vmatpush1.msra.mxu0 0.0
    %729 = vmatprep.subr.mxu0 0.0
    %730 = vmatpush1.msra.mxu0 0.0
    %731 = vmatprep.subr.mxu0 0.0
    %732 = vmatpush1.msra.mxu0 0.0
    %733 = vmatprep.mubr.f32.mxu0 0.0
    %734 = vmatmul.mubr.f32.gmra.mrb[0].mxu0 %v667
    %v735 = vpop.f32.mrb[0].mxu0
    %v736 = vadd.f32 0.0, %v735
    %v737 = vpop.f32.mrb[0].mxu0
    %738 = vdwg.mxu0
    %v739 = vadd.f32 %v232, %v736
    %v740 = vxor.u32 %v739, 2147483648
    %v741 = vmul.f32 %v740, 1.442695
    %v742 = vpow.pop %v741
    %v743 = vadd.f32 %v742, 1.0
    %v744 = vrcp.pop %v743
    %v745 = vmul.f32 1.0, %v744
    %v746 = vtanh.pop %v739
    %v747 = vmul.f32 %v745, %v650
    %749 = vrot.lane.b32.xlu0 %v746, 32
    %v750 = vpop.permute.xlu0 %749
    %v752 = vmul.f32 %v745, %v750
    %754 = vrot.lane.b32.xlu0 %v752, 32
    %v755 = vpop.permute.xlu0 %754
    %v757 = vadd.f32 %v747, %v755
    %v758 = vtanh.pop %v757
    %760 = vrot.lane.b32.xlu0 %v758, 32
    %v761 = vpop.permute.xlu0 %760
    %v763 = vmul.f32 %v745, %v761
    %765 = vrot.lane.b32.xlu0 %v763, 64
    %v766 = vpop.permute.xlu0 %765
    %768 = vrot.lane.b32.xlu0 %v763, 96
    %v769 = vpop.permute.xlu0 %768
    %v771 = vsel %vm342, %v766, %v769
    %v772 = vmul.f32 %v771, %v49
    %v774 = vsel %vm236, %v772, 0
    %776 = vmatprep.subr.mxu0 0.0
    %777 = vmatpush1.msra.mxu0 %v50
    %778 = vmatprep.subr.mxu0 0.0
    %779 = vmatpush1.msra.mxu0 %v51
    %780 = vmatprep.subr.mxu0 0.0
    %781 = vmatpush1.msra.mxu0 %v52
    %782 = vmatprep.subr.mxu0 0.0
    %783 = vmatpush1.msra.mxu0 %v53
    %784 = vmatprep.subr.mxu0 0.0
    %785 = vmatpush1.msra.mxu0 %v54
    %786 = vmatprep.subr.mxu0 0.0
    %787 = vmatpush1.msra.mxu0 %v55
    %788 = vmatprep.subr.mxu0 0.0
    %789 = vmatpush1.msra.mxu0 %v56
    %790 = vmatprep.subr.mxu0 0.0
    %791 = vmatpush1.msra.mxu0 %v57
    %792 = vmatprep.subr.mxu0 0.0
    %793 = vmatpush1.msra.mxu0 0.0
    %794 = vmatprep.subr.mxu0 0.0
    %795 = vmatpush1.msra.mxu0 0.0
    %796 = vmatprep.subr.mxu0 0.0
    %797 = vmatpush1.msra.mxu0 0.0
    %798 = vmatprep.subr.mxu0 0.0
    %799 = vmatpush1.msra.mxu0 0.0
    %800 = vmatprep.subr.mxu0 0.0
    %801 = vmatpush1.msra.mxu0 0.0
    %802 = vmatprep.subr.mxu0 0.0
    %803 = vmatpush1.msra.mxu0 0.0
    %804 = vmatprep.subr.mxu0 0.0
    %805 = vmatpush1.msra.mxu0 0.0
    %806 = vmatprep.subr.mxu0 0.0
    %807 = vmatpush1.msra.mxu0 0.0
    %808 = vmatprep.subr.mxu0 0.0
    %809 = vmatpush1.msra.mxu0 0.0
    %810 = vmatprep.subr.mxu0 0.0
    %811 = vmatpush1.msra.mxu0 0.0
    %812 = vmatprep.subr.mxu0 0.0
    %813 = vmatpush1.msra.mxu0 0.0
    %814 = vmatprep.subr.mxu0 0.0
    %815 = vmatpush1.msra.mxu0 0.0
    %816 = vmatprep.subr.mxu0 0.0
    %817 = vmatpush1.msra.mxu0 0.0
    %818 = vmatprep.subr.mxu0 0.0
    %819 = vmatpush1.msra.mxu0 0.0
    %820 = vmatprep.subr.mxu0 0.0
    %821 = vmatpush1.msra.mxu0 0.0
    %822 = vmatprep.subr.mxu0 0.0
    %823 = vmatpush1.msra.mxu0 0.0
    %824 = vmatprep.subr.mxu0 0.0
    %825 = vmatpush1.msra.mxu0 0.0
    %826 = vmatprep.subr.mxu0 0.0
    %827 = vmatpush1.msra.mxu0 0.0
    %828 = vmatprep.subr.mxu0 0.0
    %829 = vmatpush1.msra.mxu0 0.0
    %830 = vmatprep.subr.mxu0 0.0
    %831 = vmatpush1.msra.mxu0 0.0
    %832 = vmatprep.subr.mxu0 0.0
    %833 = vmatpush1.msra.mxu0 0.0
    %834 = vmatprep.subr.mxu0 0.0
    %835 = vmatpush1.msra.mxu0 0.0
    %836 = vmatprep.subr.mxu0 0.0
    %837 = vmatpush1.msra.mxu0 0.0
    %838 = vmatprep.subr.mxu0 0.0
    %839 = vmatpush1.msra.mxu0 0.0
    %840 = vmatprep.mubr.f32.mxu0 0.0
    %841 = vmatmul.mubr.f32.gmra.mrb[0].mxu0 %v774
    %v842 = vpop.f32.mrb[0].mxu0
    %v843 = vadd.f32 0.0, %v842
    %v844 = vpop.f32.mrb[0].mxu0
    %845 = vdwg.mxu0
    %v846 = vadd.f32 %v233, %v843
    %v847 = vxor.u32 %v846, 2147483648
    %v848 = vmul.f32 %v847, 1.442695
    %v849 = vpow.pop %v848
    %v850 = vadd.f32 %v849, 1.0
    %v851 = vrcp.pop %v850
    %v852 = vmul.f32 1.0, %v851
    %v853 = vtanh.pop %v846
    %v854 = vmul.f32 %v852, %v757
    %856 = vrot.lane.b32.xlu0 %v853, 32
    %v857 = vpop.permute.xlu0 %856
    %v859 = vmul.f32 %v852, %v857
    %861 = vrot.lane.b32.xlu0 %v859, 32
    %v862 = vpop.permute.xlu0 %861
    %v864 = vadd.f32 %v854, %v862
    %v865 = vtanh.pop %v864
    %867 = vrot.lane.b32.xlu0 %v865, 32
    %v868 = vpop.permute.xlu0 %867
    %v870 = vmul.f32 %v852, %v868
    %872 = vrot.lane.b32.xlu0 %v870, 64
    %v873 = vpop.permute.xlu0 %872
    %875 = vrot.lane.b32.xlu0 %v870, 96
    %v876 = vpop.permute.xlu0 %875
    %v878 = vsel %vm342, %v873, %v876
    %v879 = vmul.f32 %v878, %v49
    %v881 = vsel %vm236, %v879, 0
    %883 = vmatprep.subr.mxu0 0.0
    %884 = vmatpush1.msra.mxu0 %v50
    %885 = vmatprep.subr.mxu0 0.0
    %886 = vmatpush1.msra.mxu0 %v51
    %887 = vmatprep.subr.mxu0 0.0
    %888 = vmatpush1.msra.mxu0 %v52
    %889 = vmatprep.subr.mxu0 0.0
    %890 = vmatpush1.msra.mxu0 %v53
    %891 = vmatprep.subr.mxu0 0.0
    %892 = vmatpush1.msra.mxu0 %v54
    %893 = vmatprep.subr.mxu0 0.0
    %894 = vmatpush1.msra.mxu0 %v55
    %895 = vmatprep.subr.mxu0 0.0
    %896 = vmatpush1.msra.mxu0 %v56
    %897 = vmatprep.subr.mxu0 0.0
    %898 = vmatpush1.msra.mxu0 %v57
    %899 = vmatprep.subr.mxu0 0.0
    %900 = vmatpush1.msra.mxu0 0.0
    %901 = vmatprep.subr.mxu0 0.0
    %902 = vmatpush1.msra.mxu0 0.0
    %903 = vmatprep.subr.mxu0 0.0
    %904 = vmatpush1.msra.mxu0 0.0
    %905 = vmatprep.subr.mxu0 0.0
    %906 = vmatpush1.msra.mxu0 0.0
    %907 = vmatprep.subr.mxu0 0.0
    %908 = vmatpush1.msra.mxu0 0.0
    %909 = vmatprep.subr.mxu0 0.0
    %910 = vmatpush1.msra.mxu0 0.0
    %911 = vmatprep.subr.mxu0 0.0
    %912 = vmatpush1.msra.mxu0 0.0
    %913 = vmatprep.subr.mxu0 0.0
    %914 = vmatpush1.msra.mxu0 0.0
    %915 = vmatprep.subr.mxu0 0.0
    %916 = vmatpush1.msra.mxu0 0.0
    %917 = vmatprep.subr.mxu0 0.0
    %918 = vmatpush1.msra.mxu0 0.0
    %919 = vmatprep.subr.mxu0 0.0
    %920 = vmatpush1.msra.mxu0 0.0
    %921 = vmatprep.subr.mxu0 0.0
    %922 = vmatpush1.msra.mxu0 0.0
    %923 = vmatprep.subr.mxu0 0.0
    %924 = vmatpush1.msra.mxu0 0.0
    %925 = vmatprep.subr.mxu0 0.0
    %926 = vmatpush1.msra.mxu0 0.0
    %927 = vmatprep.subr.mxu0 0.0
    %928 = vmatpush1.msra.mxu0 0.0
    %929 = vmatprep.subr.mxu0 0.0
    %930 = vmatpush1.msra.mxu0 0.0
    %931 = vmatprep.subr.mxu0 0.0
    %932 = vmatpush1.msra.mxu0 0.0
    %933 = vmatprep.subr.mxu0 0.0
    %934 = vmatpush1.msra.mxu0 0.0
    %935 = vmatprep.subr.mxu0 0.0
    %936 = vmatpush1.msra.mxu0 0.0
    %937 = vmatprep.subr.mxu0 0.0
    %938 = vmatpush1.msra.mxu0 0.0
    %939 = vmatprep.subr.mxu0 0.0
    %940 = vmatpush1.msra.mxu0 0.0
    %941 = vmatprep.subr.mxu0 0.0
    %942 = vmatpush1.msra.mxu0 0.0
    %943 = vmatprep.subr.mxu0 0.0
    %944 = vmatpush1.msra.mxu0 0.0
    %945 = vmatprep.subr.mxu0 0.0
    %946 = vmatpush1.msra.mxu0 0.0
    %947 = vmatprep.mubr.f32.mxu0 0.0
    %948 = vmatmul.mubr.f32.gmra.mrb[0].mxu0 %v881
    %v949 = vpop.f32.mrb[0].mxu0
    %v950 = vadd.f32 0.0, %v949
    %v951 = vpop.f32.mrb[0].mxu0
    %952 = vdwg.mxu0
    %v953 = vadd.f32 %v234, %v950
    %v954 = vxor.u32 %v953, 2147483648
    %v955 = vmul.f32 %v954, 1.442695
    %v956 = vpow.pop %v955
    %v957 = vadd.f32 %v956, 1.0
    %v958 = vrcp.pop %v957
    %v959 = vmul.f32 1.0, %v958
    %v960 = vtanh.pop %v953
    %v961 = vmul.f32 %v959, %v864
    %963 = vrot.lane.b32.xlu0 %v960, 32
    %v964 = vpop.permute.xlu0 %963
    %v966 = vmul.f32 %v959, %v964
    %968 = vrot.lane.b32.xlu0 %v966, 32
    %v969 = vpop.permute.xlu0 %968
    %v971 = vadd.f32 %v961, %v969
    %v972 = vtanh.pop %v971
    %974 = vrot.lane.b32.xlu0 %v972, 32
    %v975 = vpop.permute.xlu0 %974
    %v977 = vmul.f32 %v959, %v975
    %979 = vrot.lane.b32.xlu0 %v977, 64
    %v980 = vpop.permute.xlu0 %979
    %982 = vrot.lane.b32.xlu0 %v977, 96
    %v983 = vpop.permute.xlu0 %982
    %v985 = vsel %vm342, %v980, %v983
    %v986 = vmul.f32 %v985, %v49
    %v988 = vsel %vm236, %v986, 0
    %990 = vmatprep.subr.mxu0 0.0
    %991 = vmatpush1.msra.mxu0 %v50
    %992 = vmatprep.subr.mxu0 0.0
    %993 = vmatpush1.msra.mxu0 %v51
    %994 = vmatprep.subr.mxu0 0.0
    %995 = vmatpush1.msra.mxu0 %v52
    %996 = vmatprep.subr.mxu0 0.0
    %997 = vmatpush1.msra.mxu0 %v53
    %998 = vmatprep.subr.mxu0 0.0
    %999 = vmatpush1.msra.mxu0 %v54
    %1000 = vmatprep.subr.mxu0 0.0
    %1001 = vmatpush1.msra.mxu0 %v55
    %1002 = vmatprep.subr.mxu0 0.0
    %1003 = vmatpush1.msra.mxu0 %v56
    %1004 = vmatprep.subr.mxu0 0.0
    %1005 = vmatpush1.msra.mxu0 %v57
    %1006 = vmatprep.subr.mxu0 0.0
    %1007 = vmatpush1.msra.mxu0 0.0
    %1008 = vmatprep.subr.mxu0 0.0
    %1009 = vmatpush1.msra.mxu0 0.0
    %1010 = vmatprep.subr.mxu0 0.0
    %1011 = vmatpush1.msra.mxu0 0.0
    %1012 = vmatprep.subr.mxu0 0.0
    %1013 = vmatpush1.msra.mxu0 0.0
    %1014 = vmatprep.subr.mxu0 0.0
    %1015 = vmatpush1.msra.mxu0 0.0
    %1016 = vmatprep.subr.mxu0 0.0
    %1017 = vmatpush1.msra.mxu0 0.0
    %1018 = vmatprep.subr.mxu0 0.0
    %1019 = vmatpush1.msra.mxu0 0.0
    %1020 = vmatprep.subr.mxu0 0.0
    %1021 = vmatpush1.msra.mxu0 0.0
    %1022 = vmatprep.subr.mxu0 0.0
    %1023 = vmatpush1.msra.mxu0 0.0
    %1024 = vmatprep.subr.mxu0 0.0
    %1025 = vmatpush1.msra.mxu0 0.0
    %1026 = vmatprep.subr.mxu0 0.0
    %1027 = vmatpush1.msra.mxu0 0.0
    %1028 = vmatprep.subr.mxu0 0.0
    %1029 = vmatpush1.msra.mxu0 0.0
    %1030 = vmatprep.subr.mxu0 0.0
    %1031 = vmatpush1.msra.mxu0 0.0
    %1032 = vmatprep.subr.mxu0 0.0
    %1033 = vmatpush1.msra.mxu0 0.0
    %1034 = vmatprep.subr.mxu0 0.0
    %1035 = vmatpush1.msra.mxu0 0.0
    %1036 = vmatprep.subr.mxu0 0.0
    %1037 = vmatpush1.msra.mxu0 0.0
    %1038 = vmatprep.subr.mxu0 0.0
    %1039 = vmatpush1.msra.mxu0 0.0
    %1040 = vmatprep.subr.mxu0 0.0
    %1041 = vmatpush1.msra.mxu0 0.0
    %1042 = vmatprep.subr.mxu0 0.0
    %1043 = vmatpush1.msra.mxu0 0.0
    %1044 = vmatprep.subr.mxu0 0.0
    %1045 = vmatpush1.msra.mxu0 0.0
    %1046 = vmatprep.subr.mxu0 0.0
    %1047 = vmatpush1.msra.mxu0 0.0
    %1048 = vmatprep.subr.mxu0 0.0
    %1049 = vmatpush1.msra.mxu0 0.0
    %1050 = vmatprep.subr.mxu0 0.0
    %1051 = vmatpush1.msra.mxu0 0.0
    %1052 = vmatprep.subr.mxu0 0.0
    %1053 = vmatpush1.msra.mxu0 0.0
    %1054 = vmatprep.mubr.f32.mxu0 0.0
    %1055 = vmatmul.mubr.f32.gmra.mrb[0].mxu0 %v988
    %v1056 = vpop.f32.mrb[0].mxu0
    %v1057 = vadd.f32 0.0, %v1056
    %v1058 = vpop.f32.mrb[0].mxu0
    %1059 = vdwg.mxu0
    %v1060 = vadd.f32 %v235, %v1057
    %v1061 = vxor.u32 %v1060, 2147483648
    %v1062 = vmul.f32 %v1061, 1.442695
    %v1063 = vpow.pop %v1062
    %v1064 = vadd.f32 %v1063, 1.0
    %v1065 = vrcp.pop %v1064
    %v1066 = vmul.f32 1.0, %v1065
    %v1067 = vtanh.pop %v1060
    %v1068 = vmul.f32 %v1066, %v971
    %1070 = vrot.lane.b32.xlu0 %v1067, 32
    %v1071 = vpop.permute.xlu0 %1070
    %v1073 = vmul.f32 %v1066, %v1071
    %1075 = vrot.lane.b32.xlu0 %v1073, 32
    %v1076 = vpop.permute.xlu0 %1075
    %v1078 = vadd.f32 %v1068, %v1076
    %v1079 = vtanh.pop %v1078
    %1081 = vrot.lane.b32.xlu0 %v1079, 32
    %v1082 = vpop.permute.xlu0 %1081
    %v1084 = vmul.f32 %v1066, %v1082
    %1086 = vrot.lane.b32.xlu0 %v1084, 64
    %v1087 = vpop.permute.xlu0 %1086
    %1089 = vrot.lane.b32.xlu0 %v1084, 96
    %v1090 = vpop.permute.xlu0 %1089
    %v1092 = vsel %vm342, %v1087, %v1090
    %v1093 = vmul.f32 %v1092, %v49
    %v1095 = vcombine.low %v344, %v451
    %v1096 = vcombine.low %v558, %v665
    %v1097 = vcombine.low %v772, %v879
    %v1098 = vcombine.low %v986, %v1093
    %v1099 = vsel %vm236, %v1095, 0
    %v1101 = vsel %vm236, %v1096, 0
    %v1103 = vsel %vm236, %v1097, 0
    %v1105 = vsel %vm236, %v1098, 0
    %1107 = vmatprep.subr.mxu0 0.0
    %1108 = vmatpush1.msra.mxu0 %v74
    %1109 = vmatprep.subr.mxu0 0.0
    %1110 = vmatpush1.msra.mxu0 %v75
    %1111 = vmatprep.subr.mxu0 0.0
    %1112 = vmatpush1.msra.mxu0 %v76
    %1113 = vmatprep.subr.mxu0 0.0
    %1114 = vmatpush1.msra.mxu0 %v77
    %1115 = vmatprep.subr.mxu0 0.0
    %1116 = vmatpush1.msra.mxu0 %v78
    %1117 = vmatprep.subr.mxu0 0.0
    %1118 = vmatpush1.msra.mxu0 %v79
    %1119 = vmatprep.subr.mxu0 0.0
    %1120 = vmatpush1.msra.mxu0 %v80
    %1121 = vmatprep.subr.mxu0 0.0
    %1122 = vmatpush1.msra.mxu0 %v81
    %1123 = vmatprep.subr.mxu0 0.0
    %1124 = vmatpush1.msra.mxu0 0.0
    %1125 = vmatprep.subr.mxu0 0.0
    %1126 = vmatpush1.msra.mxu0 0.0
    %1127 = vmatprep.subr.mxu0 0.0
    %1128 = vmatpush1.msra.mxu0 0.0
    %1129 = vmatprep.subr.mxu0 0.0
    %1130 = vmatpush1.msra.mxu0 0.0
    %1131 = vmatprep.subr.mxu0 0.0
    %1132 = vmatpush1.msra.mxu0 0.0
    %1133 = vmatprep.subr.mxu0 0.0
    %1134 = vmatpush1.msra.mxu0 0.0
    %1135 = vmatprep.subr.mxu0 0.0
    %1136 = vmatpush1.msra.mxu0 0.0
    %1137 = vmatprep.subr.mxu0 0.0
    %1138 = vmatpush1.msra.mxu0 0.0
    %1139 = vmatprep.subr.mxu0 0.0
    %1140 = vmatpush1.msra.mxu0 0.0
    %1141 = vmatprep.subr.mxu0 0.0
    %1142 = vmatpush1.msra.mxu0 0.0
    %1143 = vmatprep.subr.mxu0 0.0
    %1144 = vmatpush1.msra.mxu0 0.0
    %1145 = vmatprep.subr.mxu0 0.0
    %1146 = vmatpush1.msra.mxu0 0.0
    %1147 = vmatprep.subr.mxu0 0.0
    %1148 = vmatpush1.msra.mxu0 0.0
    %1149 = vmatprep.subr.mxu0 0.0
    %1150 = vmatpush1.msra.mxu0 0.0
    %1151 = vmatprep.subr.mxu0 0.0
    %1152 = vmatpush1.msra.mxu0 0.0
    %1153 = vmatprep.subr.mxu0 0.0
    %1154 = vmatpush1.msra.mxu0 0.0
    %1155 = vmatprep.subr.mxu0 0.0
    %1156 = vmatpush1.msra.mxu0 0.0
    %1157 = vmatprep.subr.mxu0 0.0
    %1158 = vmatpush1.msra.mxu0 0.0
    %1159 = vmatprep.subr.mxu0 0.0
    %1160 = vmatpush1.msra.mxu0 0.0
    %1161 = vmatprep.subr.mxu0 0.0
    %1162 = vmatpush1.msra.mxu0 0.0
    %1163 = vmatprep.subr.mxu0 0.0
    %1164 = vmatpush1.msra.mxu0 0.0
    %1165 = vmatprep.subr.mxu0 0.0
    %1166 = vmatpush1.msra.mxu0 0.0
    %1167 = vmatprep.subr.mxu0 0.0
    %1168 = vmatpush1.msra.mxu0 0.0
    %1169 = vmatprep.subr.mxu0 0.0
    %1170 = vmatpush1.msra.mxu0 0.0
    %1171 = vmatprep.mubr.f32.mxu0 0.0
    %1172 = vmatmul.mubr.f32.gmra.mrb[0].mxu0 %v1099
    %v1173 = vpop.f32.mrb[0].mxu0
    %v1174 = vadd.f32 0.0, %v1173
    %v1175 = vpop.f32.mrb[0].mxu0
    %1176 = vmatprep.mubr.f32.mxu0 0.0
    %1177 = vmatmul.mubr.f32.gmra.mrb[0].mxu0 %v1101
    %v1178 = vpop.f32.mrb[0].mxu0
    %v1179 = vadd.f32 0.0, %v1178
    %v1180 = vpop.f32.mrb[0].mxu0
    %1181 = vmatprep.mubr.f32.mxu0 0.0
    %1182 = vmatmul.mubr.f32.gmra.mrb[0].mxu0 %v1103
    %v1183 = vpop.f32.mrb[0].mxu0
    %v1184 = vadd.f32 0.0, %v1183
    %v1185 = vpop.f32.mrb[0].mxu0
    %1186 = vmatprep.mubr.f32.mxu0 0.0
    %1187 = vmatmul.mubr.f32.gmra.mrb[0].mxu0 %v1105
    %v1188 = vpop.f32.mrb[0].mxu0
    %v1189 = vadd.f32 0.0, %v1188
    %v1190 = vpop.f32.mrb[0].mxu0
    %1191 = vdwg.mxu0
    %v1196 = vcombine.high %v1174, %v1174
    %v1197 = vcombine.high %v1179, %v1179
    %v1198 = vcombine.high %v1184, %v1184
    %v1199 = vcombine.high %v1189, %v1189
    %v1204 = vadd.f32 %v1174, %v91
    %v1205 = vadd.f32 %v1196, %v91
    %v1206 = vadd.f32 %v1179, %v91
    %v1207 = vadd.f32 %v1197, %v91
    %v1208 = vadd.f32 %v1184, %v91
    %v1209 = vadd.f32 %v1198, %v91
    %v1210 = vadd.f32 %v1189, %v91
    %v1211 = vadd.f32 %v1199, %v91
    %1212 = vmatprep.subr.mxu0 0.0
    %1213 = vmatpush1.msra.mxu0 %v58
    %1214 = vmatprep.subr.mxu0 0.0
    %1215 = vmatpush1.msra.mxu0 %v59
    %1216 = vmatprep.subr.mxu0 0.0
    %1217 = vmatpush1.msra.mxu0 %v60
    %1218 = vmatprep.subr.mxu0 0.0
    %1219 = vmatpush1.msra.mxu0 %v61
    %1220 = vmatprep.subr.mxu0 0.0
    %1221 = vmatpush1.msra.mxu0 %v62
    %1222 = vmatprep.subr.mxu0 0.0
    %1223 = vmatpush1.msra.mxu0 %v63
    %1224 = vmatprep.subr.mxu0 0.0
    %1225 = vmatpush1.msra.mxu0 %v64
    %1226 = vmatprep.subr.mxu0 0.0
    %1227 = vmatpush1.msra.mxu0 %v65
    %1228 = vmatprep.subr.mxu0 0.0
    %1229 = vmatpush1.msra.mxu0 0.0
    %1230 = vmatprep.subr.mxu0 0.0
    %1231 = vmatpush1.msra.mxu0 0.0
    %1232 = vmatprep.subr.mxu0 0.0
    %1233 = vmatpush1.msra.mxu0 0.0
    %1234 = vmatprep.subr.mxu0 0.0
    %1235 = vmatpush1.msra.mxu0 0.0
    %1236 = vmatprep.subr.mxu0 0.0
    %1237 = vmatpush1.msra.mxu0 0.0
    %1238 = vmatprep.subr.mxu0 0.0
    %1239 = vmatpush1.msra.mxu0 0.0
    %1240 = vmatprep.subr.mxu0 0.0
    %1241 = vmatpush1.msra.mxu0 0.0
    %1242 = vmatprep.subr.mxu0 0.0
    %1243 = vmatpush1.msra.mxu0 0.0
    %1244 = vmatprep.subr.mxu0 0.0
    %1245 = vmatpush1.msra.mxu0 0.0
    %1246 = vmatprep.subr.mxu0 0.0
    %1247 = vmatpush1.msra.mxu0 0.0
    %1248 = vmatprep.subr.mxu0 0.0
    %1249 = vmatpush1.msra.mxu0 0.0
    %1250 = vmatprep.subr.mxu0 0.0
    %1251 = vmatpush1.msra.mxu0 0.0
    %1252 = vmatprep.subr.mxu0 0.0
    %1253 = vmatpush1.msra.mxu0 0.0
    %1254 = vmatprep.subr.mxu0 0.0
    %1255 = vmatpush1.msra.mxu0 0.0
    %1256 = vmatprep.subr.mxu0 0.0
    %1257 = vmatpush1.msra.mxu0 0.0
    %1258 = vmatprep.subr.mxu0 0.0
    %1259 = vmatpush1.msra.mxu0 0.0
    %1260 = vmatprep.subr.mxu0 0.0
    %1261 = vmatpush1.msra.mxu0 0.0
    %1262 = vmatprep.subr.mxu0 0.0
    %1263 = vmatpush1.msra.mxu0 0.0
    %1264 = vmatprep.subr.mxu0 0.0
    %1265 = vmatpush1.msra.mxu0 0.0
    %1266 = vmatprep.subr.mxu0 0.0
    %1267 = vmatpush1.msra.mxu0 0.0
    %1268 = vmatprep.subr.mxu0 0.0
    %1269 = vmatpush1.msra.mxu0 0.0
    %1270 = vmatprep.subr.mxu0 0.0
    %1271 = vmatpush1.msra.mxu0 0.0
    %1272 = vmatprep.subr.mxu0 0.0
    %1273 = vmatpush1.msra.mxu0 0.0
    %1274 = vmatprep.subr.mxu0 0.0
    %1275 = vmatpush1.msra.mxu0 0.0
    %1276 = vmatprep.mubr.f32.mxu0 0.0
    %1277 = vmatmul.mubr.f32.gmra.mrb[0].mxu0 %v238
    %v1278 = vpop.f32.mrb[0].mxu0
    %v1279 = vadd.f32 0.0, %v1278
    %v1280 = vpop.f32.mrb[0].mxu0
    %1281 = vdwg.mxu0
    %v1282 = vadd.f32 %v1204, %v1279
    %v1283 = vxor.u32 %v1282, 2147483648
    %v1284 = vmul.f32 %v1283, 1.442695
    %v1285 = vpow.pop %v1284
    %v1286 = vadd.f32 %v1285, 1.0
    %v1287 = vrcp.pop %v1286
    %v1288 = vmul.f32 1.0, %v1287
    %v1289 = vtanh.pop %v1282
    %v1290 = vmul.f32 %v1288, 0.0
    %1292 = vrot.lane.b32.xlu0 %v1289, 32
    %v1293 = vpop.permute.xlu0 %1292
    %v1295 = vmul.f32 %v1288, %v1293
    %1297 = vrot.lane.b32.xlu0 %v1295, 32
    %v1298 = vpop.permute.xlu0 %1297
    %v1300 = vadd.f32 %v1290, %v1298
    %v1301 = vtanh.pop %v1300
    %1303 = vrot.lane.b32.xlu0 %v1301, 32
    %v1304 = vpop.permute.xlu0 %1303
    %v1306 = vmul.f32 %v1288, %v1304
    %1308 = vrot.lane.b32.xlu0 %v1306, 64
    %v1309 = vpop.permute.xlu0 %1308
    %1311 = vrot.lane.b32.xlu0 %v1306, 96
    %v1312 = vpop.permute.xlu0 %1311
    %v1314 = vsel %vm342, %v1309, %v1312
    %v1315 = vmul.f32 %v1314, %v49
    %v1317 = vsel %vm236, %v1315, 0
    %1319 = vmatprep.subr.mxu0 0.0
    %1320 = vmatpush1.msra.mxu0 %v58
    %1321 = vmatprep.subr.mxu0 0.0
    %1322 = vmatpush1.msra.mxu0 %v59
    %1323 = vmatprep.subr.mxu0 0.0
    %1324 = vmatpush1.msra.mxu0 %v60
    %1325 = vmatprep.subr.mxu0 0.0
    %1326 = vmatpush1.msra.mxu0 %v61
    %1327 = vmatprep.subr.mxu0 0.0
    %1328 = vmatpush1.msra.mxu0 %v62
    %1329 = vmatprep.subr.mxu0 0.0
    %1330 = vmatpush1.msra.mxu0 %v63
    %1331 = vmatprep.subr.mxu0 0.0
    %1332 = vmatpush1.msra.mxu0 %v64
    %1333 = vmatprep.subr.mxu0 0.0
    %1334 = vmatpush1.msra.mxu0 %v65
    %1335 = vmatprep.subr.mxu0 0.0
    %1336 = vmatpush1.msra.mxu0 0.0
    %1337 = vmatprep.subr.mxu0 0.0
    %1338 = vmatpush1.msra.mxu0 0.0
    %1339 = vmatprep.subr.mxu0 0.0
    %1340 = vmatpush1.msra.mxu0 0.0
    %1341 = vmatprep.subr.mxu0 0.0
    %1342 = vmatpush1.msra.mxu0 0.0
    %1343 = vmatprep.subr.mxu0 0.0
    %1344 = vmatpush1.msra.mxu0 0.0
    %1345 = vmatprep.subr.mxu0 0.0
    %1346 = vmatpush1.msra.mxu0 0.0
    %1347 = vmatprep.subr.mxu0 0.0
    %1348 = vmatpush1.msra.mxu0 0.0
    %1349 = vmatprep.subr.mxu0 0.0
    %1350 = vmatpush1.msra.mxu0 0.0
    %1351 = vmatprep.subr.mxu0 0.0
    %1352 = vmatpush1.msra.mxu0 0.0
    %1353 = vmatprep.subr.mxu0 0.0
    %1354 = vmatpush1.msra.mxu0 0.0
    %1355 = vmatprep.subr.mxu0 0.0
    %1356 = vmatpush1.msra.mxu0 0.0
    %1357 = vmatprep.subr.mxu0 0.0
    %1358 = vmatpush1.msra.mxu0 0.0
    %1359 = vmatprep.subr.mxu0 0.0
    %1360 = vmatpush1.msra.mxu0 0.0
    %1361 = vmatprep.subr.mxu0 0.0
    %1362 = vmatpush1.msra.mxu0 0.0
    %1363 = vmatprep.subr.mxu0 0.0
    %1364 = vmatpush1.msra.mxu0 0.0
    %1365 = vmatprep.subr.mxu0 0.0
    %1366 = vmatpush1.msra.mxu0 0.0
    %1367 = vmatprep.subr.mxu0 0.0
    %1368 = vmatpush1.msra.mxu0 0.0
    %1369 = vmatprep.subr.mxu0 0.0
    %1370 = vmatpush1.msra.mxu0 0.0
    %1371 = vmatprep.subr.mxu0 0.0
    %1372 = vmatpush1.msra.mxu0 0.0
    %1373 = vmatprep.subr.mxu0 0.0
    %1374 = vmatpush1.msra.mxu0 0.0
    %1375 = vmatprep.subr.mxu0 0.0
    %1376 = vmatpush1.msra.mxu0 0.0
    %1377 = vmatprep.subr.mxu0 0.0
    %1378 = vmatpush1.msra.mxu0 0.0
    %1379 = vmatprep.subr.mxu0 0.0
    %1380 = vmatpush1.msra.mxu0 0.0
    %1381 = vmatprep.subr.mxu0 0.0
    %1382 = vmatpush1.msra.mxu0 0.0
    %1383 = vmatprep.mubr.f32.mxu0 0.0
    %1384 = vmatmul.mubr.f32.gmra.mrb[0].mxu0 %v1317
    %v1385 = vpop.f32.mrb[0].mxu0
    %v1386 = vadd.f32 0.0, %v1385
    %v1387 = vpop.f32.mrb[0].mxu0
    %1388 = vdwg.mxu0
    %v1389 = vadd.f32 %v1205, %v1386
    %v1390 = vxor.u32 %v1389, 2147483648
    %v1391 = vmul.f32 %v1390, 1.442695
    %v1392 = vpow.pop %v1391
    %v1393 = vadd.f32 %v1392, 1.0
    %v1394 = vrcp.pop %v1393
    %v1395 = vmul.f32 1.0, %v1394
    %v1396 = vtanh.pop %v1389
    %v1397 = vmul.f32 %v1395, %v1300
    %1399 = vrot.lane.b32.xlu0 %v1396, 32
    %v1400 = vpop.permute.xlu0 %1399
    %v1402 = vmul.f32 %v1395, %v1400
    %1404 = vrot.lane.b32.xlu0 %v1402, 32
    %v1405 = vpop.permute.xlu0 %1404
    %v1407 = vadd.f32 %v1397, %v1405
    %v1408 = vtanh.pop %v1407
    %1410 = vrot.lane.b32.xlu0 %v1408, 32
    %v1411 = vpop.permute.xlu0 %1410
    %v1413 = vmul.f32 %v1395, %v1411
    %1415 = vrot.lane.b32.xlu0 %v1413, 64
    %v1416 = vpop.permute.xlu0 %1415
    %1418 = vrot.lane.b32.xlu0 %v1413, 96
    %v1419 = vpop.permute.xlu0 %1418
    %v1421 = vsel %vm342, %v1416, %v1419
    %v1422 = vmul.f32 %v1421, %v49
    %v1424 = vsel %vm236, %v1422, 0
    %1426 = vmatprep.subr.mxu0 0.0
    %1427 = vmatpush1.msra.mxu0 %v58
    %1428 = vmatprep.subr.mxu0 0.0
    %1429 = vmatpush1.msra.mxu0 %v59
    %1430 = vmatprep.subr.mxu0 0.0
    %1431 = vmatpush1.msra.mxu0 %v60
    %1432 = vmatprep.subr.mxu0 0.0
    %1433 = vmatpush1.msra.mxu0 %v61
    %1434 = vmatprep.subr.mxu0 0.0
    %1435 = vmatpush1.msra.mxu0 %v62
    %1436 = vmatprep.subr.mxu0 0.0
    %1437 = vmatpush1.msra.mxu0 %v63
    %1438 = vmatprep.subr.mxu0 0.0
    %1439 = vmatpush1.msra.mxu0 %v64
    %1440 = vmatprep.subr.mxu0 0.0
    %1441 = vmatpush1.msra.mxu0 %v65
    %1442 = vmatprep.subr.mxu0 0.0
    %1443 = vmatpush1.msra.mxu0 0.0
    %1444 = vmatprep.subr.mxu0 0.0
    %1445 = vmatpush1.msra.mxu0 0.0
    %1446 = vmatprep.subr.mxu0 0.0
    %1447 = vmatpush1.msra.mxu0 0.0
    %1448 = vmatprep.subr.mxu0 0.0
    %1449 = vmatpush1.msra.mxu0 0.0
    %1450 = vmatprep.subr.mxu0 0.0
    %1451 = vmatpush1.msra.mxu0 0.0
    %1452 = vmatprep.subr.mxu0 0.0
    %1453 = vmatpush1.msra.mxu0 0.0
    %1454 = vmatprep.subr.mxu0 0.0
    %1455 = vmatpush1.msra.mxu0 0.0
    %1456 = vmatprep.subr.mxu0 0.0
    %1457 = vmatpush1.msra.mxu0 0.0
    %1458 = vmatprep.subr.mxu0 0.0
    %1459 = vmatpush1.msra.mxu0 0.0
    %1460 = vmatprep.subr.mxu0 0.0
    %1461 = vmatpush1.msra.mxu0 0.0
    %1462 = vmatprep.subr.mxu0 0.0
    %1463 = vmatpush1.msra.mxu0 0.0
    %1464 = vmatprep.subr.mxu0 0.0
    %1465 = vmatpush1.msra.mxu0 0.0
    %1466 = vmatprep.subr.mxu0 0.0
    %1467 = vmatpush1.msra.mxu0 0.0
    %1468 = vmatprep.subr.mxu0 0.0
    %1469 = vmatpush1.msra.mxu0 0.0
    %1470 = vmatprep.subr.mxu0 0.0
    %1471 = vmatpush1.msra.mxu0 0.0
    %1472 = vmatprep.subr.mxu0 0.0
    %1473 = vmatpush1.msra.mxu0 0.0
    %1474 = vmatprep.subr.mxu0 0.0
    %1475 = vmatpush1.msra.mxu0 0.0
    %1476 = vmatprep.subr.mxu0 0.0
    %1477 = vmatpush1.msra.mxu0 0.0
    %1478 = vmatprep.subr.mxu0 0.0
    %1479 = vmatpush1.msra.mxu0 0.0
    %1480 = vmatprep.subr.mxu0 0.0
    %1481 = vmatpush1.msra.mxu0 0.0
    %1482 = vmatprep.subr.mxu0 0.0
    %1483 = vmatpush1.msra.mxu0 0.0
    %1484 = vmatprep.subr.mxu0 0.0
    %1485 = vmatpush1.msra.mxu0 0.0
    %1486 = vmatprep.subr.mxu0 0.0
    %1487 = vmatpush1.msra.mxu0 0.0
    %1488 = vmatprep.subr.mxu0 0.0
    %1489 = vmatpush1.msra.mxu0 0.0
    %1490 = vmatprep.mubr.f32.mxu0 0.0
    %1491 = vmatmul.mubr.f32.gmra.mrb[0].mxu0 %v1424
    %v1492 = vpop.f32.mrb[0].mxu0
    %v1493 = vadd.f32 0.0, %v1492
    %v1494 = vpop.f32.mrb[0].mxu0
    %1495 = vdwg.mxu0
    %v1496 = vadd.f32 %v1206, %v1493
    %v1497 = vxor.u32 %v1496, 2147483648
    %v1498 = vmul.f32 %v1497, 1.442695
    %v1499 = vpow.pop %v1498
    %v1500 = vadd.f32 %v1499, 1.0
    %v1501 = vrcp.pop %v1500
    %v1502 = vmul.f32 1.0, %v1501
    %v1503 = vtanh.pop %v1496
    %v1504 = vmul.f32 %v1502, %v1407
    %1506 = vrot.lane.b32.xlu0 %v1503, 32
    %v1507 = vpop.permute.xlu0 %1506
    %v1509 = vmul.f32 %v1502, %v1507
    %1511 = vrot.lane.b32.xlu0 %v1509, 32
    %v1512 = vpop.permute.xlu0 %1511
    %v1514 = vadd.f32 %v1504, %v1512
    %v1515 = vtanh.pop %v1514
    %1517 = vrot.lane.b32.xlu0 %v1515, 32
    %v1518 = vpop.permute.xlu0 %1517
    %v1520 = vmul.f32 %v1502, %v1518
    %1522 = vrot.lane.b32.xlu0 %v1520, 64
    %v1523 = vpop.permute.xlu0 %1522
    %1525 = vrot.lane.b32.xlu0 %v1520, 96
    %v1526 = vpop.permute.xlu0 %1525
    %v1528 = vsel %vm342, %v1523, %v1526
    %v1529 = vmul.f32 %v1528, %v49
    %v1531 = vsel %vm236, %v1529, 0
    %1533 = vmatprep.subr.mxu0 0.0
    %1534 = vmatpush1.msra.mxu0 %v58
    %1535 = vmatprep.subr.mxu0 0.0
    %1536 = vmatpush1.msra.mxu0 %v59
    %1537 = vmatprep.subr.mxu0 0.0
    %1538 = vmatpush1.msra.mxu0 %v60
    %1539 = vmatprep.subr.mxu0 0.0
    %1540 = vmatpush1.msra.mxu0 %v61
    %1541 = vmatprep.subr.mxu0 0.0
    %1542 = vmatpush1.msra.mxu0 %v62
    %1543 = vmatprep.subr.mxu0 0.0
    %1544 = vmatpush1.msra.mxu0 %v63
    %1545 = vmatprep.subr.mxu0 0.0
    %1546 = vmatpush1.msra.mxu0 %v64
    %1547 = vmatprep.subr.mxu0 0.0
    %1548 = vmatpush1.msra.mxu0 %v65
    %1549 = vmatprep.subr.mxu0 0.0
    %1550 = vmatpush1.msra.mxu0 0.0
    %1551 = vmatprep.subr.mxu0 0.0
    %1552 = vmatpush1.msra.mxu0 0.0
    %1553 = vmatprep.subr.mxu0 0.0
    %1554 = vmatpush1.msra.mxu0 0.0
    %1555 = vmatprep.subr.mxu0 0.0
    %1556 = vmatpush1.msra.mxu0 0.0
    %1557 = vmatprep.subr.mxu0 0.0
    %1558 = vmatpush1.msra.mxu0 0.0
    %1559 = vmatprep.subr.mxu0 0.0
    %1560 = vmatpush1.msra.mxu0 0.0
    %1561 = vmatprep.subr.mxu0 0.0
    %1562 = vmatpush1.msra.mxu0 0.0
    %1563 = vmatprep.subr.mxu0 0.0
    %1564 = vmatpush1.msra.mxu0 0.0
    %1565 = vmatprep.subr.mxu0 0.0
    %1566 = vmatpush1.msra.mxu0 0.0
    %1567 = vmatprep.subr.mxu0 0.0
    %1568 = vmatpush1.msra.mxu0 0.0
    %1569 = vmatprep.subr.mxu0 0.0
    %1570 = vmatpush1.msra.mxu0 0.0
    %1571 = vmatprep.subr.mxu0 0.0
    %1572 = vmatpush1.msra.mxu0 0.0
    %1573 = vmatprep.subr.mxu0 0.0
    %1574 = vmatpush1.msra.mxu0 0.0
    %1575 = vmatprep.subr.mxu0 0.0
    %1576 = vmatpush1.msra.mxu0 0.0
    %1577 = vmatprep.subr.mxu0 0.0
    %1578 = vmatpush1.msra.mxu0 0.0
    %1579 = vmatprep.subr.mxu0 0.0
    %1580 = vmatpush1.msra.mxu0 0.0
    %1581 = vmatprep.subr.mxu0 0.0
    %1582 = vmatpush1.msra.mxu0 0.0
    %1583 = vmatprep.subr.mxu0 0.0
    %1584 = vmatpush1.msra.mxu0 0.0
    %1585 = vmatprep.subr.mxu0 0.0
    %1586 = vmatpush1.msra.mxu0 0.0
    %1587 = vmatprep.subr.mxu0 0.0
    %1588 = vmatpush1.msra.mxu0 0.0
    %1589 = vmatprep.subr.mxu0 0.0
    %1590 = vmatpush1.msra.mxu0 0.0
    %1591 = vmatprep.subr.mxu0 0.0
    %1592 = vmatpush1.msra.mxu0 0.0
    %1593 = vmatprep.subr.mxu0 0.0
    %1594 = vmatpush1.msra.mxu0 0.0
    %1595 = vmatprep.subr.mxu0 0.0
    %1596 = vmatpush1.msra.mxu0 0.0
    %1597 = vmatprep.mubr.f32.mxu0 0.0
    %1598 = vmatmul.mubr.f32.gmra.mrb[0].mxu0 %v1531
    %v1599 = vpop.f32.mrb[0].mxu0
    %v1600 = vadd.f32 0.0, %v1599
    %v1601 = vpop.f32.mrb[0].mxu0
    %1602 = vdwg.mxu0
    %v1603 = vadd.f32 %v1207, %v1600
    %v1604 = vxor.u32 %v1603, 2147483648
    %v1605 = vmul.f32 %v1604, 1.442695
    %v1606 = vpow.pop %v1605
    %v1607 = vadd.f32 %v1606, 1.0
    %v1608 = vrcp.pop %v1607
    %v1609 = vmul.f32 1.0, %v1608
    %v1610 = vtanh.pop %v1603
    %v1611 = vmul.f32 %v1609, %v1514
    %1613 = vrot.lane.b32.xlu0 %v1610, 32
    %v1614 = vpop.permute.xlu0 %1613
    %v1616 = vmul.f32 %v1609, %v1614
    %1618 = vrot.lane.b32.xlu0 %v1616, 32
    %v1619 = vpop.permute.xlu0 %1618
    %v1621 = vadd.f32 %v1611, %v1619
    %v1622 = vtanh.pop %v1621
    %1624 = vrot.lane.b32.xlu0 %v1622, 32
    %v1625 = vpop.permute.xlu0 %1624
    %v1627 = vmul.f32 %v1609, %v1625
    %1629 = vrot.lane.b32.xlu0 %v1627, 64
    %v1630 = vpop.permute.xlu0 %1629
    %1632 = vrot.lane.b32.xlu0 %v1627, 96
    %v1633 = vpop.permute.xlu0 %1632
    %v1635 = vsel %vm342, %v1630, %v1633
    %v1636 = vmul.f32 %v1635, %v49
    %v1638 = vsel %vm236, %v1636, 0
    %1640 = vmatprep.subr.mxu0 0.0
    %1641 = vmatpush1.msra.mxu0 %v58
    %1642 = vmatprep.subr.mxu0 0.0
    %1643 = vmatpush1.msra.mxu0 %v59
    %1644 = vmatprep.subr.mxu0 0.0
    %1645 = vmatpush1.msra.mxu0 %v60
    %1646 = vmatprep.subr.mxu0 0.0
    %1647 = vmatpush1.msra.mxu0 %v61
    %1648 = vmatprep.subr.mxu0 0.0
    %1649 = vmatpush1.msra.mxu0 %v62
    %1650 = vmatprep.subr.mxu0 0.0
    %1651 = vmatpush1.msra.mxu0 %v63
    %1652 = vmatprep.subr.mxu0 0.0
    %1653 = vmatpush1.msra.mxu0 %v64
    %1654 = vmatprep.subr.mxu0 0.0
    %1655 = vmatpush1.msra.mxu0 %v65
    %1656 = vmatprep.subr.mxu0 0.0
    %1657 = vmatpush1.msra.mxu0 0.0
    %1658 = vmatprep.subr.mxu0 0.0
    %1659 = vmatpush1.msra.mxu0 0.0
    %1660 = vmatprep.subr.mxu0 0.0
    %1661 = vmatpush1.msra.mxu0 0.0
    %1662 = vmatprep.subr.mxu0 0.0
    %1663 = vmatpush1.msra.mxu0 0.0
    %1664 = vmatprep.subr.mxu0 0.0
    %1665 = vmatpush1.msra.mxu0 0.0
    %1666 = vmatprep.subr.mxu0 0.0
    %1667 = vmatpush1.msra.mxu0 0.0
    %1668 = vmatprep.subr.mxu0 0.0
    %1669 = vmatpush1.msra.mxu0 0.0
    %1670 = vmatprep.subr.mxu0 0.0
    %1671 = vmatpush1.msra.mxu0 0.0
    %1672 = vmatprep.subr.mxu0 0.0
    %1673 = vmatpush1.msra.mxu0 0.0
    %1674 = vmatprep.subr.mxu0 0.0
    %1675 = vmatpush1.msra.mxu0 0.0
    %1676 = vmatprep.subr.mxu0 0.0
    %1677 = vmatpush1.msra.mxu0 0.0
    %1678 = vmatprep.subr.mxu0 0.0
    %1679 = vmatpush1.msra.mxu0 0.0
    %1680 = vmatprep.subr.mxu0 0.0
    %1681 = vmatpush1.msra.mxu0 0.0
    %1682 = vmatprep.subr.mxu0 0.0
    %1683 = vmatpush1.msra.mxu0 0.0
    %1684 = vmatprep.subr.mxu0 0.0
    %1685 = vmatpush1.msra.mxu0 0.0
    %1686 = vmatprep.subr.mxu0 0.0
    %1687 = vmatpush1.msra.mxu0 0.0
    %1688 = vmatprep.subr.mxu0 0.0
    %1689 = vmatpush1.msra.mxu0 0.0
    %1690 = vmatprep.subr.mxu0 0.0
    %1691 = vmatpush1.msra.mxu0 0.0
    %1692 = vmatprep.subr.mxu0 0.0
    %1693 = vmatpush1.msra.mxu0 0.0
    %1694 = vmatprep.subr.mxu0 0.0
    %1695 = vmatpush1.msra.mxu0 0.0
    %1696 = vmatprep.subr.mxu0 0.0
    %1697 = vmatpush1.msra.mxu0 0.0
    %1698 = vmatprep.subr.mxu0 0.0
    %1699 = vmatpush1.msra.mxu0 0.0
    %1700 = vmatprep.subr.mxu0 0.0
    %1701 = vmatpush1.msra.mxu0 0.0
    %1702 = vmatprep.subr.mxu0 0.0
    %1703 = vmatpush1.msra.mxu0 0.0
    %1704 = vmatprep.mubr.f32.mxu0 0.0
    %1705 = vmatmul.mubr.f32.gmra.mrb[0].mxu0 %v1638
    %v1706 = vpop.f32.mrb[0].mxu0
    %v1707 = vadd.f32 0.0, %v1706
    %v1708 = vpop.f32.mrb[0].mxu0
    %1709 = vdwg.mxu0
    %v1710 = vadd.f32 %v1208, %v1707
    %v1711 = vxor.u32 %v1710, 2147483648
    %v1712 = vmul.f32 %v1711, 1.442695
    %v1713 = vpow.pop %v1712
    %v1714 = vadd.f32 %v1713, 1.0
    %v1715 = vrcp.pop %v1714
    %v1716 = vmul.f32 1.0, %v1715
    %v1717 = vtanh.pop %v1710
    %v1718 = vmul.f32 %v1716, %v1621
    %1720 = vrot.lane.b32.xlu0 %v1717, 32
    %v1721 = vpop.permute.xlu0 %1720
    %v1723 = vmul.f32 %v1716, %v1721
    %1725 = vrot.lane.b32.xlu0 %v1723, 32
    %v1726 = vpop.permute.xlu0 %1725
    %v1728 = vadd.f32 %v1718, %v1726
    %v1729 = vtanh.pop %v1728
    %1731 = vrot.lane.b32.xlu0 %v1729, 32
    %v1732 = vpop.permute.xlu0 %1731
    %v1734 = vmul.f32 %v1716, %v1732
    %1736 = vrot.lane.b32.xlu0 %v1734, 64
    %v1737 = vpop.permute.xlu0 %1736
    %1739 = vrot.lane.b32.xlu0 %v1734, 96
    %v1740 = vpop.permute.xlu0 %1739
    %v1742 = vsel %vm342, %v1737, %v1740
    %v1743 = vmul.f32 %v1742, %v49
    %v1745 = vsel %vm236, %v1743, 0
    %1747 = vmatprep.subr.mxu0 0.0
    %1748 = vmatpush1.msra.mxu0 %v58
    %1749 = vmatprep.subr.mxu0 0.0
    %1750 = vmatpush1.msra.mxu0 %v59
    %1751 = vmatprep.subr.mxu0 0.0
    %1752 = vmatpush1.msra.mxu0 %v60
    %1753 = vmatprep.subr.mxu0 0.0
    %1754 = vmatpush1.msra.mxu0 %v61
    %1755 = vmatprep.subr.mxu0 0.0
    %1756 = vmatpush1.msra.mxu0 %v62
    %1757 = vmatprep.subr.mxu0 0.0
    %1758 = vmatpush1.msra.mxu0 %v63
    %1759 = vmatprep.subr.mxu0 0.0
    %1760 = vmatpush1.msra.mxu0 %v64
    %1761 = vmatprep.subr.mxu0 0.0
    %1762 = vmatpush1.msra.mxu0 %v65
    %1763 = vmatprep.subr.mxu0 0.0
    %1764 = vmatpush1.msra.mxu0 0.0
    %1765 = vmatprep.subr.mxu0 0.0
    %1766 = vmatpush1.msra.mxu0 0.0
    %1767 = vmatprep.subr.mxu0 0.0
    %1768 = vmatpush1.msra.mxu0 0.0
    %1769 = vmatprep.subr.mxu0 0.0
    %1770 = vmatpush1.msra.mxu0 0.0
    %1771 = vmatprep.subr.mxu0 0.0
    %1772 = vmatpush1.msra.mxu0 0.0
    %1773 = vmatprep.subr.mxu0 0.0
    %1774 = vmatpush1.msra.mxu0 0.0
    %1775 = vmatprep.subr.mxu0 0.0
    %1776 = vmatpush1.msra.mxu0 0.0
    %1777 = vmatprep.subr.mxu0 0.0
    %1778 = vmatpush1.msra.mxu0 0.0
    %1779 = vmatprep.subr.mxu0 0.0
    %1780 = vmatpush1.msra.mxu0 0.0
    %1781 = vmatprep.subr.mxu0 0.0
    %1782 = vmatpush1.msra.mxu0 0.0
    %1783 = vmatprep.subr.mxu0 0.0
    %1784 = vmatpush1.msra.mxu0 0.0
    %1785 = vmatprep.subr.mxu0 0.0
    %1786 = vmatpush1.msra.mxu0 0.0
    %1787 = vmatprep.subr.mxu0 0.0
    %1788 = vmatpush1.msra.mxu0 0.0
    %1789 = vmatprep.subr.mxu0 0.0
    %1790 = vmatpush1.msra.mxu0 0.0
    %1791 = vmatprep.subr.mxu0 0.0
    %1792 = vmatpush1.msra.mxu0 0.0
    %1793 = vmatprep.subr.mxu0 0.0
    %1794 = vmatpush1.msra.mxu0 0.0
    %1795 = vmatprep.subr.mxu0 0.0
    %1796 = vmatpush1.msra.mxu0 0.0
    %1797 = vmatprep.subr.mxu0 0.0
    %1798 = vmatpush1.msra.mxu0 0.0
    %1799 = vmatprep.subr.mxu0 0.0
    %1800 = vmatpush1.msra.mxu0 0.0
    %1801 = vmatprep.subr.mxu0 0.0
    %1802 = vmatpush1.msra.mxu0 0.0
    %1803 = vmatprep.subr.mxu0 0.0
    %1804 = vmatpush1.msra.mxu0 0.0
    %1805 = vmatprep.subr.mxu0 0.0
    %1806 = vmatpush1.msra.mxu0 0.0
    %1807 = vmatprep.subr.mxu0 0.0
    %1808 = vmatpush1.msra.mxu0 0.0
    %1809 = vmatprep.subr.mxu0 0.0
    %1810 = vmatpush1.msra.mxu0 0.0
    %1811 = vmatprep.mubr.f32.mxu0 0.0
    %1812 = vmatmul.mubr.f32.gmra.mrb[0].mxu0 %v1745
    %v1813 = vpop.f32.mrb[0].mxu0
    %v1814 = vadd.f32 0.0, %v1813
    %v1815 = vpop.f32.mrb[0].mxu0
    %1816 = vdwg.mxu0
    %v1817 = vadd.f32 %v1209, %v1814
    %v1818 = vxor.u32 %v1817, 2147483648
    %v1819 = vmul.f32 %v1818, 1.442695
    %v1820 = vpow.pop %v1819
    %v1821 = vadd.f32 %v1820, 1.0
    %v1822 = vrcp.pop %v1821
    %v1823 = vmul.f32 1.0, %v1822
    %v1824 = vtanh.pop %v1817
    %v1825 = vmul.f32 %v1823, %v1728
    %1827 = vrot.lane.b32.xlu0 %v1824, 32
    %v1828 = vpop.permute.xlu0 %1827
    %v1830 = vmul.f32 %v1823, %v1828
    %1832 = vrot.lane.b32.xlu0 %v1830, 32
    %v1833 = vpop.permute.xlu0 %1832
    %v1835 = vadd.f32 %v1825, %v1833
    %v1836 = vtanh.pop %v1835
    %1838 = vrot.lane.b32.xlu0 %v1836, 32
    %v1839 = vpop.permute.xlu0 %1838
    %v1841 = vmul.f32 %v1823, %v1839
    %1843 = vrot.lane.b32.xlu0 %v1841, 64
    %v1844 = vpop.permute.xlu0 %1843
    %1846 = vrot.lane.b32.xlu0 %v1841, 96
    %v1847 = vpop.permute.xlu0 %1846
    %v1849 = vsel %vm342, %v1844, %v1847
    %v1850 = vmul.f32 %v1849, %v49
    %v1852 = vsel %vm236, %v1850, 0
    %1854 = vmatprep.subr.mxu0 0.0
    %1855 = vmatpush1.msra.mxu0 %v58
    %1856 = vmatprep.subr.mxu0 0.0
    %1857 = vmatpush1.msra.mxu0 %v59
    %1858 = vmatprep.subr.mxu0 0.0
    %1859 = vmatpush1.msra.mxu0 %v60
    %1860 = vmatprep.subr.mxu0 0.0
    %1861 = vmatpush1.msra.mxu0 %v61
    %1862 = vmatprep.subr.mxu0 0.0
    %1863 = vmatpush1.msra.mxu0 %v62
    %1864 = vmatprep.subr.mxu0 0.0
    %1865 = vmatpush1.msra.mxu0 %v63
    %1866 = vmatprep.subr.mxu0 0.0
    %1867 = vmatpush1.msra.mxu0 %v64
    %1868 = vmatprep.subr.mxu0 0.0
    %1869 = vmatpush1.msra.mxu0 %v65
    %1870 = vmatprep.subr.mxu0 0.0
    %1871 = vmatpush1.msra.mxu0 0.0
    %1872 = vmatprep.subr.mxu0 0.0
    %1873 = vmatpush1.msra.mxu0 0.0
    %1874 = vmatprep.subr.mxu0 0.0
    %1875 = vmatpush1.msra.mxu0 0.0
    %1876 = vmatprep.subr.mxu0 0.0
    %1877 = vmatpush1.msra.mxu0 0.0
    %1878 = vmatprep.subr.mxu0 0.0
    %1879 = vmatpush1.msra.mxu0 0.0
    %1880 = vmatprep.subr.mxu0 0.0
    %1881 = vmatpush1.msra.mxu0 0.0
    %1882 = vmatprep.subr.mxu0 0.0
    %1883 = vmatpush1.msra.mxu0 0.0
    %1884 = vmatprep.subr.mxu0 0.0
    %1885 = vmatpush1.msra.mxu0 0.0
    %1886 = vmatprep.subr.mxu0 0.0
    %1887 = vmatpush1.msra.mxu0 0.0
    %1888 = vmatprep.subr.mxu0 0.0
    %1889 = vmatpush1.msra.mxu0 0.0
    %1890 = vmatprep.subr.mxu0 0.0
    %1891 = vmatpush1.msra.mxu0 0.0
    %1892 = vmatprep.subr.mxu0 0.0
    %1893 = vmatpush1.msra.mxu0 0.0
    %1894 = vmatprep.subr.mxu0 0.0
    %1895 = vmatpush1.msra.mxu0 0.0
    %1896 = vmatprep.subr.mxu0 0.0
    %1897 = vmatpush1.msra.mxu0 0.0
    %1898 = vmatprep.subr.mxu0 0.0
    %1899 = vmatpush1.msra.mxu0 0.0
    %1900 = vmatprep.subr.mxu0 0.0
    %1901 = vmatpush1.msra.mxu0 0.0
    %1902 = vmatprep.subr.mxu0 0.0
    %1903 = vmatpush1.msra.mxu0 0.0
    %1904 = vmatprep.subr.mxu0 0.0
    %1905 = vmatpush1.msra.mxu0 0.0
    %1906 = vmatprep.subr.mxu0 0.0
    %1907 = vmatpush1.msra.mxu0 0.0
    %1908 = vmatprep.subr.mxu0 0.0
    %1909 = vmatpush1.msra.mxu0 0.0
    %1910 = vmatprep.subr.mxu0 0.0
    %1911 = vmatpush1.msra.mxu0 0.0
    %1912 = vmatprep.subr.mxu0 0.0
    %1913 = vmatpush1.msra.mxu0 0.0
    %1914 = vmatprep.subr.mxu0 0.0
    %1915 = vmatpush1.msra.mxu0 0.0
    %1916 = vmatprep.subr.mxu0 0.0
    %1917 = vmatpush1.msra.mxu0 0.0
    %1918 = vmatprep.mubr.f32.mxu0 0.0
    %1919 = vmatmul.mubr.f32.gmra.mrb[0].mxu0 %v1852
    %v1920 = vpop.f32.mrb[0].mxu0
    %v1921 = vadd.f32 0.0, %v1920
    %v1922 = vpop.f32.mrb[0].mxu0
    %1923 = vdwg.mxu0
    %v1924 = vadd.f32 %v1210, %v1921
    %v1925 = vxor.u32 %v1924, 2147483648
    %v1926 = vmul.f32 %v1925, 1.442695
    %v1927 = vpow.pop %v1926
    %v1928 = vadd.f32 %v1927, 1.0
    %v1929 = vrcp.pop %v1928
    %v1930 = vmul.f32 1.0, %v1929
    %v1931 = vtanh.pop %v1924
    %v1932 = vmul.f32 %v1930, %v1835
    %1934 = vrot.lane.b32.xlu0 %v1931, 32
    %v1935 = vpop.permute.xlu0 %1934
    %v1937 = vmul.f32 %v1930, %v1935
    %1939 = vrot.lane.b32.xlu0 %v1937, 32
    %v1940 = vpop.permute.xlu0 %1939
    %v1942 = vadd.f32 %v1932, %v1940
    %v1943 = vtanh.pop %v1942
    %1945 = vrot.lane.b32.xlu0 %v1943, 32
    %v1946 = vpop.permute.xlu0 %1945
    %v1948 = vmul.f32 %v1930, %v1946
    %1950 = vrot.lane.b32.xlu0 %v1948, 64
    %v1951 = vpop.permute.xlu0 %1950
    %1953 = vrot.lane.b32.xlu0 %v1948, 96
    %v1954 = vpop.permute.xlu0 %1953
    %v1956 = vsel %vm342, %v1951, %v1954
    %v1957 = vmul.f32 %v1956, %v49
    %v1959 = vsel %vm236, %v1957, 0
    %1961 = vmatprep.subr.mxu0 0.0
    %1962 = vmatpush1.msra.mxu0 %v58
    %1963 = vmatprep.subr.mxu0 0.0
    %1964 = vmatpush1.msra.mxu0 %v59
    %1965 = vmatprep.subr.mxu0 0.0
    %1966 = vmatpush1.msra.mxu0 %v60
    %1967 = vmatprep.subr.mxu0 0.0
    %1968 = vmatpush1.msra.mxu0 %v61
    %1969 = vmatprep.subr.mxu0 0.0
    %1970 = vmatpush1.msra.mxu0 %v62
    %1971 = vmatprep.subr.mxu0 0.0
    %1972 = vmatpush1.msra.mxu0 %v63
    %1973 = vmatprep.subr.mxu0 0.0
    %1974 = vmatpush1.msra.mxu0 %v64
    %1975 = vmatprep.subr.mxu0 0.0
    %1976 = vmatpush1.msra.mxu0 %v65
    %1977 = vmatprep.subr.mxu0 0.0
    %1978 = vmatpush1.msra.mxu0 0.0
    %1979 = vmatprep.subr.mxu0 0.0
    %1980 = vmatpush1.msra.mxu0 0.0
    %1981 = vmatprep.subr.mxu0 0.0
    %1982 = vmatpush1.msra.mxu0 0.0
    %1983 = vmatprep.subr.mxu0 0.0
    %1984 = vmatpush1.msra.mxu0 0.0
    %1985 = vmatprep.subr.mxu0 0.0
    %1986 = vmatpush1.msra.mxu0 0.0
    %1987 = vmatprep.subr.mxu0 0.0
    %1988 = vmatpush1.msra.mxu0 0.0
    %1989 = vmatprep.subr.mxu0 0.0
    %1990 = vmatpush1.msra.mxu0 0.0
    %1991 = vmatprep.subr.mxu0 0.0
    %1992 = vmatpush1.msra.mxu0 0.0
    %1993 = vmatprep.subr.mxu0 0.0
    %1994 = vmatpush1.msra.mxu0 0.0
    %1995 = vmatprep.subr.mxu0 0.0
    %1996 = vmatpush1.msra.mxu0 0.0
    %1997 = vmatprep.subr.mxu0 0.0
    %1998 = vmatpush1.msra.mxu0 0.0
    %1999 = vmatprep.subr.mxu0 0.0
    %2000 = vmatpush1.msra.mxu0 0.0
    %2001 = vmatprep.subr.mxu0 0.0
    %2002 = vmatpush1.msra.mxu0 0.0
    %2003 = vmatprep.subr.mxu0 0.0
    %2004 = vmatpush1.msra.mxu0 0.0
    %2005 = vmatprep.subr.mxu0 0.0
    %2006 = vmatpush1.msra.mxu0 0.0
    %2007 = vmatprep.subr.mxu0 0.0
    %2008 = vmatpush1.msra.mxu0 0.0
    %2009 = vmatprep.subr.mxu0 0.0
    %2010 = vmatpush1.msra.mxu0 0.0
    %2011 = vmatprep.subr.mxu0 0.0
    %2012 = vmatpush1.msra.mxu0 0.0
    %2013 = vmatprep.subr.mxu0 0.0
    %2014 = vmatpush1.msra.mxu0 0.0
    %2015 = vmatprep.subr.mxu0 0.0
    %2016 = vmatpush1.msra.mxu0 0.0
    %2017 = vmatprep.subr.mxu0 0.0
    %2018 = vmatpush1.msra.mxu0 0.0
    %2019 = vmatprep.subr.mxu0 0.0
    %2020 = vmatpush1.msra.mxu0 0.0
    %2021 = vmatprep.subr.mxu0 0.0
    %2022 = vmatpush1.msra.mxu0 0.0
    %2023 = vmatprep.subr.mxu0 0.0
    %2024 = vmatpush1.msra.mxu0 0.0
    %2025 = vmatprep.mubr.f32.mxu0 0.0
    %2026 = vmatmul.mubr.f32.gmra.mrb[0].mxu0 %v1959
    %v2027 = vpop.f32.mrb[0].mxu0
    %v2028 = vadd.f32 0.0, %v2027
    %v2029 = vpop.f32.mrb[0].mxu0
    %2030 = vdwg.mxu0
    %v2031 = vadd.f32 %v1211, %v2028
    %v2032 = vxor.u32 %v2031, 2147483648
    %v2033 = vmul.f32 %v2032, 1.442695
    %v2034 = vpow.pop %v2033
    %v2035 = vadd.f32 %v2034, 1.0
    %v2036 = vrcp.pop %v2035
    %v2037 = vmul.f32 1.0, %v2036
    %v2038 = vtanh.pop %v2031
    %v2039 = vmul.f32 %v2037, %v1942
    %2041 = vrot.lane.b32.xlu0 %v2038, 32
    %v2042 = vpop.permute.xlu0 %2041
    %v2044 = vmul.f32 %v2037, %v2042
    %2046 = vrot.lane.b32.xlu0 %v2044, 32
    %v2047 = vpop.permute.xlu0 %2046
    %v2049 = vadd.f32 %v2039, %v2047
    %v2050 = vtanh.pop %v2049
    %2052 = vrot.lane.b32.xlu0 %v2050, 32
    %v2053 = vpop.permute.xlu0 %2052
    %v2055 = vmul.f32 %v2037, %v2053
    %2057 = vrot.lane.b32.xlu0 %v2055, 64
    %v2058 = vpop.permute.xlu0 %2057
    %2060 = vrot.lane.b32.xlu0 %v2055, 96
    %v2061 = vpop.permute.xlu0 %2060
    %v2063 = vsel %vm342, %v2058, %v2061
    %v2064 = vmul.f32 %v2063, %v49
    %v2066 = vcombine.low %v1315, %v1422
    %v2067 = vcombine.low %v1529, %v1636
    %v2068 = vcombine.low %v1743, %v1850
    %v2069 = vcombine.low %v1957, %v2064
    %v2070 = vsel %vm236, %v2066, 0
    %v2072 = vsel %vm236, %v2067, 0
    %v2074 = vsel %vm236, %v2068, 0
    %v2076 = vsel %vm236, %v2069, 0
    %2078 = vmatprep.subr.mxu0 0.0
    %2079 = vmatpush1.msra.mxu0 %v82
    %2080 = vmatprep.subr.mxu0 0.0
    %2081 = vmatpush1.msra.mxu0 %v83
    %2082 = vmatprep.subr.mxu0 0.0
    %2083 = vmatpush1.msra.mxu0 %v84
    %2084 = vmatprep.subr.mxu0 0.0
    %2085 = vmatpush1.msra.mxu0 %v85
    %2086 = vmatprep.subr.mxu0 0.0
    %2087 = vmatpush1.msra.mxu0 %v86
    %2088 = vmatprep.subr.mxu0 0.0
    %2089 = vmatpush1.msra.mxu0 %v87
    %2090 = vmatprep.subr.mxu0 0.0
    %2091 = vmatpush1.msra.mxu0 %v88
    %2092 = vmatprep.subr.mxu0 0.0
    %2093 = vmatpush1.msra.mxu0 %v89
    %2094 = vmatprep.subr.mxu0 0.0
    %2095 = vmatpush1.msra.mxu0 0.0
    %2096 = vmatprep.subr.mxu0 0.0
    %2097 = vmatpush1.msra.mxu0 0.0
    %2098 = vmatprep.subr.mxu0 0.0
    %2099 = vmatpush1.msra.mxu0 0.0
    %2100 = vmatprep.subr.mxu0 0.0
    %2101 = vmatpush1.msra.mxu0 0.0
    %2102 = vmatprep.subr.mxu0 0.0
    %2103 = vmatpush1.msra.mxu0 0.0
    %2104 = vmatprep.subr.mxu0 0.0
    %2105 = vmatpush1.msra.mxu0 0.0
    %2106 = vmatprep.subr.mxu0 0.0
    %2107 = vmatpush1.msra.mxu0 0.0
    %2108 = vmatprep.subr.mxu0 0.0
    %2109 = vmatpush1.msra.mxu0 0.0
    %2110 = vmatprep.subr.mxu0 0.0
    %2111 = vmatpush1.msra.mxu0 0.0
    %2112 = vmatprep.subr.mxu0 0.0
    %2113 = vmatpush1.msra.mxu0 0.0
    %2114 = vmatprep.subr.mxu0 0.0
    %2115 = vmatpush1.msra.mxu0 0.0
    %2116 = vmatprep.subr.mxu0 0.0
    %2117 = vmatpush1.msra.mxu0 0.0
    %2118 = vmatprep.subr.mxu0 0.0
    %2119 = vmatpush1.msra.mxu0 0.0
    %2120 = vmatprep.subr.mxu0 0.0
    %2121 = vmatpush1.msra.mxu0 0.0
    %2122 = vmatprep.subr.mxu0 0.0
    %2123 = vmatpush1.msra.mxu0 0.0
    %2124 = vmatprep.subr.mxu0 0.0
    %2125 = vmatpush1.msra.mxu0 0.0
    %2126 = vmatprep.subr.mxu0 0.0
    %2127 = vmatpush1.msra.mxu0 0.0
    %2128 = vmatprep.subr.mxu0 0.0
    %2129 = vmatpush1.msra.mxu0 0.0
    %2130 = vmatprep.subr.mxu0 0.0
    %2131 = vmatpush1.msra.mxu0 0.0
    %2132 = vmatprep.subr.mxu0 0.0
    %2133 = vmatpush1.msra.mxu0 0.0
    %2134 = vmatprep.subr.mxu0 0.0
    %2135 = vmatpush1.msra.mxu0 0.0
    %2136 = vmatprep.subr.mxu0 0.0
    %2137 = vmatpush1.msra.mxu0 0.0
    %2138 = vmatprep.subr.mxu0 0.0
    %2139 = vmatpush1.msra.mxu0 0.0
    %2140 = vmatprep.subr.mxu0 0.0
    %2141 = vmatpush1.msra.mxu0 0.0
    %2142 = vmatprep.mubr.f32.mxu0 0.0
    %2143 = vmatmul.mubr.f32.gmra.mrb[0].mxu0 %v2070
    %v2144 = vpop.f32.mrb[0].mxu0
    %v2145 = vadd.f32 0.0, %v2144
    %v2146 = vpop.f32.mrb[0].mxu0
    %2147 = vmatprep.mubr.f32.mxu0 0.0
    %2148 = vmatmul.mubr.f32.gmra.mrb[0].mxu0 %v2072
    %v2149 = vpop.f32.mrb[0].mxu0
    %v2150 = vadd.f32 0.0, %v2149
    %v2151 = vpop.f32.mrb[0].mxu0
    %2152 = vmatprep.mubr.f32.mxu0 0.0
    %2153 = vmatmul.mubr.f32.gmra.mrb[0].mxu0 %v2074
    %v2154 = vpop.f32.mrb[0].mxu0
    %v2155 = vadd.f32 0.0, %v2154
    %v2156 = vpop.f32.mrb[0].mxu0
    %2157 = vmatprep.mubr.f32.mxu0 0.0
    %2158 = vmatmul.mubr.f32.gmra.mrb[0].mxu0 %v2076
    %v2159 = vpop.f32.mrb[0].mxu0
    %v2160 = vadd.f32 0.0, %v2159
    %v2161 = vpop.f32.mrb[0].mxu0
    %2162 = vdwg.mxu0
    %v2167 = vcombine.high %v2145, %v2145
    %v2168 = vcombine.high %v2150, %v2150
    %v2169 = vcombine.high %v2155, %v2155
    %v2170 = vcombine.high %v2160, %v2160
    %v2175 = vadd.f32 %v2145, %v92
    %v2176 = vadd.f32 %v2167, %v92
    %v2177 = vadd.f32 %v2150, %v92
    %v2178 = vadd.f32 %v2168, %v92
    %v2179 = vadd.f32 %v2155, %v92
    %v2180 = vadd.f32 %v2169, %v92
    %v2181 = vadd.f32 %v2160, %v92
    %v2182 = vadd.f32 %v2170, %v92
    %2183 = vmatprep.subr.mxu0 0.0
    %2184 = vmatpush1.msra.mxu0 %v66
    %2185 = vmatprep.subr.mxu0 0.0
    %2186 = vmatpush1.msra.mxu0 %v67
    %2187 = vmatprep.subr.mxu0 0.0
    %2188 = vmatpush1.msra.mxu0 %v68
    %2189 = vmatprep.subr.mxu0 0.0
    %2190 = vmatpush1.msra.mxu0 %v69
    %2191 = vmatprep.subr.mxu0 0.0
    %2192 = vmatpush1.msra.mxu0 %v70
    %2193 = vmatprep.subr.mxu0 0.0
    %2194 = vmatpush1.msra.mxu0 %v71
    %2195 = vmatprep.subr.mxu0 0.0
    %2196 = vmatpush1.msra.mxu0 %v72
    %2197 = vmatprep.subr.mxu0 0.0
    %2198 = vmatpush1.msra.mxu0 %v73
    %2199 = vmatprep.subr.mxu0 0.0
    %2200 = vmatpush1.msra.mxu0 0.0
    %2201 = vmatprep.subr.mxu0 0.0
    %2202 = vmatpush1.msra.mxu0 0.0
    %2203 = vmatprep.subr.mxu0 0.0
    %2204 = vmatpush1.msra.mxu0 0.0
    %2205 = vmatprep.subr.mxu0 0.0
    %2206 = vmatpush1.msra.mxu0 0.0
    %2207 = vmatprep.subr.mxu0 0.0
    %2208 = vmatpush1.msra.mxu0 0.0
    %2209 = vmatprep.subr.mxu0 0.0
    %2210 = vmatpush1.msra.mxu0 0.0
    %2211 = vmatprep.subr.mxu0 0.0
    %2212 = vmatpush1.msra.mxu0 0.0
    %2213 = vmatprep.subr.mxu0 0.0
    %2214 = vmatpush1.msra.mxu0 0.0
    %2215 = vmatprep.subr.mxu0 0.0
    %2216 = vmatpush1.msra.mxu0 0.0
    %2217 = vmatprep.subr.mxu0 0.0
    %2218 = vmatpush1.msra.mxu0 0.0
    %2219 = vmatprep.subr.mxu0 0.0
    %2220 = vmatpush1.msra.mxu0 0.0
    %2221 = vmatprep.subr.mxu0 0.0
    %2222 = vmatpush1.msra.mxu0 0.0
    %2223 = vmatprep.subr.mxu0 0.0
    %2224 = vmatpush1.msra.mxu0 0.0
    %2225 = vmatprep.subr.mxu0 0.0
    %2226 = vmatpush1.msra.mxu0 0.0
    %2227 = vmatprep.subr.mxu0 0.0
    %2228 = vmatpush1.msra.mxu0 0.0
    %2229 = vmatprep.subr.mxu0 0.0
    %2230 = vmatpush1.msra.mxu0 0.0
    %2231 = vmatprep.subr.mxu0 0.0
    %2232 = vmatpush1.msra.mxu0 0.0
    %2233 = vmatprep.subr.mxu0 0.0
    %2234 = vmatpush1.msra.mxu0 0.0
    %2235 = vmatprep.subr.mxu0 0.0
    %2236 = vmatpush1.msra.mxu0 0.0
    %2237 = vmatprep.subr.mxu0 0.0
    %2238 = vmatpush1.msra.mxu0 0.0
    %2239 = vmatprep.subr.mxu0 0.0
    %2240 = vmatpush1.msra.mxu0 0.0
    %2241 = vmatprep.subr.mxu0 0.0
    %2242 = vmatpush1.msra.mxu0 0.0
    %2243 = vmatprep.subr.mxu0 0.0
    %2244 = vmatpush1.msra.mxu0 0.0
    %2245 = vmatprep.subr.mxu0 0.0
    %2246 = vmatpush1.msra.mxu0 0.0
    %2247 = vmatprep.mubr.f32.mxu0 0.0
    %2248 = vmatmul.mubr.f32.gmra.mrb[0].mxu0 %v238
    %v2249 = vpop.f32.mrb[0].mxu0
    %v2250 = vadd.f32 0.0, %v2249
    %v2251 = vpop.f32.mrb[0].mxu0
    %2252 = vdwg.mxu0
    %v2253 = vadd.f32 %v2175, %v2250
    %v2254 = vxor.u32 %v2253, 2147483648
    %v2255 = vmul.f32 %v2254, 1.442695
    %v2256 = vpow.pop %v2255
    %v2257 = vadd.f32 %v2256, 1.0
    %v2258 = vrcp.pop %v2257
    %v2259 = vmul.f32 1.0, %v2258
    %v2260 = vtanh.pop %v2253
    %v2261 = vmul.f32 %v2259, 0.0
    %2263 = vrot.lane.b32.xlu0 %v2260, 32
    %v2264 = vpop.permute.xlu0 %2263
    %v2266 = vmul.f32 %v2259, %v2264
    %2268 = vrot.lane.b32.xlu0 %v2266, 32
    %v2269 = vpop.permute.xlu0 %2268
    %v2271 = vadd.f32 %v2261, %v2269
    %v2272 = vtanh.pop %v2271
    %2274 = vrot.lane.b32.xlu0 %v2272, 32
    %v2275 = vpop.permute.xlu0 %2274
    %v2277 = vmul.f32 %v2259, %v2275
    %2279 = vrot.lane.b32.xlu0 %v2277, 64
    %v2280 = vpop.permute.xlu0 %2279
    %2282 = vrot.lane.b32.xlu0 %v2277, 96
    %v2283 = vpop.permute.xlu0 %2282
    %v2285 = vsel %vm342, %v2280, %v2283
    %v2286 = vmul.f32 %v2285, %v49
    %v2288 = vsel %vm236, %v2286, 0
    %2290 = vmatprep.subr.mxu0 0.0
    %2291 = vmatpush1.msra.mxu0 %v66
    %2292 = vmatprep.subr.mxu0 0.0
    %2293 = vmatpush1.msra.mxu0 %v67
    %2294 = vmatprep.subr.mxu0 0.0
    %2295 = vmatpush1.msra.mxu0 %v68
    %2296 = vmatprep.subr.mxu0 0.0
    %2297 = vmatpush1.msra.mxu0 %v69
    %2298 = vmatprep.subr.mxu0 0.0
    %2299 = vmatpush1.msra.mxu0 %v70
    %2300 = vmatprep.subr.mxu0 0.0
    %2301 = vmatpush1.msra.mxu0 %v71
    %2302 = vmatprep.subr.mxu0 0.0
    %2303 = vmatpush1.msra.mxu0 %v72
    %2304 = vmatprep.subr.mxu0 0.0
    %2305 = vmatpush1.msra.mxu0 %v73
    %2306 = vmatprep.subr.mxu0 0.0
    %2307 = vmatpush1.msra.mxu0 0.0
    %2308 = vmatprep.subr.mxu0 0.0
    %2309 = vmatpush1.msra.mxu0 0.0
    %2310 = vmatprep.subr.mxu0 0.0
    %2311 = vmatpush1.msra.mxu0 0.0
    %2312 = vmatprep.subr.mxu0 0.0
    %2313 = vmatpush1.msra.mxu0 0.0
    %2314 = vmatprep.subr.mxu0 0.0
    %2315 = vmatpush1.msra.mxu0 0.0
    %2316 = vmatprep.subr.mxu0 0.0
    %2317 = vmatpush1.msra.mxu0 0.0
    %2318 = vmatprep.subr.mxu0 0.0
    %2319 = vmatpush1.msra.mxu0 0.0
    %2320 = vmatprep.subr.mxu0 0.0
    %2321 = vmatpush1.msra.mxu0 0.0
    %2322 = vmatprep.subr.mxu0 0.0
    %2323 = vmatpush1.msra.mxu0 0.0
    %2324 = vmatprep.subr.mxu0 0.0
    %2325 = vmatpush1.msra.mxu0 0.0
    %2326 = vmatprep.subr.mxu0 0.0
    %2327 = vmatpush1.msra.mxu0 0.0
    %2328 = vmatprep.subr.mxu0 0.0
    %2329 = vmatpush1.msra.mxu0 0.0
    %2330 = vmatprep.subr.mxu0 0.0
    %2331 = vmatpush1.msra.mxu0 0.0
    %2332 = vmatprep.subr.mxu0 0.0
    %2333 = vmatpush1.msra.mxu0 0.0
    %2334 = vmatprep.subr.mxu0 0.0
    %2335 = vmatpush1.msra.mxu0 0.0
    %2336 = vmatprep.subr.mxu0 0.0
    %2337 = vmatpush1.msra.mxu0 0.0
    %2338 = vmatprep.subr.mxu0 0.0
    %2339 = vmatpush1.msra.mxu0 0.0
    %2340 = vmatprep.subr.mxu0 0.0
    %2341 = vmatpush1.msra.mxu0 0.0
    %2342 = vmatprep.subr.mxu0 0.0
    %2343 = vmatpush1.msra.mxu0 0.0
    %2344 = vmatprep.subr.mxu0 0.0
    %2345 = vmatpush1.msra.mxu0 0.0
    %2346 = vmatprep.subr.mxu0 0.0
    %2347 = vmatpush1.msra.mxu0 0.0
    %2348 = vmatprep.subr.mxu0 0.0
    %2349 = vmatpush1.msra.mxu0 0.0
    %2350 = vmatprep.subr.mxu0 0.0
    %2351 = vmatpush1.msra.mxu0 0.0
    %2352 = vmatprep.subr.mxu0 0.0
    %2353 = vmatpush1.msra.mxu0 0.0
    %2354 = vmatprep.mubr.f32.mxu0 0.0
    %2355 = vmatmul.mubr.f32.gmra.mrb[0].mxu0 %v2288
    %v2356 = vpop.f32.mrb[0].mxu0
    %v2357 = vadd.f32 0.0, %v2356
    %v2358 = vpop.f32.mrb[0].mxu0
    %2359 = vdwg.mxu0
    %v2360 = vadd.f32 %v2176, %v2357
    %v2361 = vxor.u32 %v2360, 2147483648
    %v2362 = vmul.f32 %v2361, 1.442695
    %v2363 = vpow.pop %v2362
    %v2364 = vadd.f32 %v2363, 1.0
    %v2365 = vrcp.pop %v2364
    %v2366 = vmul.f32 1.0, %v2365
    %v2367 = vtanh.pop %v2360
    %v2368 = vmul.f32 %v2366, %v2271
    %2370 = vrot.lane.b32.xlu0 %v2367, 32
    %v2371 = vpop.permute.xlu0 %2370
    %v2373 = vmul.f32 %v2366, %v2371
    %2375 = vrot.lane.b32.xlu0 %v2373, 32
    %v2376 = vpop.permute.xlu0 %2375
    %v2378 = vadd.f32 %v2368, %v2376
    %v2379 = vtanh.pop %v2378
    %2381 = vrot.lane.b32.xlu0 %v2379, 32
    %v2382 = vpop.permute.xlu0 %2381
    %v2384 = vmul.f32 %v2366, %v2382
    %2386 = vrot.lane.b32.xlu0 %v2384, 64
    %v2387 = vpop.permute.xlu0 %2386
    %2389 = vrot.lane.b32.xlu0 %v2384, 96
    %v2390 = vpop.permute.xlu0 %2389
    %v2392 = vsel %vm342, %v2387, %v2390
    %v2393 = vmul.f32 %v2392, %v49
    %v2395 = vsel %vm236, %v2393, 0
    %2397 = vmatprep.subr.mxu0 0.0
    %2398 = vmatpush1.msra.mxu0 %v66
    %2399 = vmatprep.subr.mxu0 0.0
    %2400 = vmatpush1.msra.mxu0 %v67
    %2401 = vmatprep.subr.mxu0 0.0
    %2402 = vmatpush1.msra.mxu0 %v68
    %2403 = vmatprep.subr.mxu0 0.0
    %2404 = vmatpush1.msra.mxu0 %v69
    %2405 = vmatprep.subr.mxu0 0.0
    %2406 = vmatpush1.msra.mxu0 %v70
    %2407 = vmatprep.subr.mxu0 0.0
    %2408 = vmatpush1.msra.mxu0 %v71
    %2409 = vmatprep.subr.mxu0 0.0
    %2410 = vmatpush1.msra.mxu0 %v72
    %2411 = vmatprep.subr.mxu0 0.0
    %2412 = vmatpush1.msra.mxu0 %v73
    %2413 = vmatprep.subr.mxu0 0.0
    %2414 = vmatpush1.msra.mxu0 0.0
    %2415 = vmatprep.subr.mxu0 0.0
    %2416 = vmatpush1.msra.mxu0 0.0
    %2417 = vmatprep.subr.mxu0 0.0
    %2418 = vmatpush1.msra.mxu0 0.0
    %2419 = vmatprep.subr.mxu0 0.0
    %2420 = vmatpush1.msra.mxu0 0.0
    %2421 = vmatprep.subr.mxu0 0.0
    %2422 = vmatpush1.msra.mxu0 0.0
    %2423 = vmatprep.subr.mxu0 0.0
    %2424 = vmatpush1.msra.mxu0 0.0
    %2425 = vmatprep.subr.mxu0 0.0
    %2426 = vmatpush1.msra.mxu0 0.0
    %2427 = vmatprep.subr.mxu0 0.0
    %2428 = vmatpush1.msra.mxu0 0.0
    %2429 = vmatprep.subr.mxu0 0.0
    %2430 = vmatpush1.msra.mxu0 0.0
    %2431 = vmatprep.subr.mxu0 0.0
    %2432 = vmatpush1.msra.mxu0 0.0
    %2433 = vmatprep.subr.mxu0 0.0
    %2434 = vmatpush1.msra.mxu0 0.0
    %2435 = vmatprep.subr.mxu0 0.0
    %2436 = vmatpush1.msra.mxu0 0.0
    %2437 = vmatprep.subr.mxu0 0.0
    %2438 = vmatpush1.msra.mxu0 0.0
    %2439 = vmatprep.subr.mxu0 0.0
    %2440 = vmatpush1.msra.mxu0 0.0
    %2441 = vmatprep.subr.mxu0 0.0
    %2442 = vmatpush1.msra.mxu0 0.0
    %2443 = vmatprep.subr.mxu0 0.0
    %2444 = vmatpush1.msra.mxu0 0.0
    %2445 = vmatprep.subr.mxu0 0.0
    %2446 = vmatpush1.msra.mxu0 0.0
    %2447 = vmatprep.subr.mxu0 0.0
    %2448 = vmatpush1.msra.mxu0 0.0
    %2449 = vmatprep.subr.mxu0 0.0
    %2450 = vmatpush1.msra.mxu0 0.0
    %2451 = vmatprep.subr.mxu0 0.0
    %2452 = vmatpush1.msra.mxu0 0.0
    %2453 = vmatprep.subr.mxu0 0.0
    %2454 = vmatpush1.msra.mxu0 0.0
    %2455 = vmatprep.subr.mxu0 0.0
    %2456 = vmatpush1.msra.mxu0 0.0
    %2457 = vmatprep.subr.mxu0 0.0
    %2458 = vmatpush1.msra.mxu0 0.0
    %2459 = vmatprep.subr.mxu0 0.0
    %2460 = vmatpush1.msra.mxu0 0.0
    %2461 = vmatprep.mubr.f32.mxu0 0.0
    %2462 = vmatmul.mubr.f32.gmra.mrb[0].mxu0 %v2395
    %v2463 = vpop.f32.mrb[0].mxu0
    %v2464 = vadd.f32 0.0, %v2463
    %v2465 = vpop.f32.mrb[0].mxu0
    %2466 = vdwg.mxu0
    %v2467 = vadd.f32 %v2177, %v2464
    %v2468 = vxor.u32 %v2467, 2147483648
    %v2469 = vmul.f32 %v2468, 1.442695
    %v2470 = vpow.pop %v2469
    %v2471 = vadd.f32 %v2470, 1.0
    %v2472 = vrcp.pop %v2471
    %v2473 = vmul.f32 1.0, %v2472
    %v2474 = vtanh.pop %v2467
    %v2475 = vmul.f32 %v2473, %v2378
    %2477 = vrot.lane.b32.xlu0 %v2474, 32
    %v2478 = vpop.permute.xlu0 %2477
    %v2480 = vmul.f32 %v2473, %v2478
    %2482 = vrot.lane.b32.xlu0 %v2480, 32
    %v2483 = vpop.permute.xlu0 %2482
    %v2485 = vadd.f32 %v2475, %v2483
    %v2486 = vtanh.pop %v2485
    %2488 = vrot.lane.b32.xlu0 %v2486, 32
    %v2489 = vpop.permute.xlu0 %2488
    %v2491 = vmul.f32 %v2473, %v2489
    %2493 = vrot.lane.b32.xlu0 %v2491, 64
    %v2494 = vpop.permute.xlu0 %2493
    %2496 = vrot.lane.b32.xlu0 %v2491, 96
    %v2497 = vpop.permute.xlu0 %2496
    %v2499 = vsel %vm342, %v2494, %v2497
    %v2500 = vmul.f32 %v2499, %v49
    %v2502 = vsel %vm236, %v2500, 0
    %2504 = vmatprep.subr.mxu0 0.0
    %2505 = vmatpush1.msra.mxu0 %v66
    %2506 = vmatprep.subr.mxu0 0.0
    %2507 = vmatpush1.msra.mxu0 %v67
    %2508 = vmatprep.subr.mxu0 0.0
    %2509 = vmatpush1.msra.mxu0 %v68
    %2510 = vmatprep.subr.mxu0 0.0
    %2511 = vmatpush1.msra.mxu0 %v69
    %2512 = vmatprep.subr.mxu0 0.0
    %2513 = vmatpush1.msra.mxu0 %v70
    %2514 = vmatprep.subr.mxu0 0.0
    %2515 = vmatpush1.msra.mxu0 %v71
    %2516 = vmatprep.subr.mxu0 0.0
    %2517 = vmatpush1.msra.mxu0 %v72
    %2518 = vmatprep.subr.mxu0 0.0
    %2519 = vmatpush1.msra.mxu0 %v73
    %2520 = vmatprep.subr.mxu0 0.0
    %2521 = vmatpush1.msra.mxu0 0.0
    %2522 = vmatprep.subr.mxu0 0.0
    %2523 = vmatpush1.msra.mxu0 0.0
    %2524 = vmatprep.subr.mxu0 0.0
    %2525 = vmatpush1.msra.mxu0 0.0
    %2526 = vmatprep.subr.mxu0 0.0
    %2527 = vmatpush1.msra.mxu0 0.0
    %2528 = vmatprep.subr.mxu0 0.0
    %2529 = vmatpush1.msra.mxu0 0.0
    %2530 = vmatprep.subr.mxu0 0.0
    %2531 = vmatpush1.msra.mxu0 0.0
    %2532 = vmatprep.subr.mxu0 0.0
    %2533 = vmatpush1.msra.mxu0 0.0
    %2534 = vmatprep.subr.mxu0 0.0
    %2535 = vmatpush1.msra.mxu0 0.0
    %2536 = vmatprep.subr.mxu0 0.0
    %2537 = vmatpush1.msra.mxu0 0.0
    %2538 = vmatprep.subr.mxu0 0.0
    %2539 = vmatpush1.msra.mxu0 0.0
    %2540 = vmatprep.subr.mxu0 0.0
    %2541 = vmatpush1.msra.mxu0 0.0
    %2542 = vmatprep.subr.mxu0 0.0
    %2543 = vmatpush1.msra.mxu0 0.0
    %2544 = vmatprep.subr.mxu0 0.0
    %2545 = vmatpush1.msra.mxu0 0.0
    %2546 = vmatprep.subr.mxu0 0.0
    %2547 = vmatpush1.msra.mxu0 0.0
    %2548 = vmatprep.subr.mxu0 0.0
    %2549 = vmatpush1.msra.mxu0 0.0
    %2550 = vmatprep.subr.mxu0 0.0
    %2551 = vmatpush1.msra.mxu0 0.0
    %2552 = vmatprep.subr.mxu0 0.0
    %2553 = vmatpush1.msra.mxu0 0.0
    %2554 = vmatprep.subr.mxu0 0.0
    %2555 = vmatpush1.msra.mxu0 0.0
    %2556 = vmatprep.subr.mxu0 0.0
    %2557 = vmatpush1.msra.mxu0 0.0
    %2558 = vmatprep.subr.mxu0 0.0
    %2559 = vmatpush1.msra.mxu0 0.0
    %2560 = vmatprep.subr.mxu0 0.0
    %2561 = vmatpush1.msra.mxu0 0.0
    %2562 = vmatprep.subr.mxu0 0.0
    %2563 = vmatpush1.msra.mxu0 0.0
    %2564 = vmatprep.subr.mxu0 0.0
    %2565 = vmatpush1.msra.mxu0 0.0
    %2566 = vmatprep.subr.mxu0 0.0
    %2567 = vmatpush1.msra.mxu0 0.0
    %2568 = vmatprep.mubr.f32.mxu0 0.0
    %2569 = vmatmul.mubr.f32.gmra.mrb[0].mxu0 %v2502
    %v2570 = vpop.f32.mrb[0].mxu0
    %v2571 = vadd.f32 0.0, %v2570
    %v2572 = vpop.f32.mrb[0].mxu0
    %2573 = vdwg.mxu0
    %v2574 = vadd.f32 %v2178, %v2571
    %v2575 = vxor.u32 %v2574, 2147483648
    %v2576 = vmul.f32 %v2575, 1.442695
    %v2577 = vpow.pop %v2576
    %v2578 = vadd.f32 %v2577, 1.0
    %v2579 = vrcp.pop %v2578
    %v2580 = vmul.f32 1.0, %v2579
    %v2581 = vtanh.pop %v2574
    %v2582 = vmul.f32 %v2580, %v2485
    %2584 = vrot.lane.b32.xlu0 %v2581, 32
    %v2585 = vpop.permute.xlu0 %2584
    %v2587 = vmul.f32 %v2580, %v2585
    %2589 = vrot.lane.b32.xlu0 %v2587, 32
    %v2590 = vpop.permute.xlu0 %2589
    %v2592 = vadd.f32 %v2582, %v2590
    %v2593 = vtanh.pop %v2592
    %2595 = vrot.lane.b32.xlu0 %v2593, 32
    %v2596 = vpop.permute.xlu0 %2595
    %v2598 = vmul.f32 %v2580, %v2596
    %2600 = vrot.lane.b32.xlu0 %v2598, 64
    %v2601 = vpop.permute.xlu0 %2600
    %2603 = vrot.lane.b32.xlu0 %v2598, 96
    %v2604 = vpop.permute.xlu0 %2603
    %v2606 = vsel %vm342, %v2601, %v2604
    %v2607 = vmul.f32 %v2606, %v49
    %v2609 = vsel %vm236, %v2607, 0
    %2611 = vmatprep.subr.mxu0 0.0
    %2612 = vmatpush1.msra.mxu0 %v66
    %2613 = vmatprep.subr.mxu0 0.0
    %2614 = vmatpush1.msra.mxu0 %v67
    %2615 = vmatprep.subr.mxu0 0.0
    %2616 = vmatpush1.msra.mxu0 %v68
    %2617 = vmatprep.subr.mxu0 0.0
    %2618 = vmatpush1.msra.mxu0 %v69
    %2619 = vmatprep.subr.mxu0 0.0
    %2620 = vmatpush1.msra.mxu0 %v70
    %2621 = vmatprep.subr.mxu0 0.0
    %2622 = vmatpush1.msra.mxu0 %v71
    %2623 = vmatprep.subr.mxu0 0.0
    %2624 = vmatpush1.msra.mxu0 %v72
    %2625 = vmatprep.subr.mxu0 0.0
    %2626 = vmatpush1.msra.mxu0 %v73
    %2627 = vmatprep.subr.mxu0 0.0
    %2628 = vmatpush1.msra.mxu0 0.0
    %2629 = vmatprep.subr.mxu0 0.0
    %2630 = vmatpush1.msra.mxu0 0.0
    %2631 = vmatprep.subr.mxu0 0.0
    %2632 = vmatpush1.msra.mxu0 0.0
    %2633 = vmatprep.subr.mxu0 0.0
    %2634 = vmatpush1.msra.mxu0 0.0
    %2635 = vmatprep.subr.mxu0 0.0
    %2636 = vmatpush1.msra.mxu0 0.0
    %2637 = vmatprep.subr.mxu0 0.0
    %2638 = vmatpush1.msra.mxu0 0.0
    %2639 = vmatprep.subr.mxu0 0.0
    %2640 = vmatpush1.msra.mxu0 0.0
    %2641 = vmatprep.subr.mxu0 0.0
    %2642 = vmatpush1.msra.mxu0 0.0
    %2643 = vmatprep.subr.mxu0 0.0
    %2644 = vmatpush1.msra.mxu0 0.0
    %2645 = vmatprep.subr.mxu0 0.0
    %2646 = vmatpush1.msra.mxu0 0.0
    %2647 = vmatprep.subr.mxu0 0.0
    %2648 = vmatpush1.msra.mxu0 0.0
    %2649 = vmatprep.subr.mxu0 0.0
    %2650 = vmatpush1.msra.mxu0 0.0
    %2651 = vmatprep.subr.mxu0 0.0
    %2652 = vmatpush1.msra.mxu0 0.0
    %2653 = vmatprep.subr.mxu0 0.0
    %2654 = vmatpush1.msra.mxu0 0.0
    %2655 = vmatprep.subr.mxu0 0.0
    %2656 = vmatpush1.msra.mxu0 0.0
    %2657 = vmatprep.subr.mxu0 0.0
    %2658 = vmatpush1.msra.mxu0 0.0
    %2659 = vmatprep.subr.mxu0 0.0
    %2660 = vmatpush1.msra.mxu0 0.0
    %2661 = vmatprep.subr.mxu0 0.0
    %2662 = vmatpush1.msra.mxu0 0.0
    %2663 = vmatprep.subr.mxu0 0.0
    %2664 = vmatpush1.msra.mxu0 0.0
    %2665 = vmatprep.subr.mxu0 0.0
    %2666 = vmatpush1.msra.mxu0 0.0
    %2667 = vmatprep.subr.mxu0 0.0
    %2668 = vmatpush1.msra.mxu0 0.0
    %2669 = vmatprep.subr.mxu0 0.0
    %2670 = vmatpush1.msra.mxu0 0.0
    %2671 = vmatprep.subr.mxu0 0.0
    %2672 = vmatpush1.msra.mxu0 0.0
    %2673 = vmatprep.subr.mxu0 0.0
    %2674 = vmatpush1.msra.mxu0 0.0
    %2675 = vmatprep.mubr.f32.mxu0 0.0
    %2676 = vmatmul.mubr.f32.gmra.mrb[0].mxu0 %v2609
    %v2677 = vpop.f32.mrb[0].mxu0
    %v2678 = vadd.f32 0.0, %v2677
    %v2679 = vpop.f32.mrb[0].mxu0
    %2680 = vdwg.mxu0
    %v2681 = vadd.f32 %v2179, %v2678
    %v2682 = vxor.u32 %v2681, 2147483648
    %v2683 = vmul.f32 %v2682, 1.442695
    %v2684 = vpow.pop %v2683
    %v2685 = vadd.f32 %v2684, 1.0
    %v2686 = vrcp.pop %v2685
    %v2687 = vmul.f32 1.0, %v2686
    %v2688 = vtanh.pop %v2681
    %v2689 = vmul.f32 %v2687, %v2592
    %2691 = vrot.lane.b32.xlu0 %v2688, 32
    %v2692 = vpop.permute.xlu0 %2691
    %v2694 = vmul.f32 %v2687, %v2692
    %2696 = vrot.lane.b32.xlu0 %v2694, 32
    %v2697 = vpop.permute.xlu0 %2696
    %v2699 = vadd.f32 %v2689, %v2697
    %v2700 = vtanh.pop %v2699
    %2702 = vrot.lane.b32.xlu0 %v2700, 32
    %v2703 = vpop.permute.xlu0 %2702
    %v2705 = vmul.f32 %v2687, %v2703
    %2707 = vrot.lane.b32.xlu0 %v2705, 64
    %v2708 = vpop.permute.xlu0 %2707
    %2710 = vrot.lane.b32.xlu0 %v2705, 96
    %v2711 = vpop.permute.xlu0 %2710
    %v2713 = vsel %vm342, %v2708, %v2711
    %v2714 = vmul.f32 %v2713, %v49
    %v2716 = vsel %vm236, %v2714, 0
    %2718 = vmatprep.subr.mxu0 0.0
    %2719 = vmatpush1.msra.mxu0 %v66
    %2720 = vmatprep.subr.mxu0 0.0
    %2721 = vmatpush1.msra.mxu0 %v67
    %2722 = vmatprep.subr.mxu0 0.0
    %2723 = vmatpush1.msra.mxu0 %v68
    %2724 = vmatprep.subr.mxu0 0.0
    %2725 = vmatpush1.msra.mxu0 %v69
    %2726 = vmatprep.subr.mxu0 0.0
    %2727 = vmatpush1.msra.mxu0 %v70
    %2728 = vmatprep.subr.mxu0 0.0
    %2729 = vmatpush1.msra.mxu0 %v71
    %2730 = vmatprep.subr.mxu0 0.0
    %2731 = vmatpush1.msra.mxu0 %v72
    %2732 = vmatprep.subr.mxu0 0.0
    %2733 = vmatpush1.msra.mxu0 %v73
    %2734 = vmatprep.subr.mxu0 0.0
    %2735 = vmatpush1.msra.mxu0 0.0
    %2736 = vmatprep.subr.mxu0 0.0
    %2737 = vmatpush1.msra.mxu0 0.0
    %2738 = vmatprep.subr.mxu0 0.0
    %2739 = vmatpush1.msra.mxu0 0.0
    %2740 = vmatprep.subr.mxu0 0.0
    %2741 = vmatpush1.msra.mxu0 0.0
    %2742 = vmatprep.subr.mxu0 0.0
    %2743 = vmatpush1.msra.mxu0 0.0
    %2744 = vmatprep.subr.mxu0 0.0
    %2745 = vmatpush1.msra.mxu0 0.0
    %2746 = vmatprep.subr.mxu0 0.0
    %2747 = vmatpush1.msra.mxu0 0.0
    %2748 = vmatprep.subr.mxu0 0.0
    %2749 = vmatpush1.msra.mxu0 0.0
    %2750 = vmatprep.subr.mxu0 0.0
    %2751 = vmatpush1.msra.mxu0 0.0
    %2752 = vmatprep.subr.mxu0 0.0
    %2753 = vmatpush1.msra.mxu0 0.0
    %2754 = vmatprep.subr.mxu0 0.0
    %2755 = vmatpush1.msra.mxu0 0.0
    %2756 = vmatprep.subr.mxu0 0.0
    %2757 = vmatpush1.msra.mxu0 0.0
    %2758 = vmatprep.subr.mxu0 0.0
    %2759 = vmatpush1.msra.mxu0 0.0
    %2760 = vmatprep.subr.mxu0 0.0
    %2761 = vmatpush1.msra.mxu0 0.0
    %2762 = vmatprep.subr.mxu0 0.0
    %2763 = vmatpush1.msra.mxu0 0.0
    %2764 = vmatprep.subr.mxu0 0.0
    %2765 = vmatpush1.msra.mxu0 0.0
    %2766 = vmatprep.subr.mxu0 0.0
    %2767 = vmatpush1.msra.mxu0 0.0
    %2768 = vmatprep.subr.mxu0 0.0
    %2769 = vmatpush1.msra.mxu0 0.0
    %2770 = vmatprep.subr.mxu0 0.0
    %2771 = vmatpush1.msra.mxu0 0.0
    %2772 = vmatprep.subr.mxu0 0.0
    %2773 = vmatpush1.msra.mxu0 0.0
    %2774 = vmatprep.subr.mxu0 0.0
    %2775 = vmatpush1.msra.mxu0 0.0
    %2776 = vmatprep.subr.mxu0 0.0
    %2777 = vmatpush1.msra.mxu0 0.0
    %2778 = vmatprep.subr.mxu0 0.0
    %2779 = vmatpush1.msra.mxu0 0.0
    %2780 = vmatprep.subr.mxu0 0.0
    %2781 = vmatpush1.msra.mxu0 0.0
    %2782 = vmatprep.mubr.f32.mxu0 0.0
    %2783 = vmatmul.mubr.f32.gmra.mrb[0].mxu0 %v2716
    %v2784 = vpop.f32.mrb[0].mxu0
    %v2785 = vadd.f32 0.0, %v2784
    %v2786 = vpop.f32.mrb[0].mxu0
    %2787 = vdwg.mxu0
    %v2788 = vadd.f32 %v2180, %v2785
    %v2789 = vxor.u32 %v2788, 2147483648
    %v2790 = vmul.f32 %v2789, 1.442695
    %v2791 = vpow.pop %v2790
    %v2792 = vadd.f32 %v2791, 1.0
    %v2793 = vrcp.pop %v2792
    %v2794 = vmul.f32 1.0, %v2793
    %v2795 = vtanh.pop %v2788
    %v2796 = vmul.f32 %v2794, %v2699
    %2798 = vrot.lane.b32.xlu0 %v2795, 32
    %v2799 = vpop.permute.xlu0 %2798
    %v2801 = vmul.f32 %v2794, %v2799
    %2803 = vrot.lane.b32.xlu0 %v2801, 32
    %v2804 = vpop.permute.xlu0 %2803
    %v2806 = vadd.f32 %v2796, %v2804
    %v2807 = vtanh.pop %v2806
    %2809 = vrot.lane.b32.xlu0 %v2807, 32
    %v2810 = vpop.permute.xlu0 %2809
    %v2812 = vmul.f32 %v2794, %v2810
    %2814 = vrot.lane.b32.xlu0 %v2812, 64
    %v2815 = vpop.permute.xlu0 %2814
    %2817 = vrot.lane.b32.xlu0 %v2812, 96
    %v2818 = vpop.permute.xlu0 %2817
    %v2820 = vsel %vm342, %v2815, %v2818
    %v2821 = vmul.f32 %v2820, %v49
    %v2823 = vsel %vm236, %v2821, 0
    %2825 = vmatprep.subr.mxu0 0.0
    %2826 = vmatpush1.msra.mxu0 %v66
    %2827 = vmatprep.subr.mxu0 0.0
    %2828 = vmatpush1.msra.mxu0 %v67
    %2829 = vmatprep.subr.mxu0 0.0
    %2830 = vmatpush1.msra.mxu0 %v68
    %2831 = vmatprep.subr.mxu0 0.0
    %2832 = vmatpush1.msra.mxu0 %v69
    %2833 = vmatprep.subr.mxu0 0.0
    %2834 = vmatpush1.msra.mxu0 %v70
    %2835 = vmatprep.subr.mxu0 0.0
    %2836 = vmatpush1.msra.mxu0 %v71
    %2837 = vmatprep.subr.mxu0 0.0
    %2838 = vmatpush1.msra.mxu0 %v72
    %2839 = vmatprep.subr.mxu0 0.0
    %2840 = vmatpush1.msra.mxu0 %v73
    %2841 = vmatprep.subr.mxu0 0.0
    %2842 = vmatpush1.msra.mxu0 0.0
    %2843 = vmatprep.subr.mxu0 0.0
    %2844 = vmatpush1.msra.mxu0 0.0
    %2845 = vmatprep.subr.mxu0 0.0
    %2846 = vmatpush1.msra.mxu0 0.0
    %2847 = vmatprep.subr.mxu0 0.0
    %2848 = vmatpush1.msra.mxu0 0.0
    %2849 = vmatprep.subr.mxu0 0.0
    %2850 = vmatpush1.msra.mxu0 0.0
    %2851 = vmatprep.subr.mxu0 0.0
    %2852 = vmatpush1.msra.mxu0 0.0
    %2853 = vmatprep.subr.mxu0 0.0
    %2854 = vmatpush1.msra.mxu0 0.0
    %2855 = vmatprep.subr.mxu0 0.0
    %2856 = vmatpush1.msra.mxu0 0.0
    %2857 = vmatprep.subr.mxu0 0.0
    %2858 = vmatpush1.msra.mxu0 0.0
    %2859 = vmatprep.subr.mxu0 0.0
    %2860 = vmatpush1.msra.mxu0 0.0
    %2861 = vmatprep.subr.mxu0 0.0
    %2862 = vmatpush1.msra.mxu0 0.0
    %2863 = vmatprep.subr.mxu0 0.0
    %2864 = vmatpush1.msra.mxu0 0.0
    %2865 = vmatprep.subr.mxu0 0.0
    %2866 = vmatpush1.msra.mxu0 0.0
    %2867 = vmatprep.subr.mxu0 0.0
    %2868 = vmatpush1.msra.mxu0 0.0
    %2869 = vmatprep.subr.mxu0 0.0
    %2870 = vmatpush1.msra.mxu0 0.0
    %2871 = vmatprep.subr.mxu0 0.0
    %2872 = vmatpush1.msra.mxu0 0.0
    %2873 = vmatprep.subr.mxu0 0.0
    %2874 = vmatpush1.msra.mxu0 0.0
    %2875 = vmatprep.subr.mxu0 0.0
    %2876 = vmatpush1.msra.mxu0 0.0
    %2877 = vmatprep.subr.mxu0 0.0
    %2878 = vmatpush1.msra.mxu0 0.0
    %2879 = vmatprep.subr.mxu0 0.0
    %2880 = vmatpush1.msra.mxu0 0.0
    %2881 = vmatprep.subr.mxu0 0.0
    %2882 = vmatpush1.msra.mxu0 0.0
    %2883 = vmatprep.subr.mxu0 0.0
    %2884 = vmatpush1.msra.mxu0 0.0
    %2885 = vmatprep.subr.mxu0 0.0
    %2886 = vmatpush1.msra.mxu0 0.0
    %2887 = vmatprep.subr.mxu0 0.0
    %2888 = vmatpush1.msra.mxu0 0.0
    %2889 = vmatprep.mubr.f32.mxu0 0.0
    %2890 = vmatmul.mubr.f32.gmra.mrb[0].mxu0 %v2823
    %v2891 = vpop.f32.mrb[0].mxu0
    %v2892 = vadd.f32 0.0, %v2891
    %v2893 = vpop.f32.mrb[0].mxu0
    %2894 = vdwg.mxu0
    %v2895 = vadd.f32 %v2181, %v2892
    %v2896 = vxor.u32 %v2895, 2147483648
    %v2897 = vmul.f32 %v2896, 1.442695
    %v2898 = vpow.pop %v2897
    %v2899 = vadd.f32 %v2898, 1.0
    %v2900 = vrcp.pop %v2899
    %v2901 = vmul.f32 1.0, %v2900
    %v2902 = vtanh.pop %v2895
    %v2903 = vmul.f32 %v2901, %v2806
    %2905 = vrot.lane.b32.xlu0 %v2902, 32
    %v2906 = vpop.permute.xlu0 %2905
    %v2908 = vmul.f32 %v2901, %v2906
    %2910 = vrot.lane.b32.xlu0 %v2908, 32
    %v2911 = vpop.permute.xlu0 %2910
    %v2913 = vadd.f32 %v2903, %v2911
    %v2914 = vtanh.pop %v2913
    %2916 = vrot.lane.b32.xlu0 %v2914, 32
    %v2917 = vpop.permute.xlu0 %2916
    %v2919 = vmul.f32 %v2901, %v2917
    %2921 = vrot.lane.b32.xlu0 %v2919, 64
    %v2922 = vpop.permute.xlu0 %2921
    %2924 = vrot.lane.b32.xlu0 %v2919, 96
    %v2925 = vpop.permute.xlu0 %2924
    %v2927 = vsel %vm342, %v2922, %v2925
    %v2928 = vmul.f32 %v2927, %v49
    %v2930 = vsel %vm236, %v2928, 0
    %2932 = vmatprep.subr.mxu0 0.0
    %2933 = vmatpush1.msra.mxu0 %v66
    %2934 = vmatprep.subr.mxu0 0.0
    %2935 = vmatpush1.msra.mxu0 %v67
    %2936 = vmatprep.subr.mxu0 0.0
    %2937 = vmatpush1.msra.mxu0 %v68
    %2938 = vmatprep.subr.mxu0 0.0
    %2939 = vmatpush1.msra.mxu0 %v69
    %2940 = vmatprep.subr.mxu0 0.0
    %2941 = vmatpush1.msra.mxu0 %v70
    %2942 = vmatprep.subr.mxu0 0.0
    %2943 = vmatpush1.msra.mxu0 %v71
    %2944 = vmatprep.subr.mxu0 0.0
    %2945 = vmatpush1.msra.mxu0 %v72
    %2946 = vmatprep.subr.mxu0 0.0
    %2947 = vmatpush1.msra.mxu0 %v73
    %2948 = vmatprep.subr.mxu0 0.0
    %2949 = vmatpush1.msra.mxu0 0.0
    %2950 = vmatprep.subr.mxu0 0.0
    %2951 = vmatpush1.msra.mxu0 0.0
    %2952 = vmatprep.subr.mxu0 0.0
    %2953 = vmatpush1.msra.mxu0 0.0
    %2954 = vmatprep.subr.mxu0 0.0
    %2955 = vmatpush1.msra.mxu0 0.0
    %2956 = vmatprep.subr.mxu0 0.0
    %2957 = vmatpush1.msra.mxu0 0.0
    %2958 = vmatprep.subr.mxu0 0.0
    %2959 = vmatpush1.msra.mxu0 0.0
    %2960 = vmatprep.subr.mxu0 0.0
    %2961 = vmatpush1.msra.mxu0 0.0
    %2962 = vmatprep.subr.mxu0 0.0
    %2963 = vmatpush1.msra.mxu0 0.0
    %2964 = vmatprep.subr.mxu0 0.0
    %2965 = vmatpush1.msra.mxu0 0.0
    %2966 = vmatprep.subr.mxu0 0.0
    %2967 = vmatpush1.msra.mxu0 0.0
    %2968 = vmatprep.subr.mxu0 0.0
    %2969 = vmatpush1.msra.mxu0 0.0
    %2970 = vmatprep.subr.mxu0 0.0
    %2971 = vmatpush1.msra.mxu0 0.0
    %2972 = vmatprep.subr.mxu0 0.0
    %2973 = vmatpush1.msra.mxu0 0.0
    %2974 = vmatprep.subr.mxu0 0.0
    %2975 = vmatpush1.msra.mxu0 0.0
    %2976 = vmatprep.subr.mxu0 0.0
    %2977 = vmatpush1.msra.mxu0 0.0
    %2978 = vmatprep.subr.mxu0 0.0
    %2979 = vmatpush1.msra.mxu0 0.0
    %2980 = vmatprep.subr.mxu0 0.0
    %2981 = vmatpush1.msra.mxu0 0.0
    %2982 = vmatprep.subr.mxu0 0.0
    %2983 = vmatpush1.msra.mxu0 0.0
    %2984 = vmatprep.subr.mxu0 0.0
    %2985 = vmatpush1.msra.mxu0 0.0
    %2986 = vmatprep.subr.mxu0 0.0
    %2987 = vmatpush1.msra.mxu0 0.0
    %2988 = vmatprep.subr.mxu0 0.0
    %2989 = vmatpush1.msra.mxu0 0.0
    %2990 = vmatprep.subr.mxu0 0.0
    %2991 = vmatpush1.msra.mxu0 0.0
    %2992 = vmatprep.subr.mxu0 0.0
    %2993 = vmatpush1.msra.mxu0 0.0
    %2994 = vmatprep.subr.mxu0 0.0
    %2995 = vmatpush1.msra.mxu0 0.0
    %2996 = vmatprep.mubr.f32.mxu0 0.0
    %2997 = vmatmul.mubr.f32.gmra.mrb[0].mxu0 %v2930
    %v2998 = vpop.f32.mrb[0].mxu0
    %v2999 = vadd.f32 0.0, %v2998
    %v3000 = vpop.f32.mrb[0].mxu0
    %3001 = vdwg.mxu0
    %v3002 = vadd.f32 %v2182, %v2999
    %v3003 = vxor.u32 %v3002, 2147483648
    %v3004 = vmul.f32 %v3003, 1.442695
    %v3005 = vpow.pop %v3004
    %v3006 = vadd.f32 %v3005, 1.0
    %v3007 = vrcp.pop %v3006
    %v3008 = vmul.f32 1.0, %v3007
    %v3009 = vtanh.pop %v3002
    %v3010 = vmul.f32 %v3008, %v2913
    %3012 = vrot.lane.b32.xlu0 %v3009, 32
    %v3013 = vpop.permute.xlu0 %3012
    %v3015 = vmul.f32 %v3008, %v3013
    %3017 = vrot.lane.b32.xlu0 %v3015, 32
    %v3018 = vpop.permute.xlu0 %3017
    %v3020 = vadd.f32 %v3010, %v3018
    %v3021 = vtanh.pop %v3020
    %3023 = vrot.lane.b32.xlu0 %v3021, 32
    %v3024 = vpop.permute.xlu0 %3023
    %v3026 = vmul.f32 %v3008, %v3024
    %3028 = vrot.lane.b32.xlu0 %v3026, 64
    %v3029 = vpop.permute.xlu0 %3028
    %3031 = vrot.lane.b32.xlu0 %v3026, 96
    %v3032 = vpop.permute.xlu0 %3031
    %v3034 = vsel %vm342, %v3029, %v3032
    %v3035 = vmul.f32 %v3034, %v49
    %v3036 = vld [vmem:[%s5] sm:$0xff]
    %v3037 = vld [vmem:[%s5 + $0x8] sm:$0xff]
    %v3038 = vld [vmem:[%s5 + $0x10] sm:$0xff]
    %v3039 = vld [vmem:[%s5 + $0x18] sm:$0xff]
    %v3040 = vld [vmem:[%s5 + $0x20] sm:$0xff]
    %v3041 = vld [vmem:[%s5 + $0x28] sm:$0xff]
    %v3042 = vld [vmem:[%s5 + $0x30] sm:$0xff]
    %v3043 = vld [vmem:[%s5 + $0x38] sm:$0xff]
    %v3045 = vsel %vm236, %v3035, 0
    %3047 = vmatprep.subr.mxu0 0.0
    %3048 = vmatpush1.msra.mxu0 %v3036
    %3049 = vmatprep.subr.mxu0 0.0
    %3050 = vmatpush1.msra.mxu0 %v3037
    %3051 = vmatprep.subr.mxu0 0.0
    %3052 = vmatpush1.msra.mxu0 %v3038
    %3053 = vmatprep.subr.mxu0 0.0
    %3054 = vmatpush1.msra.mxu0 %v3039
    %3055 = vmatprep.subr.mxu0 0.0
    %3056 = vmatpush1.msra.mxu0 %v3040
    %3057 = vmatprep.subr.mxu0 0.0
    %3058 = vmatpush1.msra.mxu0 %v3041
    %3059 = vmatprep.subr.mxu0 0.0
    %3060 = vmatpush1.msra.mxu0 %v3042
    %3061 = vmatprep.subr.mxu0 0.0
    %3062 = vmatpush1.msra.mxu0 %v3043
    %3063 = vmatprep.subr.mxu0 0.0
    %3064 = vmatpush1.msra.mxu0 0.0
    %3065 = vmatprep.subr.mxu0 0.0
    %3066 = vmatpush1.msra.mxu0 0.0
    %3067 = vmatprep.subr.mxu0 0.0
    %3068 = vmatpush1.msra.mxu0 0.0
    %3069 = vmatprep.subr.mxu0 0.0
    %3070 = vmatpush1.msra.mxu0 0.0
    %3071 = vmatprep.subr.mxu0 0.0
    %3072 = vmatpush1.msra.mxu0 0.0
    %3073 = vmatprep.subr.mxu0 0.0
    %3074 = vmatpush1.msra.mxu0 0.0
    %3075 = vmatprep.subr.mxu0 0.0
    %3076 = vmatpush1.msra.mxu0 0.0
    %3077 = vmatprep.subr.mxu0 0.0
    %3078 = vmatpush1.msra.mxu0 0.0
    %3079 = vmatprep.subr.mxu0 0.0
    %3080 = vmatpush1.msra.mxu0 0.0
    %3081 = vmatprep.subr.mxu0 0.0
    %3082 = vmatpush1.msra.mxu0 0.0
    %3083 = vmatprep.subr.mxu0 0.0
    %3084 = vmatpush1.msra.mxu0 0.0
    %3085 = vmatprep.subr.mxu0 0.0
    %3086 = vmatpush1.msra.mxu0 0.0
    %3087 = vmatprep.subr.mxu0 0.0
    %3088 = vmatpush1.msra.mxu0 0.0
    %3089 = vmatprep.subr.mxu0 0.0
    %3090 = vmatpush1.msra.mxu0 0.0
    %3091 = vmatprep.subr.mxu0 0.0
    %3092 = vmatpush1.msra.mxu0 0.0
    %3093 = vmatprep.subr.mxu0 0.0
    %3094 = vmatpush1.msra.mxu0 0.0
    %3095 = vmatprep.subr.mxu0 0.0
    %3096 = vmatpush1.msra.mxu0 0.0
    %3097 = vmatprep.subr.mxu0 0.0
    %3098 = vmatpush1.msra.mxu0 0.0
    %3099 = vmatprep.subr.mxu0 0.0
    %3100 = vmatpush1.msra.mxu0 0.0
    %3101 = vmatprep.subr.mxu0 0.0
    %3102 = vmatpush1.msra.mxu0 0.0
    %3103 = vmatprep.subr.mxu0 0.0
    %3104 = vmatpush1.msra.mxu0 0.0
    %3105 = vmatprep.subr.mxu0 0.0
    %3106 = vmatpush1.msra.mxu0 0.0
    %3107 = vmatprep.subr.mxu0 0.0
    %3108 = vmatpush1.msra.mxu0 0.0
    %3109 = vmatprep.subr.mxu0 0.0
    %3110 = vmatpush1.msra.mxu0 0.0
    %3111 = vmatprep.mubr.f32.mxu0 0.0
    %3112 = vmatmul.mubr.f32.gmra.mrb[0].mxu0 %v3045
    %v3113 = vpop.f32.mrb[0].mxu0
    %v3114 = vadd.f32 0.0, %v3113
    %v3115 = vpop.f32.mrb[0].mxu0
    %3116 = vdwg.mxu0
    %v3118 = vrot.slane %v3114, 2
    %v3120 = vadd.f32 %v3114, %v3118
    %v3121 = vld [vmem:[%s6] sm:$0x1]
    %v3123 = vlaneseq
    %v3124 = vshrl.u32 %v3123, 7
    %v3125 = vsub.s32 0, %v3124
    %v3126 = vrot.slane %v3121, %v3125
    %v3128 = vadd.f32 %v3120, %v3126
    %vm3129 = vcmask 418816
    %3130 = vst.msk [vmem:[#allocation5] sm:$0x3] %vm3129, %v3128
    // Predicated region
    $region34: #{emg_lstm_forward.1} parent=1 // pred_check
      _
    $region35: #{emg_lstm_forward.1} parent=1 // pred_check_branch
      %3132 = sbr.rel (0) target = $region37
    $region36: #{emg_lstm_forward.1} parent=1 // pred_region
      %s3134 = ssub.s32 32, 32
      %3135 = vsyncadd [#allocation4], %s3134
      %s3137 = sshll.u32 [#allocation5], 4
      %s3138 = int_to_ptr.vmem [resolvable:$true] %s3137
      %3140 = dma.vmem_to_hbm [thread:$0]  %s3138, 32, %s7, [#allocation4]
    $region37: #{emg_lstm_forward.1} parent=1 // pred_fallthru
      _
    // Predicated region
    $region38: #{emg_lstm_forward.1} parent=1 // pred_check
      _
    $region39: #{emg_lstm_forward.1} parent=1 // pred_check_branch
      %3142 = sbr.rel (0) target = $region41
    $region40: #{emg_lstm_forward.1} parent=1 // pred_region
      %3143 = dma.done [#allocation4], 32
    $region41: #{emg_lstm_forward.1} parent=1 // pred_fallthru
      _
    %3144 = vsyncpa [#allocation3], 1
    %3145 = vsyncpa [#allocation4], 1

</llo_original>
